<compile_context>
chip_gen: v5e
topology: v5e:2x2
jax: 0.10.0
libtpu: 0.0.40
codegen_flags: <defaults>
</compile_context>

<pallas_src>
import functools

import numpy as np
import jax
import jax.numpy as jnp
from jax.experimental import pallas as pl
from jax.experimental.pallas import tpu as pltpu


_NEG_SLOPE = 0.2

_CONVNET_CFG = [
    # (Cout, kh, kw, stride, padding, has_activation)
    (8, 3, 3, (1, 1), (1, 1), True),
    (16, 3, 3, (1, 2), (1, 1), True),
    (1, 1, 1, (1, 1), (0, 0), False),
]


def init_convnet_params(key, in_channels):
    params = []
    cin = in_channels
    for (cout, kh, kw, stride, pad, act) in _CONVNET_CFG:
        key, wk, bk = jax.random.split(key, 3)
        fan_in = cin * kh * kw
        w = jax.random.normal(wk, (cout, cin, kh, kw), jnp.float32) / np.sqrt(fan_in)
        b = 0.01 * jax.random.normal(bk, (cout,), jnp.float32)
        params.append(dict(w=w, b=b, stride=stride, padding=pad, act=act))
        cin = cout
    return params


# ----------------------------------------------------------------------------
# Host-side constant builders (data-independent of the audio).
# ----------------------------------------------------------------------------
def _dft_matrix(n_fft):
    """(2F, n_fft) windowed real/imag DFT rows, torchaudio normalized=True."""
    F = n_fft // 2 + 1
    n = np.arange(n_fft)
    window = 0.5 * (1.0 - np.cos(2.0 * np.pi * n / n_fft))      # periodic Hann
    norm = np.sqrt(np.sum(window ** 2))                         # normalized=True
    ang = 2.0 * np.pi * np.outer(np.arange(F), n) / n_fft       # (F, n_fft)
    real = window[None, :] * np.cos(ang) / norm
    imag = -window[None, :] * np.sin(ang) / norm
    return np.concatenate([real, imag], axis=0).astype(np.float32)


def _block_dft(n_fft, n_channels):
    """(C*n_fft, 2C*F): block DFT so one GEMM emits the channel-stacked
    [re_c0..re_cC-1, im_c0..im_cC-1] spectrogram columns directly."""
    F = n_fft // 2 + 1
    d = _dft_matrix(n_fft)
    real_t, imag_t = d[:F].T, d[F:].T                           # (n_fft, F)
    C = n_channels
    big = np.zeros((C * n_fft, 2 * C * F), np.float32)
    for c in range(C):
        big[c * n_fft:(c + 1) * n_fft, c * F:(c + 1) * F] = real_t
        big[c * n_fft:(c + 1) * n_fft, (C + c) * F:(C + c + 1) * F] = imag_t
    return big


def _row_mix_T(w, height, pad_h):
    """w: (Cout, Cin, kh, kw) -> (kw*Cin*H, Cout*H) transposed banded row-mix.

    Column co*H + i multiplies input row c*H + r (r = i + dh - pad_h) of width
    tap dw; the kw taps are stacked along K so a conv layer is ONE GEMM.
    """
    cout, cin, kh, kw = w.shape
    blocks = []
    for dw in range(kw):
        l = jnp.zeros((cout * height, cin * height), jnp.float32)
        for dh in range(kh):
            diag = jnp.eye(height, k=dh - pad_h, dtype=jnp.float32)
            l = l + jnp.kron(w[:, :, dh, dw], diag)
        blocks.append(l.T)                                      # (cin*H, cout*H)
    return jnp.concatenate(blocks, axis=0)                      # (kw*cin*H, cout*H)


def _edge_masks(n_frames, n_items):
    """(n_items*n_frames, 2) 0/1 masks: col0 = row is not the first frame of
    its batch item, col1 = not the last.  Zeroes the rows rolled in across
    width (zero-padding) boundaries when batch items share the row axis."""
    pos = np.arange(n_items * n_frames) % n_frames
    not_first = (pos != 0).astype(np.float32)
    not_last = (pos != n_frames - 1).astype(np.float32)
    return np.stack([not_first, not_last], axis=1)


# ----------------------------------------------------------------------------
# Fused per-scale kernel.  Layout: rows = (batch, frame), lanes = (chan, freq).
# ----------------------------------------------------------------------------
def _fused_scale_kernel(frames_ref, dft_ref, mask_ref, *refs,
                        n_layers, layer_kw, acts, neg_slope, n_rows):
    layer_refs = refs[:2 * n_layers]
    out_refs = refs[2 * n_layers:]

    # STFT GEMM (f32 for accuracy): (rows, C*n_fft) @ (C*n_fft, 2C*F).
    x = jnp.dot(frames_ref[0], dft_ref[...], preferred_element_type=jnp.float32)

    m_first = mask_ref[:, 0:1]                  # (rows, 1): 0 at first frame
    m_last = mask_ref[:, 1:2]                   # (rows, 1): 0 at last frame

    for li in range(n_layers):
        lt_ref = layer_refs[2 * li]             # (kw*cin*F, cout*F) bf16
        b_ref = layer_refs[2 * li + 1]          # (1, cout*F)        f32
        kw = layer_kw[li]
        if kw == 1:
            x_stk = x
        else:
            # Width taps dw=0,1,2 as sublane rolls (XLU) + boundary masks (VPU);
            # lane-concat fuses the taps into one large-K GEMM (no C_dw matmuls).
            x_stk = jnp.concatenate(
                [pltpu.roll(x, 1, 0) * m_first,             # source frame m-1
                 x,                                         # source frame m
                 pltpu.roll(x, n_rows - 1, 0) * m_last],    # source frame m+1
                axis=1)
        y = jnp.dot(x_stk.astype(jnp.bfloat16), lt_ref[...],
                    preferred_element_type=jnp.float32)
        y = y + b_ref[...]                                  # bias (f32)
        out_refs[li][0] = y                                 # lane-dense store
        if acts[li]:
            x = jnp.where(y >= 0.0, y, neg_slope * y)       # LeakyReLU(0.2)
        else:
            x = y


def fused_scale_forward(x, n_fft, params, negative_slope=_NEG_SLOPE):
    """x: (B, C, T) -> [conv1, conv2, conv3] pre-activation features, NCHW."""
    B, C, T = x.shape
    hop = n_fft // 4
    assert T >= n_fft, "signal shorter than n_fft"
    nf = 1 + (T - n_fft) // hop                     # frames per batch item
    F = n_fft // 2 + 1

    # Fold batch into the GEMM row axis; keep >=2 grid steps (v7x: 2 TCs) only
    # when each step still has >=128 rows, otherwise fold fully (v5e/v6e).
    groups = 2 if (B % 2 == 0 and (B // 2) * nf >= 128) else 1
    G = B // groups
    M = G * nf                                      # GEMM rows per grid step

    # Host-side framing gather (only XLA glue left before the kernel).
    idx = (np.arange(nf) * hop)[:, None] + np.arange(n_fft)[None, :]
    frames = x[:, :, idx]                                       # (B, C, nf, n_fft)
    frames = jnp.transpose(frames, (0, 2, 1, 3)).reshape(groups, M, C * n_fft)
    frames = frames.astype(jnp.float32)

    dft_big = jnp.asarray(_block_dft(n_fft, C), jnp.float32)    # (C*n_fft, 2C*F)
    masks = jnp.asarray(_edge_masks(nf, G), jnp.float32)        # (M, 2)

    in_specs = [
        pl.BlockSpec((1, M, C * n_fft), lambda g: (g, 0, 0)),
        pl.BlockSpec((C * n_fft, 2 * C * F), lambda g: (0, 0)),
        pl.BlockSpec((M, 2), lambda g: (0, 0)),
    ]
    layer_inputs = []
    out_shapes, out_specs = [], []
    layer_kw, acts, layer_meta = [], [], []

    cin = 2 * C
    cum_sw = 1
    flops = 2 * B * nf * (C * n_fft) * (2 * C * F)
    for p in params:
        w, bias = p["w"], p["b"]
        cout, w_cin, kh, kw = w.shape
        sh, sw = p["stride"]
        ph, pw = p["padding"]
        assert sh == 1 and w_cin == cin
        assert (F + 2 * ph - kh) + 1 == F, "freq extent must be preserved"
        assert kw in (1, 3) and 2 * pw == kw - 1, "width must be a 'same' conv"
        if cum_sw > 1:
            # Width stride is deferred to a wrapper-side [..., ::cum_sw] slice;
            # only valid when no later layer mixes along width.
            assert kw == 1, "layers after a width-strided layer must be 1x1"

        lt = _row_mix_T(w, F, ph).astype(jnp.bfloat16)          # (kw*cin*F, cout*F)
        b_rep = jnp.repeat(bias, F).reshape(1, cout * F).astype(jnp.float32)
        layer_inputs += [lt, b_rep]
        in_specs += [
            pl.BlockSpec((kw * cin * F, cout * F), lambda g: (0, 0)),
            pl.BlockSpec((1, cout * F), lambda g: (0, 0)),
        ]
        out_shapes.append(jax.ShapeDtypeStruct((groups, M, cout * F), jnp.float32))
        out_specs.append(pl.BlockSpec((1, M, cout * F), lambda g: (g, 0, 0)))
        layer_kw.append(kw)
        acts.append(bool(p["act"]))
        cum_sw *= sw
        layer_meta.append((cout, cum_sw))
        flops += 2 * B * nf * (kw * cin * F) * (cout * F)
        cin = cout

    # TODO(synk): replace kron(w, I_F) with band-structured matmuls (per-dh
    # sublane roll + (Cout,Cin) blocks) before real RAVE scales (n_fft >= 512).
    weight_bytes = sum(int(np.prod(t.shape)) * 2 for t in layer_inputs[0::2])
    assert weight_bytes < 24 * 1024 * 1024, (
        f"row-mix weights ({weight_bytes / 2**20:.1f} MiB) too large for VMEM; "
        "band-structured conv required at this n_fft")

    kernel = functools.partial(
        _fused_scale_kernel, n_layers=len(params), layer_kw=tuple(layer_kw),
        acts=tuple(acts), neg_slope=negative_slope, n_rows=M)

    all_in = [frames, dft_big, masks] + layer_inputs
    bytes_accessed = sum(int(np.prod(a.shape)) * a.dtype.itemsize for a in all_in)
    bytes_accessed += sum(int(np.prod(s.shape)) * 4 for s in out_shapes)

    outs = pl.pallas_call(
        kernel,
        out_shape=tuple(out_shapes),
        grid_spec=pltpu.PrefetchScalarGridSpec(
            num_scalar_prefetch=0,
            grid=(groups,),
            in_specs=in_specs,
            out_specs=tuple(out_specs),
        ),
        compiler_params=pltpu.CompilerParams(
            dimension_semantics=("parallel",)),
        cost_estimate=pl.CostEstimate(
            flops=int(flops), transcendentals=0,
            bytes_accessed=int(bytes_accessed)),
    )(frames, dft_big, masks, *layer_inputs)

    # (groups, M, cout*F) -> (B, cout, F, frames), then deferred width stride.
    feats = []
    for (cout, csw), o in zip(layer_meta, outs):
        o = o.reshape(B, nf, cout, F)
        o = jnp.transpose(o, (0, 2, 3, 1))          # (B, cout, F, nf)
        if csw > 1:
            o = o[..., ::csw]
        feats.append(o)
    return feats


def multi_scale_spectral_discriminator(x, scales, nets_params):
    return [fused_scale_forward(x, n_fft, params)
            for n_fft, params in zip(scales, nets_params)]


# ----------------------------------------------------------------------------
# Pure-JAX/XLA reference (f32) for a numerical sanity check.
# ----------------------------------------------------------------------------
def _reference_forward(x, n_fft, params, negative_slope=_NEG_SLOPE):
    B, C, T = x.shape
    hop = n_fft // 4
    nf = 1 + (T - n_fft) // hop
    F = n_fft // 2 + 1
    dft = jnp.asarray(_dft_matrix(n_fft), jnp.float32)
    idx = (np.arange(nf) * hop)[:, None] + np.arange(n_fft)[None, :]
    frames = x[:, :, idx].astype(jnp.float32)                    # (B, C, nf, n_fft)
    spec = jnp.einsum("kn,bctn->bckt", dft, frames)              # (B, C, 2F, nf)
    h = jnp.concatenate([spec[:, :, :F], spec[:, :, F:]], axis=1)
    feats = []
    for p in params:
        ph, pw = p["padding"]
        y = jax.lax.conv_general_dilated(
            h, p["w"], window_strides=p["stride"],
            padding=[(ph, ph), (pw, pw)],
            dimension_numbers=("NCHW", "OIHW", "NCHW"))
        y = y + p["b"][None, :, None, None]
        feats.append(y)
        h = jnp.where(y >= 0.0, y, negative_slope * y) if p["act"] else y
    return feats


if __name__ == "__main__":
    scales = [64, 128]
    n_channels = 1
    B, T = 2, 512

    key = jax.random.PRNGKey(0)
    key, xk = jax.random.split(key)
    x = jax.random.normal(xk, (B, n_channels, T), jnp.float32)

    nets_params = []
    for _ in scales:
        key, nk = jax.random.split(key)
        nets_params.append(init_convnet_params(nk, 2 * n_channels))

    features = multi_scale_spectral_discriminator(x, scales, nets_params)
    jax.block_until_ready(features)

    # shape checks (match the PyTorch module)
    assert features[0][0].shape == (B, 8, 33, 29)
    assert features[0][1].shape == (B, 16, 33, 15)
    assert features[0][2].shape == (B, 1, 33, 15)
    assert features[1][0].shape == (B, 8, 65, 13)
    assert features[1][1].shape == (B, 16, 65, 7)
    assert features[1][2].shape == (B, 1, 65, 7)

    # numerical check vs. f32 XLA reference (bf16 conv operands -> loose tol)
    for n_fft, params, feats in zip(scales, nets_params, features):
        refs = _reference_forward(x, n_fft, params)
        for got, ref in zip(feats, refs):
            num = float(jnp.linalg.norm(got - ref))
            den = float(jnp.linalg.norm(ref)) + 1e-6
            assert num / den < 8e-2, f"scale {n_fft}: rel err {num / den:.4f}"

    print("KERNEL_OK")
</pallas_src>

<mosaic_0001>
module attributes {stable_mosaic.version = 11 : i64} {
  func.func @_fused_scale_kernel(%arg0: i32, %arg1: memref<1x58x64xf32, #tpu.memory_space<vmem>>, %arg2: memref<64x66xf32, #tpu.memory_space<vmem>>, %arg3: memref<58x2xf32, #tpu.memory_space<vmem>>, %arg4: memref<198x264xbf16, #tpu.memory_space<vmem>>, %arg5: memref<1x264xf32, #tpu.memory_space<vmem>>, %arg6: memref<792x528xbf16, #tpu.memory_space<vmem>>, %arg7: memref<1x528xf32, #tpu.memory_space<vmem>>, %arg8: memref<528x33xbf16, #tpu.memory_space<vmem>>, %arg9: memref<1x33xf32, #tpu.memory_space<vmem>>, %arg10: memref<1x58x264xf32, #tpu.memory_space<vmem>>, %arg11: memref<1x58x528xf32, #tpu.memory_space<vmem>>, %arg12: memref<1x58x33xf32, #tpu.memory_space<vmem>>) attributes {dimension_semantics = [#tpu.dimension_semantics<parallel>], iteration_bounds = array<i64: 1>, scalar_prefetch = 0 : i64, scratch_operands = 0 : i64, tpu.core_type = #tpu.core_type<tc>, window_params = [{transform_indices = @transform_0, window_bounds = array<i64: 1, 58, 64>}, {pipeline_mode = #tpu.pipeline_mode<synchronous>, transform_indices = @transform_1, window_bounds = array<i64: 64, 66>}, {pipeline_mode = #tpu.pipeline_mode<synchronous>, transform_indices = @transform_2, window_bounds = array<i64: 58, 2>}, {pipeline_mode = #tpu.pipeline_mode<synchronous>, transform_indices = @transform_3, window_bounds = array<i64: 198, 264>}, {pipeline_mode = #tpu.pipeline_mode<synchronous>, transform_indices = @transform_4, window_bounds = array<i64: 1, 264>}, {pipeline_mode = #tpu.pipeline_mode<synchronous>, transform_indices = @transform_5, window_bounds = array<i64: 792, 528>}, {pipeline_mode = #tpu.pipeline_mode<synchronous>, transform_indices = @transform_6, window_bounds = array<i64: 1, 528>}, {pipeline_mode = #tpu.pipeline_mode<synchronous>, transform_indices = @transform_7, window_bounds = array<i64: 528, 33>}, {pipeline_mode = #tpu.pipeline_mode<synchronous>, transform_indices = @transform_8, window_bounds = array<i64: 1, 33>}, {transform_indices = @transform_9, window_bounds = array<i64: 1, 58, 264>}, {transform_indices = @transform_10, window_bounds = array<i64: 1, 58, 528>}, {transform_indices = @transform_11, window_bounds = array<i64: 1, 58, 33>}]} {
    %c0 = arith.constant 0 : index
    %c0_0 = arith.constant 0 : index
    %c0_1 = arith.constant 0 : index
    %0 = vector.load %arg1[%c0, %c0_0, %c0_1] : memref<1x58x64xf32, #tpu.memory_space<vmem>>, vector<1x58x64xf32>
    %1 = vector.shape_cast %0 : vector<1x58x64xf32> to vector<58x64xf32>
    %c0_2 = arith.constant 0 : index
    %c0_3 = arith.constant 0 : index
    %2 = vector.load %arg2[%c0_2, %c0_3] : memref<64x66xf32, #tpu.memory_space<vmem>>, vector<64x66xf32>
    %cst = arith.constant dense<0.000000e+00> : vector<58x66xf32>
    %3 = tpu.matmul %1, %2, %cst {dimension_numbers = #tpu.dot_dimension_numbers<[1], [0], [0], [1], [0, 0, 1, 1], [], []>} : vector<58x64xf32>, vector<64x66xf32>, vector<58x66xf32> -> vector<58x66xf32>
    %c0_4 = arith.constant 0 : index
    %c0_5 = arith.constant 0 : index
    %4 = vector.load %arg3[%c0_4, %c0_5] : memref<58x2xf32, #tpu.memory_space<vmem>>, vector<58x1xf32>
    %c0_6 = arith.constant 0 : index
    %c1 = arith.constant 1 : index
    %5 = vector.load %arg3[%c0_6, %c1] : memref<58x2xf32, #tpu.memory_space<vmem>>, vector<58x1xf32>
    %c1_i32 = arith.constant 1 : i32
    %6 = tpu.dynamic_rotate %3 by %c1_i32 dim 0 : vector<58x66xf32>, i32 -> vector<58x66xf32>
    %7 = vector.broadcast %4 : vector<58x1xf32> to vector<58x66xf32>
    %8 = arith.mulf %6, %7 : vector<58x66xf32>
    %c57_i32 = arith.constant 57 : i32
    %9 = tpu.dynamic_rotate %3 by %c57_i32 dim 0 : vector<58x66xf32>, i32 -> vector<58x66xf32>
    %10 = vector.broadcast %5 : vector<58x1xf32> to vector<58x66xf32>
    %11 = arith.mulf %9, %10 : vector<58x66xf32>
    %12 = tpu.concatenate %8, %3, %11 in 1 : vector<58x66xf32>, vector<58x66xf32>, vector<58x66xf32> -> vector<58x198xf32>
    %13 = arith.truncf %12 : vector<58x198xf32> to vector<58x198xbf16>
    %c0_7 = arith.constant 0 : index
    %c0_8 = arith.constant 0 : index
    %14 = vector.load %arg4[%c0_7, %c0_8] : memref<198x264xbf16, #tpu.memory_space<vmem>>, vector<198x264xbf16>
    %cst_9 = arith.constant dense<0.000000e+00> : vector<58x264xf32>
    %15 = tpu.matmul %13, %14, %cst_9 {dimension_numbers = #tpu.dot_dimension_numbers<[1], [0], [0], [1], [0, 0, 1, 1], [], []>} : vector<58x198xbf16>, vector<198x264xbf16>, vector<58x264xf32> -> vector<58x264xf32>
    %c0_10 = arith.constant 0 : index
    %c0_11 = arith.constant 0 : index
    %16 = vector.load %arg5[%c0_10, %c0_11] : memref<1x264xf32, #tpu.memory_space<vmem>>, vector<1x264xf32>
    %17 = vector.broadcast %16 : vector<1x264xf32> to vector<58x264xf32>
    %18 = arith.addf %15, %17 : vector<58x264xf32>
    %c0_12 = arith.constant 0 : index
    %c0_13 = arith.constant 0 : index
    %c0_14 = arith.constant 0 : index
    %19 = vector.load %arg10[%c0_12, %c0_13, %c0_14] : memref<1x58x264xf32, #tpu.memory_space<vmem>>, vector<1x58x264xf32>
    %20 = vector.shape_cast %19 : vector<1x58x264xf32> to vector<58x264xf32>
    %21 = vector.shape_cast %18 : vector<58x264xf32> to vector<1x58x264xf32>
    tpu.vector_store %arg10[%c0_12, %c0_13, %c0_14], %21 {strides = array<i32>} : memref<1x58x264xf32, #tpu.memory_space<vmem>>, vector<1x58x264xf32>,
    %cst_15 = arith.constant 0.000000e+00 : f32
    %22 = vector.broadcast %cst_15 : f32 to vector<58x264xf32>
    %23 = arith.cmpf oge, %18, %22 : vector<58x264xf32>
    %cst_16 = arith.constant 2.000000e-01 : f32
    %24 = vector.broadcast %cst_16 : f32 to vector<58x264xf32>
    %25 = arith.mulf %24, %18 : vector<58x264xf32>
    %26 = arith.select %23, %18, %25 : vector<58x264xi1>, vector<58x264xf32>
    %c1_i32_17 = arith.constant 1 : i32
    %27 = tpu.dynamic_rotate %26 by %c1_i32_17 dim 0 : vector<58x264xf32>, i32 -> vector<58x264xf32>
    %28 = vector.broadcast %4 : vector<58x1xf32> to vector<58x264xf32>
    %29 = arith.mulf %27, %28 : vector<58x264xf32>
    %c57_i32_18 = arith.constant 57 : i32
    %30 = tpu.dynamic_rotate %26 by %c57_i32_18 dim 0 : vector<58x264xf32>, i32 -> vector<58x264xf32>
    %31 = vector.broadcast %5 : vector<58x1xf32> to vector<58x264xf32>
    %32 = arith.mulf %30, %31 : vector<58x264xf32>
    %33 = tpu.concatenate %29, %26, %32 in 1 : vector<58x264xf32>, vector<58x264xf32>, vector<58x264xf32> -> vector<58x792xf32>
    %34 = arith.truncf %33 : vector<58x792xf32> to vector<58x792xbf16>
    %c0_19 = arith.constant 0 : index
    %c0_20 = arith.constant 0 : index
    %35 = vector.load %arg6[%c0_19, %c0_20] : memref<792x528xbf16, #tpu.memory_space<vmem>>, vector<792x528xbf16>
    %cst_21 = arith.constant dense<0.000000e+00> : vector<58x528xf32>
    %36 = tpu.matmul %34, %35, %cst_21 {dimension_numbers = #tpu.dot_dimension_numbers<[1], [0], [0], [1], [0, 0, 1, 1], [], []>} : vector<58x792xbf16>, vector<792x528xbf16>, vector<58x528xf32> -> vector<58x528xf32>
    %c0_22 = arith.constant 0 : index
    %c0_23 = arith.constant 0 : index
    %37 = vector.load %arg7[%c0_22, %c0_23] : memref<1x528xf32, #tpu.memory_space<vmem>>, vector<1x528xf32>
    %38 = vector.broadcast %37 : vector<1x528xf32> to vector<58x528xf32>
    %39 = arith.addf %36, %38 : vector<58x528xf32>
    %c0_24 = arith.constant 0 : index
    %c0_25 = arith.constant 0 : index
    %c0_26 = arith.constant 0 : index
    %40 = vector.load %arg11[%c0_24, %c0_25, %c0_26] : memref<1x58x528xf32, #tpu.memory_space<vmem>>, vector<1x58x528xf32>
    %41 = vector.shape_cast %40 : vector<1x58x528xf32> to vector<58x528xf32>
    %42 = vector.shape_cast %39 : vector<58x528xf32> to vector<1x58x528xf32>
    tpu.vector_store %arg11[%c0_24, %c0_25, %c0_26], %42 {strides = array<i32>} : memref<1x58x528xf32, #tpu.memory_space<vmem>>, vector<1x58x528xf32>,
    %cst_27 = arith.constant 0.000000e+00 : f32
    %43 = vector.broadcast %cst_27 : f32 to vector<58x528xf32>
    %44 = arith.cmpf oge, %39, %43 : vector<58x528xf32>
    %cst_28 = arith.constant 2.000000e-01 : f32
    %45 = vector.broadcast %cst_28 : f32 to vector<58x528xf32>
    %46 = arith.mulf %45, %39 : vector<58x528xf32>
    %47 = arith.select %44, %39, %46 : vector<58x528xi1>, vector<58x528xf32>
    %48 = arith.truncf %47 : vector<58x528xf32> to vector<58x528xbf16>
    %c0_29 = arith.constant 0 : index
    %c0_30 = arith.constant 0 : index
    %49 = vector.load %arg8[%c0_29, %c0_30] : memref<528x33xbf16, #tpu.memory_space<vmem>>, vector<528x33xbf16>
    %cst_31 = arith.constant dense<0.000000e+00> : vector<58x33xf32>
    %50 = tpu.matmul %48, %49, %cst_31 {dimension_numbers = #tpu.dot_dimension_numbers<[1], [0], [0], [1], [0, 0, 1, 1], [], []>} : vector<58x528xbf16>, vector<528x33xbf16>, vector<58x33xf32> -> vector<58x33xf32>
    %c0_32 = arith.constant 0 : index
    %c0_33 = arith.constant 0 : index
    %51 = vector.load %arg9[%c0_32, %c0_33] : memref<1x33xf32, #tpu.memory_space<vmem>>, vector<1x33xf32>
    %52 = vector.broadcast %51 : vector<1x33xf32> to vector<58x33xf32>
    %53 = arith.addf %50, %52 : vector<58x33xf32>
    %c0_34 = arith.constant 0 : index
    %c0_35 = arith.constant 0 : index
    %c0_36 = arith.constant 0 : index
    %54 = vector.load %arg12[%c0_34, %c0_35, %c0_36] : memref<1x58x33xf32, #tpu.memory_space<vmem>>, vector<1x58x33xf32>
    %55 = vector.shape_cast %54 : vector<1x58x33xf32> to vector<58x33xf32>
    %56 = vector.shape_cast %53 : vector<58x33xf32> to vector<1x58x33xf32>
    tpu.vector_store %arg12[%c0_34, %c0_35, %c0_36], %56 {strides = array<i32>} : memref<1x58x33xf32, #tpu.memory_space<vmem>>, vector<1x58x33xf32>,
    return
  }
  func.func @transform_0(%arg0: i32) -> (i32, i32, i32) {
    %c0_i32 = arith.constant 0 : i32
    %c0_i32_0 = arith.constant 0 : i32
    %c0_i32_1 = arith.constant 0 : i32
    return %arg0, %c0_i32, %c0_i32_0 : i32, i32, i32
  }
  func.func @transform_1(%arg0: i32) -> (i32, i32) {
    %c0_i32 = arith.constant 0 : i32
    %c0_i32_0 = arith.constant 0 : i32
    %c0_i32_1 = arith.constant 0 : i32
    return %c0_i32, %c0_i32_0 : i32, i32
  }
  func.func @transform_2(%arg0: i32) -> (i32, i32) {
    %c0_i32 = arith.constant 0 : i32
    %c0_i32_0 = arith.constant 0 : i32
    %c0_i32_1 = arith.constant 0 : i32
    return %c0_i32, %c0_i32_0 : i32, i32
  }
  func.func @transform_3(%arg0: i32) -> (i32, i32) {
    %c0_i32 = arith.constant 0 : i32
    %c0_i32_0 = arith.constant 0 : i32
    %c0_i32_1 = arith.constant 0 : i32
    return %c0_i32, %c0_i32_0 : i32, i32
  }
  func.func @transform_4(%arg0: i32) -> (i32, i32) {
    %c0_i32 = arith.constant 0 : i32
    %c0_i32_0 = arith.constant 0 : i32
    %c0_i32_1 = arith.constant 0 : i32
    return %c0_i32, %c0_i32_0 : i32, i32
  }
  func.func @transform_5(%arg0: i32) -> (i32, i32) {
    %c0_i32 = arith.constant 0 : i32
    %c0_i32_0 = arith.constant 0 : i32
    %c0_i32_1 = arith.constant 0 : i32
    return %c0_i32, %c0_i32_0 : i32, i32
  }
  func.func @transform_6(%arg0: i32) -> (i32, i32) {
    %c0_i32 = arith.constant 0 : i32
    %c0_i32_0 = arith.constant 0 : i32
    %c0_i32_1 = arith.constant 0 : i32
    return %c0_i32, %c0_i32_0 : i32, i32
  }
  func.func @transform_7(%arg0: i32) -> (i32, i32) {
    %c0_i32 = arith.constant 0 : i32
    %c0_i32_0 = arith.constant 0 : i32
    %c0_i32_1 = arith.constant 0 : i32
    return %c0_i32, %c0_i32_0 : i32, i32
  }
  func.func @transform_8(%arg0: i32) -> (i32, i32) {
    %c0_i32 = arith.constant 0 : i32
    %c0_i32_0 = arith.constant 0 : i32
    %c0_i32_1 = arith.constant 0 : i32
    return %c0_i32, %c0_i32_0 : i32, i32
  }
  func.func @transform_9(%arg0: i32) -> (i32, i32, i32) {
    %c0_i32 = arith.constant 0 : i32
    %c0_i32_0 = arith.constant 0 : i32
    %c0_i32_1 = arith.constant 0 : i32
    return %arg0, %c0_i32, %c0_i32_0 : i32, i32, i32
  }
  func.func @transform_10(%arg0: i32) -> (i32, i32, i32) {
    %c0_i32 = arith.constant 0 : i32
    %c0_i32_0 = arith.constant 0 : i32
    %c0_i32_1 = arith.constant 0 : i32
    return %arg0, %c0_i32, %c0_i32_0 : i32, i32, i32
  }
  func.func @transform_11(%arg0: i32) -> (i32, i32, i32) {
    %c0_i32 = arith.constant 0 : i32
    %c0_i32_0 = arith.constant 0 : i32
    %c0_i32_1 = arith.constant 0 : i32
    return %arg0, %c0_i32, %c0_i32_0 : i32, i32, i32
  }
}

</mosaic_0001>

<llo_original>
// kernel: tpu_custom_call.1
$region0: #{tpu_custom_call.1}
  #allocation0 [shape = 'u32[]', space=smem, size = 0x4, offset = 0x4, fixed_abs, tag = 'smem constant byte address 0x4 - core index']
  #allocation1 [shape = 'u32[72,128]{1,0:T(1,128)}', space=vmem, size = 0x9000, scoped, tag = 'internal scratch']
  %s0 = inlined_call_operand.vmem [shape: f32[1,58,64], index: 0, kind: input, shape index: {}]
  %s1 = inlined_call_operand.vmem [shape: f32[64,66], index: 1, kind: input, shape index: {}]
  %s2 = inlined_call_operand.vmem [shape: f32[58,2], index: 2, kind: input, shape index: {}]
  %s3 = inlined_call_operand.vmem [shape: bf16[198,264], index: 3, kind: input, shape index: {}]
  %s4 = inlined_call_operand.vmem [shape: f32[1,264], index: 4, kind: input, shape index: {}]
  %s5 = inlined_call_operand.vmem [shape: bf16[792,528], index: 5, kind: input, shape index: {}]
  %s6 = inlined_call_operand.vmem [shape: f32[1,528], index: 6, kind: input, shape index: {}]
  %s7 = inlined_call_operand.vmem [shape: bf16[528,33], index: 7, kind: input, shape index: {}]
  %s8 = inlined_call_operand.vmem [shape: f32[1,33], index: 8, kind: input, shape index: {}]
  %s9 = inlined_call_operand.vmem [shape: f32[1,58,264], index: 9, kind: output, shape index: {0}]
  %s10 = inlined_call_operand.vmem [shape: f32[1,58,528], index: 10, kind: output, shape index: {1}]
  %s11 = inlined_call_operand.vmem [shape: f32[1,58,33], index: 11, kind: output, shape index: {2}]
  %12 = xla_tuple %s9, %s10, %s11
  %s13 = sld [smem:[#allocation0]]
  $region62: #{tpu_custom_call.1} parent=0
    _
  %s15 = ssub.s32 1, %s13
  %s16 = scalar_select 0, %s15, %s13
  // Predicated region
  $region2: #{tpu_custom_call.1} parent=0 // pred_check
    _
  $region3: #{tpu_custom_call.1} parent=0 // pred_check_branch
    %18 = sbr.rel (0) target = $region5
  $region4: #{tpu_custom_call.1} parent=0 // pred_region
    _
  $region5: #{tpu_custom_call.1} parent=0 // pred_fallthru
    _
  // Predicated region
  $region6: #{tpu_custom_call.1} parent=0 // pred_check
    _
  $region7: #{tpu_custom_call.1} parent=0 // pred_check_branch
    %20 = sbr.rel (0) target = $region9
  $region8: #{tpu_custom_call.1} parent=0 // pred_region
    _
  $region9: #{tpu_custom_call.1} parent=0 // pred_fallthru
    _
  // Predicated region
  $region10: #{tpu_custom_call.1} parent=0 // pred_check
    _
  $region11: #{tpu_custom_call.1} parent=0 // pred_check_branch
    %22 = sbr.rel (0) target = $region13
  $region12: #{tpu_custom_call.1} parent=0 // pred_region
    _
  $region13: #{tpu_custom_call.1} parent=0 // pred_fallthru
    _
  // Predicated region
  $region14: #{tpu_custom_call.1} parent=0 // pred_check
    _
  $region15: #{tpu_custom_call.1} parent=0 // pred_check_branch
    %24 = sbr.rel (0) target = $region17
  $region16: #{tpu_custom_call.1} parent=0 // pred_region
    _
  $region17: #{tpu_custom_call.1} parent=0 // pred_fallthru
    _
  // Predicated region
  $region18: #{tpu_custom_call.1} parent=0 // pred_check
    _
  $region19: #{tpu_custom_call.1} parent=0 // pred_check_branch
    %26 = sbr.rel (0) target = $region21
  $region20: #{tpu_custom_call.1} parent=0 // pred_region
    _
  $region21: #{tpu_custom_call.1} parent=0 // pred_fallthru
    _
  // Predicated region
  $region22: #{tpu_custom_call.1} parent=0 // pred_check
    _
  $region23: #{tpu_custom_call.1} parent=0 // pred_check_branch
    %28 = sbr.rel (0) target = $region25
  $region24: #{tpu_custom_call.1} parent=0 // pred_region
    _
  $region25: #{tpu_custom_call.1} parent=0 // pred_fallthru
    _
  // Predicated region
  $region26: #{tpu_custom_call.1} parent=0 // pred_check
    _
  $region27: #{tpu_custom_call.1} parent=0 // pred_check_branch
    %30 = sbr.rel (0) target = $region29
  $region28: #{tpu_custom_call.1} parent=0 // pred_region
    _
  $region29: #{tpu_custom_call.1} parent=0 // pred_fallthru
    _
  // Predicated region
  $region30: #{tpu_custom_call.1} parent=0 // pred_check
    _
  $region31: #{tpu_custom_call.1} parent=0 // pred_check_branch
    %32 = sbr.rel (0) target = $region33
  $region32: #{tpu_custom_call.1} parent=0 // pred_region
    _
  $region33: #{tpu_custom_call.1} parent=0 // pred_fallthru
    _
  // Predicated region
  $region34: #{tpu_custom_call.1} parent=0 // pred_check
    _
  $region35: #{tpu_custom_call.1} parent=0 // pred_check_branch
    %34 = sbr.rel (0) target = $region37
  $region36: #{tpu_custom_call.1} parent=0 // pred_region
    _
  $region37: #{tpu_custom_call.1} parent=0 // pred_fallthru
    _
  %v36 = vld [vmem:[%s0] sm:$0xff]
  %v37 = vld [vmem:[%s0 + $0x8] sm:$0xff]
  %v38 = vld [vmem:[%s0 + $0x10] sm:$0xff]
  %v39 = vld [vmem:[%s0 + $0x18] sm:$0xff]
  %v40 = vld [vmem:[%s0 + $0x20] sm:$0xff]
  %v41 = vld [vmem:[%s0 + $0x28] sm:$0xff]
  %v42 = vld [vmem:[%s0 + $0x30] sm:$0xff]
  %v43 = vld [vmem:[%s0 + $0x38] sm:$0x3]
  %v44 = vld [vmem:[%s1] sm:$0xff]
  %v45 = vld [vmem:[%s1 + $0x8] sm:$0xff]
  %v46 = vld [vmem:[%s1 + $0x10] sm:$0xff]
  %v47 = vld [vmem:[%s1 + $0x18] sm:$0xff]
  %v48 = vld [vmem:[%s1 + $0x20] sm:$0xff]
  %v49 = vld [vmem:[%s1 + $0x28] sm:$0xff]
  %v50 = vld [vmem:[%s1 + $0x30] sm:$0xff]
  %v51 = vld [vmem:[%s1 + $0x38] sm:$0xff]
  %vm52 = vcmask 523264
  %v54 = vsel %vm52, %v36, 0
  %v57 = vsel %vm52, %v37, 0
  %v60 = vsel %vm52, %v38, 0
  %v63 = vsel %vm52, %v39, 0
  %v66 = vsel %vm52, %v40, 0
  %v69 = vsel %vm52, %v41, 0
  %v72 = vsel %vm52, %v42, 0
  %v75 = vsel %vm52, %v43, 0
  %77 = vmatpush.msra.mxu0 0.0
  %78 = vmatpush.msra.mxu0 0.0
  %79 = vmatpush.msra.mxu0 0.0
  %80 = vmatpush.msra.mxu0 0.0
  %81 = vmatpush.msra.mxu0 0.0
  %82 = vmatpush.msra.mxu0 0.0
  %83 = vmatpush.msra.mxu0 0.0
  %84 = vmatpush.msra.mxu0 0.0
  %85 = vmatpush.msra.mxu0 %v51
  %86 = vmatpush.msra.mxu0 %v50
  %87 = vmatpush.msra.mxu0 %v49
  %88 = vmatpush.msra.mxu0 %v48
  %89 = vmatpush.msra.mxu0 %v47
  %90 = vmatpush.msra.mxu0 %v46
  %91 = vmatpush.msra.mxu0 %v45
  %92 = vmatpush.msra.mxu0 %v44
  %93 = vmatmul.f32.gmra.mxu0 %v54
  %v94 = vpop.f32.mrf.mxu0
  %v95 = vadd.f32 0.0, %v94
  %96 = vmatmul.f32.gmra.mxu0 %v57
  %v97 = vpop.f32.mrf.mxu0
  %v98 = vadd.f32 0.0, %v97
  %99 = vmatmul.f32.gmra.mxu0 %v60
  %v100 = vpop.f32.mrf.mxu0
  %v101 = vadd.f32 0.0, %v100
  %102 = vmatmul.f32.gmra.mxu0 %v63
  %v103 = vpop.f32.mrf.mxu0
  %v104 = vadd.f32 0.0, %v103
  %105 = vmatmul.f32.gmra.mxu0 %v66
  %v106 = vpop.f32.mrf.mxu0
  %v107 = vadd.f32 0.0, %v106
  %108 = vmatmul.f32.gmra.mxu0 %v69
  %v109 = vpop.f32.mrf.mxu0
  %v110 = vadd.f32 0.0, %v109
  %111 = vmatmul.f32.gmra.mxu0 %v72
  %v112 = vpop.f32.mrf.mxu0
  %v113 = vadd.f32 0.0, %v112
  %114 = vmatmul.f32.gmra.mxu0 %v75
  %v115 = vpop.f32.mrf.mxu0
  %v116 = vadd.f32 0.0, %v115
  %117 = vdwg.mxu0
  %v118 = vld [vmem:[%s2] sm:$0xff]
  %v119 = vld [vmem:[%s2 + $0x8] sm:$0xff]
  %v120 = vld [vmem:[%s2 + $0x10] sm:$0xff]
  %v121 = vld [vmem:[%s2 + $0x18] sm:$0xff]
  %v122 = vld [vmem:[%s2 + $0x20] sm:$0xff]
  %v123 = vld [vmem:[%s2 + $0x28] sm:$0xff]
  %v124 = vld [vmem:[%s2 + $0x30] sm:$0xff]
  %v125 = vld [vmem:[%s2 + $0x38] sm:$0x3]
  %vm126 = vcmask 1047554
  %v127 = vrot.slane %v95, 6
  %v128 = vsel %vm126, %v127, %v116
  %v129 = vrot.slane %v98, 6
  %v130 = vrot.slane %v101, 6
  %v131 = vrot.slane %v104, 6
  %v132 = vrot.slane %v107, 6
  %v133 = vrot.slane %v110, 6
  %v134 = vrot.slane %v113, 6
  %v135 = vrot.slane %v128, 6
  %v136 = vsel %vm126, %v129, %v127
  %v137 = vsel %vm126, %v130, %v129
  %v138 = vsel %vm126, %v131, %v130
  %v139 = vsel %vm126, %v132, %v131
  %v140 = vsel %vm126, %v133, %v132
  %v141 = vsel %vm126, %v134, %v133
  %v142 = vsel %vm126, %v135, %v134
  %144 = vset.pattern.permute.xlu0 0
  %145 = vperm.xlu0 %144, %v118
  %v146 = vpop.permute.xlu0 %145
  %148 = vset.pattern.permute.xlu0 0
  %149 = vperm.xlu0 %148, %v119
  %v150 = vpop.permute.xlu0 %149
  %152 = vset.pattern.permute.xlu0 0
  %153 = vperm.xlu0 %152, %v120
  %v154 = vpop.permute.xlu0 %153
  %156 = vset.pattern.permute.xlu0 0
  %157 = vperm.xlu0 %156, %v121
  %v158 = vpop.permute.xlu0 %157
  %160 = vset.pattern.permute.xlu0 0
  %161 = vperm.xlu0 %160, %v122
  %v162 = vpop.permute.xlu0 %161
  %164 = vset.pattern.permute.xlu0 0
  %165 = vperm.xlu0 %164, %v123
  %v166 = vpop.permute.xlu0 %165
  %168 = vset.pattern.permute.xlu0 0
  %169 = vperm.xlu0 %168, %v124
  %v170 = vpop.permute.xlu0 %169
  %172 = vset.pattern.permute.xlu0 0
  %173 = vperm.xlu0 %172, %v125
  %v174 = vpop.permute.xlu0 %173
  %vm175 = vcmask 1040384
  %v176 = vrot.slane %v146, 7
  %v177 = vrot.slane %v150, 7
  %v178 = vsel %vm175, %v176, %v177
  %v179 = vrot.slane %v154, 7
  %v180 = vsel %vm175, %v177, %v179
  %v181 = vrot.slane %v158, 7
  %v182 = vsel %vm175, %v179, %v181
  %v183 = vrot.slane %v162, 7
  %v184 = vsel %vm175, %v181, %v183
  %v185 = vrot.slane %v166, 7
  %v186 = vsel %vm175, %v183, %v185
  %v187 = vrot.slane %v170, 7
  %v188 = vsel %vm175, %v185, %v187
  %v189 = vrot.slane %v174, 7
  %v190 = vsel %vm175, %v187, %v189
  %v199 = vmul.f32 %v128, %v176
  %v200 = vmul.f32 %v136, %v178
  %v201 = vmul.f32 %v137, %v180
  %v202 = vmul.f32 %v138, %v182
  %v203 = vmul.f32 %v139, %v184
  %v204 = vmul.f32 %v140, %v186
  %v205 = vmul.f32 %v141, %v188
  %v206 = vmul.f32 %v142, %v190
  %207 = vset.pattern.permute.xlu0 1
  %208 = vperm.xlu0 %207, %v118
  %v209 = vpop.permute.xlu0 %208
  %210 = vset.pattern.permute.xlu0 1
  %211 = vperm.xlu0 %210, %v119
  %v212 = vpop.permute.xlu0 %211
  %213 = vset.pattern.permute.xlu0 1
  %214 = vperm.xlu0 %213, %v120
  %v215 = vpop.permute.xlu0 %214
  %216 = vset.pattern.permute.xlu0 1
  %217 = vperm.xlu0 %216, %v121
  %v218 = vpop.permute.xlu0 %217
  %219 = vset.pattern.permute.xlu0 1
  %220 = vperm.xlu0 %219, %v122
  %v221 = vpop.permute.xlu0 %220
  %222 = vset.pattern.permute.xlu0 1
  %223 = vperm.xlu0 %222, %v123
  %v224 = vpop.permute.xlu0 %223
  %225 = vset.pattern.permute.xlu0 1
  %226 = vperm.xlu0 %225, %v124
  %v227 = vpop.permute.xlu0 %226
  %228 = vset.pattern.permute.xlu0 1
  %229 = vperm.xlu0 %228, %v125
  %v230 = vpop.permute.xlu0 %229
  %v231 = vrot.slane %v209, 7
  %v232 = vrot.slane %v212, 7
  %v233 = vsel %vm175, %v231, %v232
  %v234 = vrot.slane %v215, 7
  %v235 = vsel %vm175, %v232, %v234
  %v236 = vrot.slane %v218, 7
  %v237 = vsel %vm175, %v234, %v236
  %v238 = vrot.slane %v221, 7
  %v239 = vsel %vm175, %v236, %v238
  %v240 = vrot.slane %v224, 7
  %v241 = vsel %vm175, %v238, %v240
  %v242 = vrot.slane %v227, 7
  %v243 = vsel %vm175, %v240, %v242
  %v244 = vrot.slane %v230, 7
  %v245 = vsel %vm175, %v242, %v244
  %v254 = vmul.f32 %v95, %v231
  %v255 = vmul.f32 %v98, %v233
  %v256 = vmul.f32 %v101, %v235
  %v257 = vmul.f32 %v104, %v237
  %v258 = vmul.f32 %v107, %v239
  %v259 = vmul.f32 %v110, %v241
  %v260 = vmul.f32 %v113, %v243
  %v261 = vmul.f32 %v128, %v245
  %v270 = vrot.slane %v95, 7
  %v271 = vrot.slane %v98, 7
  %v272 = vsel %vm175, %v270, %v271
  %v273 = vrot.slane %v101, 7
  %v274 = vsel %vm175, %v271, %v273
  %v275 = vrot.slane %v104, 7
  %v276 = vsel %vm175, %v273, %v275
  %v277 = vrot.slane %v107, 7
  %v278 = vsel %vm175, %v275, %v277
  %v279 = vrot.slane %v110, 7
  %v280 = vsel %vm175, %v277, %v279
  %v281 = vrot.slane %v113, 7
  %v282 = vsel %vm175, %v279, %v281
  %v283 = vrot.slane %v116, 7
  %v284 = vsel %vm175, %v281, %v283
  %285 = vrot.lane.b32.xlu0 %v270, 66
  %v286 = vpop.permute.xlu0 %285
  %287 = vrot.lane.b32.xlu0 %v272, 66
  %v288 = vpop.permute.xlu0 %287
  %289 = vrot.lane.b32.xlu0 %v274, 66
  %v290 = vpop.permute.xlu0 %289
  %291 = vrot.lane.b32.xlu0 %v276, 66
  %v292 = vpop.permute.xlu0 %291
  %293 = vrot.lane.b32.xlu0 %v278, 66
  %v294 = vpop.permute.xlu0 %293
  %295 = vrot.lane.b32.xlu0 %v280, 66
  %v296 = vpop.permute.xlu0 %295
  %297 = vrot.lane.b32.xlu0 %v282, 66
  %v298 = vpop.permute.xlu0 %297
  %299 = vrot.lane.b32.xlu0 %v284, 66
  %v300 = vpop.permute.xlu0 %299
  %317 = vrot.lane.b32.xlu0 %v254, 4
  %v318 = vpop.permute.xlu0 %317
  %319 = vrot.lane.b32.xlu0 %v255, 4
  %v320 = vpop.permute.xlu0 %319
  %321 = vrot.lane.b32.xlu0 %v256, 4
  %v322 = vpop.permute.xlu0 %321
  %323 = vrot.lane.b32.xlu0 %v257, 4
  %v324 = vpop.permute.xlu0 %323
  %325 = vrot.lane.b32.xlu0 %v258, 4
  %v326 = vpop.permute.xlu0 %325
  %327 = vrot.lane.b32.xlu0 %v259, 4
  %v328 = vpop.permute.xlu0 %327
  %329 = vrot.lane.b32.xlu0 %v260, 4
  %v330 = vpop.permute.xlu0 %329
  %331 = vrot.lane.b32.xlu0 %v261, 4
  %v332 = vpop.permute.xlu0 %331
  %vm341 = vcmask 539648
  %v342 = vsel %vm341, %v199, %v286
  %v343 = vsel %vm341, %v200, %v288
  %v344 = vsel %vm341, %v201, %v290
  %v345 = vsel %vm341, %v202, %v292
  %v346 = vsel %vm341, %v203, %v294
  %v347 = vsel %vm341, %v204, %v296
  %v348 = vsel %vm341, %v205, %v298
  %v349 = vsel %vm341, %v206, %v300
  %vm350 = vcmask 31744
  %v351 = vsel %vm350, %v286, %v318
  %v352 = vsel %vm350, %v288, %v320
  %v353 = vsel %vm350, %v290, %v322
  %v354 = vsel %vm350, %v292, %v324
  %v355 = vsel %vm350, %v294, %v326
  %v356 = vsel %vm350, %v296, %v328
  %v357 = vsel %vm350, %v298, %v330
  %v358 = vsel %vm350, %v300, %v332
  %v359 = vpack.c.bf16 %v343, %v342
  %v360 = vpack.c.bf16 %v352, %v351
  %v361 = vpack.c.bf16 %v345, %v344
  %v362 = vpack.c.bf16 %v354, %v353
  %v363 = vpack.c.bf16 %v347, %v346
  %v364 = vpack.c.bf16 %v356, %v355
  %v365 = vpack.c.bf16 %v349, %v348
  %v366 = vpack.c.bf16 %v358, %v357
  %v367 = vld [vmem:[%s3] sm:$0xff]
  %v368 = vld [vmem:[%s3 + $0x8] sm:$0xf]
  %v369 = vld [vmem:[%s3 + $0xc] sm:$0xff]
  %v370 = vld [vmem:[%s3 + $0x14] sm:$0xf]
  %v371 = vld [vmem:[%s3 + $0x18] sm:$0xff]
  %v372 = vld [vmem:[%s3 + $0x20] sm:$0xf]
  %v373 = vld [vmem:[%s3 + $0x24] sm:$0xff]
  %v374 = vld [vmem:[%s3 + $0x2c] sm:$0xf]
  %v375 = vld [vmem:[%s3 + $0x30] sm:$0xff]
  %v376 = vld [vmem:[%s3 + $0x38] sm:$0xf]
  %v377 = vld [vmem:[%s3 + $0x3c] sm:$0xff]
  %v378 = vld [vmem:[%s3 + $0x44] sm:$0xf]
  %v379 = vld [vmem:[%s3 + $0x48] sm:$0xff]
  %v380 = vld [vmem:[%s3 + $0x50] sm:$0xf]
  %v381 = vld [vmem:[%s3 + $0x54] sm:$0xff]
  %v382 = vld [vmem:[%s3 + $0x5c] sm:$0xf]
  %v383 = vld [vmem:[%s3 + $0x60] sm:$0xff]
  %v384 = vld [vmem:[%s3 + $0x68] sm:$0xf]
  %v385 = vld [vmem:[%s3 + $0x6c] sm:$0xff]
  %v386 = vld [vmem:[%s3 + $0x74] sm:$0xf]
  %v387 = vld [vmem:[%s3 + $0x78] sm:$0xff]
  %v388 = vld [vmem:[%s3 + $0x80] sm:$0xf]
  %v389 = vld [vmem:[%s3 + $0x84] sm:$0xff]
  %v390 = vld [vmem:[%s3 + $0x8c] sm:$0xf]
  %v391 = vld [vmem:[%s3 + $0x90] sm:$0xff]
  %v392 = vld [vmem:[%s3 + $0x98] sm:$0xf]
  %v393 = vld [vmem:[%s3 + $0x9c] sm:$0xff]
  %v394 = vld [vmem:[%s3 + $0xa4] sm:$0xf]
  %v395 = vld [vmem:[%s3 + $0xa8] sm:$0xff]
  %v396 = vld [vmem:[%s3 + $0xb0] sm:$0xf]
  %v397 = vld [vmem:[%s3 + $0xb4] sm:$0xff]
  %v398 = vld [vmem:[%s3 + $0xbc] sm:$0xf]
  %v399 = vld [vmem:[%s3 + $0xc0] sm:$0xff]
  %v400 = vld [vmem:[%s3 + $0xc8] sm:$0xf]
  %v401 = vld [vmem:[%s3 + $0xcc] sm:$0xff]
  %v402 = vld [vmem:[%s3 + $0xd4] sm:$0xf]
  %v403 = vld [vmem:[%s3 + $0xd8] sm:$0xff]
  %v404 = vld [vmem:[%s3 + $0xe0] sm:$0xf]
  %v405 = vld [vmem:[%s3 + $0xe4] sm:$0xff]
  %v406 = vld [vmem:[%s3 + $0xec] sm:$0xf]
  %v407 = vld [vmem:[%s3 + $0xf0] sm:$0xff]
  %v408 = vld [vmem:[%s3 + $0xf8] sm:$0xf]
  %v409 = vld [vmem:[%s3 + $0xfc] sm:$0xff]
  %v410 = vld [vmem:[%s3 + $0x104] sm:$0xf]
  %v411 = vld [vmem:[%s3 + $0x108] sm:$0xff]
  %v412 = vld [vmem:[%s3 + $0x110] sm:$0xf]
  %v413 = vld [vmem:[%s3 + $0x114] sm:$0xff]
  %v414 = vld [vmem:[%s3 + $0x11c] sm:$0xf]
  %v415 = vld [vmem:[%s3 + $0x120] sm:$0x77]
  %v416 = vld [vmem:[%s3 + $0x128] sm:$0x7]
  %v417 = vld [vmem:[%s4] sm:$0x7]
  %v419 = vperm.slane %v417, 0
  %v420 = vperm.slane %v417, 1
  %v421 = vperm.slane %v417, 2
  %vm425 = vsmask.f32 7424
  %v427 = vshrl.u32 %v359, 16
  %v429 = vshll.u32 %v359, 16
  %v431 = vrot.slane %v429, 1
  %v432 = vor.u32 %v427, %v431
  %v434 = vshll.u32 %v361, 16
  %v436 = vrot.slane %v434, 1
  %v437 = vsel %vm425, %v432, %v436
  %v439 = vshrl.u32 %v360, 16
  %v441 = vshll.u32 %v360, 16
  %v443 = vrot.slane %v441, 1
  %v444 = vor.u32 %v439, %v443
  %v446 = vshll.u32 %v362, 16
  %v448 = vrot.slane %v446, 1
  %v449 = vsel %vm425, %v444, %v448
  %v450 = vshrl.u32 %v361, 16
  %v452 = vor.u32 %v450, %v436
  %v454 = vshll.u32 %v363, 16
  %v456 = vrot.slane %v454, 1
  %v457 = vsel %vm425, %v452, %v456
  %v458 = vshrl.u32 %v362, 16
  %v460 = vor.u32 %v458, %v448
  %v462 = vshll.u32 %v364, 16
  %v464 = vrot.slane %v462, 1
  %v465 = vsel %vm425, %v460, %v464
  %v466 = vshrl.u32 %v363, 16
  %v468 = vor.u32 %v466, %v456
  %v470 = vshll.u32 %v365, 16
  %v472 = vrot.slane %v470, 1
  %v473 = vsel %vm425, %v468, %v472
  %v474 = vshrl.u32 %v364, 16
  %v476 = vor.u32 %v474, %v464
  %v478 = vshll.u32 %v366, 16
  %v480 = vrot.slane %v478, 1
  %v481 = vsel %vm425, %v476, %v480
  %v482 = vshrl.u32 %v365, 16
  %v484 = vor.u32 %v482, %v472
  %v485 = vshrl.u32 %v366, 16
  %v487 = vor.u32 %v485, %v480
  %v542 = vunpack.c.l.b16 %v367
  %v543 = vunpack.c.h.b16 %v367
  %v544 = vunpack.c.l.b16 %v368
  %v545 = vunpack.c.l.b16 %v369
  %v546 = vunpack.c.h.b16 %v369
  %v547 = vunpack.c.l.b16 %v370
  %v548 = vunpack.c.l.b16 %v371
  %v549 = vunpack.c.h.b16 %v371
  %v550 = vunpack.c.l.b16 %v372
  %v551 = vunpack.c.l.b16 %v373
  %v552 = vunpack.c.h.b16 %v373
  %v553 = vunpack.c.l.b16 %v374
  %v554 = vunpack.c.l.b16 %v375
  %v555 = vunpack.c.h.b16 %v375
  %v556 = vunpack.c.l.b16 %v376
  %v557 = vunpack.c.l.b16 %v377
  %v558 = vunpack.c.h.b16 %v377
  %v559 = vunpack.c.l.b16 %v378
  %v560 = vunpack.c.l.b16 %v379
  %v561 = vunpack.c.h.b16 %v379
  %v562 = vunpack.c.l.b16 %v380
  %v563 = vunpack.c.l.b16 %v381
  %v564 = vunpack.c.h.b16 %v381
  %v565 = vunpack.c.l.b16 %v382
  %v566 = vunpack.c.l.b16 %v383
  %v567 = vunpack.c.h.b16 %v383
  %v568 = vunpack.c.l.b16 %v384
  %v569 = vunpack.c.l.b16 %v385
  %v570 = vunpack.c.h.b16 %v385
  %v571 = vunpack.c.l.b16 %v386
  %v572 = vunpack.c.l.b16 %v387
  %v573 = vunpack.c.h.b16 %v387
  %v574 = vunpack.c.l.b16 %v388
  %v575 = vunpack.c.l.b16 %v389
  %v576 = vunpack.c.h.b16 %v389
  %v577 = vunpack.c.l.b16 %v390
  %v578 = vunpack.c.l.b16 %v391
  %v579 = vunpack.c.h.b16 %v391
  %v580 = vunpack.c.l.b16 %v392
  %v581 = vunpack.c.l.b16 %v393
  %v582 = vunpack.c.h.b16 %v393
  %v583 = vunpack.c.l.b16 %v394
  %v584 = vunpack.c.l.b16 %v395
  %v585 = vunpack.c.h.b16 %v395
  %v586 = vunpack.c.l.b16 %v396
  %v587 = vunpack.c.l.b16 %v397
  %v588 = vunpack.c.h.b16 %v397
  %v589 = vunpack.c.l.b16 %v398
  %v590 = vunpack.c.l.b16 %v399
  %v591 = vunpack.c.h.b16 %v399
  %v592 = vunpack.c.l.b16 %v400
  %v593 = vunpack.c.l.b16 %v401
  %v594 = vunpack.c.h.b16 %v401
  %v595 = vunpack.c.l.b16 %v402
  %v596 = vunpack.c.l.b16 %v403
  %v597 = vunpack.c.h.b16 %v403
  %v598 = vunpack.c.l.b16 %v404
  %v599 = vunpack.c.l.b16 %v405
  %v600 = vunpack.c.h.b16 %v405
  %v601 = vunpack.c.l.b16 %v406
  %v602 = vunpack.c.l.b16 %v407
  %v603 = vunpack.c.h.b16 %v407
  %v604 = vunpack.c.l.b16 %v408
  %v605 = vunpack.c.l.b16 %v409
  %v606 = vunpack.c.h.b16 %v409
  %v607 = vunpack.c.l.b16 %v410
  %v608 = vunpack.c.l.b16 %v411
  %v609 = vunpack.c.h.b16 %v411
  %v610 = vunpack.c.l.b16 %v412
  %v611 = vunpack.c.l.b16 %v413
  %v612 = vunpack.c.h.b16 %v413
  %v613 = vunpack.c.l.b16 %v414
  %v614 = vunpack.c.l.b16 %v415
  %v615 = vunpack.c.h.b16 %v415
  %v616 = vunpack.c.l.b16 %v416
  %v617 = vpack.c.b16 %v545, %v542
  %v618 = vpack.c.b16 %v546, %v543
  %v619 = vpack.c.b16 %v547, %v544
  %v620 = vpack.c.b16 %v551, %v548
  %v621 = vpack.c.b16 %v552, %v549
  %v622 = vpack.c.b16 %v553, %v550
  %v623 = vpack.c.b16 %v557, %v554
  %v624 = vpack.c.b16 %v558, %v555
  %v625 = vpack.c.b16 %v559, %v556
  %v626 = vpack.c.b16 %v563, %v560
  %v627 = vpack.c.b16 %v564, %v561
  %v628 = vpack.c.b16 %v565, %v562
  %v629 = vpack.c.b16 %v569, %v566
  %v630 = vpack.c.b16 %v570, %v567
  %v631 = vpack.c.b16 %v571, %v568
  %v632 = vpack.c.b16 %v575, %v572
  %v633 = vpack.c.b16 %v576, %v573
  %v634 = vpack.c.b16 %v577, %v574
  %v635 = vpack.c.b16 %v581, %v578
  %v636 = vpack.c.b16 %v582, %v579
  %v637 = vpack.c.b16 %v583, %v580
  %v638 = vpack.c.b16 %v587, %v584
  %v639 = vpack.c.b16 %v588, %v585
  %v640 = vpack.c.b16 %v589, %v586
  %v641 = vpack.c.b16 %v593, %v590
  %v642 = vpack.c.b16 %v594, %v591
  %v643 = vpack.c.b16 %v595, %v592
  %v644 = vpack.c.b16 %v599, %v596
  %v645 = vpack.c.b16 %v600, %v597
  %v646 = vpack.c.b16 %v601, %v598
  %v647 = vpack.c.b16 %v605, %v602
  %v648 = vpack.c.b16 %v606, %v603
  %v649 = vpack.c.b16 %v607, %v604
  %v650 = vpack.c.b16 %v611, %v608
  %v651 = vpack.c.b16 %v612, %v609
  %v652 = vpack.c.b16 %v613, %v610
  %v653 = vpack.c.b16 %v614, %v614
  %v654 = vpack.c.b16 %v615, %v615
  %v655 = vpack.c.b16 %v616, %v616
  %vm692 = vcmask 572416
  %v694 = vsel %vm692, %v449, 0
  %v697 = vsel %vm692, %v465, 0
  %v700 = vsel %vm692, %v481, 0
  %v703 = vsel %vm692, %v487, 0
  %vm705 = vcmask 1042432
  %v707 = vsel %vm705, %v653, 0
  %v710 = vsel %vm705, %v654, 0
  %v713 = vsel %vm705, %v655, 0
  %715 = vmatpush.bf16.msra.mxu0 %v638
  %716 = vmatpush.bf16.msra.mxu0 %v635
  %717 = vmatpush.bf16.msra.mxu0 %v632
  %718 = vmatpush.bf16.msra.mxu0 %v629
  %719 = vmatpush.bf16.msra.mxu0 %v626
  %720 = vmatpush.bf16.msra.mxu0 %v623
  %721 = vmatpush.bf16.msra.mxu0 %v620
  %722 = vmatpush.bf16.msra.mxu0 %v617
  %723 = vmatmul.bf16.gmra.mxu0 %v437
  %v724 = vpop.f32.mrf.mxu0
  %v725 = vadd.f32 %v419, %v724
  %v726 = vpop.f32.mrf.mxu0
  %v727 = vadd.f32 %v419, %v726
  %728 = vmatmul.bf16.gmra.mxu0 %v457
  %v729 = vpop.f32.mrf.mxu0
  %v730 = vadd.f32 %v419, %v729
  %v731 = vpop.f32.mrf.mxu0
  %v732 = vadd.f32 %v419, %v731
  %733 = vmatmul.bf16.gmra.mxu0 %v473
  %v734 = vpop.f32.mrf.mxu0
  %v735 = vadd.f32 %v419, %v734
  %v736 = vpop.f32.mrf.mxu0
  %v737 = vadd.f32 %v419, %v736
  %738 = vmatmul.bf16.gmra.mxu0 %v484
  %v739 = vpop.f32.mrf.mxu0
  %v740 = vadd.f32 %v419, %v739
  %v741 = vpop.f32.mrf.mxu0
  %v742 = vadd.f32 %v419, %v741
  %743 = vdwg.mxu0
  %744 = vmatpush.bf16.msra.mxu0 0
  %745 = vmatpush.bf16.msra.mxu0 0
  %746 = vmatpush.bf16.msra.mxu0 0
  %747 = vmatpush.bf16.msra.mxu0 %v707
  %748 = vmatpush.bf16.msra.mxu0 %v650
  %749 = vmatpush.bf16.msra.mxu0 %v647
  %750 = vmatpush.bf16.msra.mxu0 %v644
  %751 = vmatpush.bf16.msra.mxu0 %v641
  %752 = vmatmul.bf16.gmra.mxu0 %v694
  %v753 = vpop.f32.mrf.mxu0
  %v754 = vadd.f32 %v725, %v753
  %v755 = vpop.f32.mrf.mxu0
  %v756 = vadd.f32 %v727, %v755
  %757 = vmatmul.bf16.gmra.mxu0 %v697
  %v758 = vpop.f32.mrf.mxu0
  %v759 = vadd.f32 %v730, %v758
  %v760 = vpop.f32.mrf.mxu0
  %v761 = vadd.f32 %v732, %v760
  %762 = vmatmul.bf16.gmra.mxu0 %v700
  %v763 = vpop.f32.mrf.mxu0
  %v764 = vadd.f32 %v735, %v763
  %v765 = vpop.f32.mrf.mxu0
  %v766 = vadd.f32 %v737, %v765
  %767 = vmatmul.bf16.gmra.mxu0 %v703
  %v768 = vpop.f32.mrf.mxu0
  %v769 = vadd.f32 %v740, %v768
  %v770 = vpop.f32.mrf.mxu0
  %v771 = vadd.f32 %v742, %v770
  %772 = vdwg.mxu0
  %773 = vmatpush.bf16.msra.mxu0 %v639
  %774 = vmatpush.bf16.msra.mxu0 %v636
  %775 = vmatpush.bf16.msra.mxu0 %v633
  %776 = vmatpush.bf16.msra.mxu0 %v630
  %777 = vmatpush.bf16.msra.mxu0 %v627
  %778 = vmatpush.bf16.msra.mxu0 %v624
  %779 = vmatpush.bf16.msra.mxu0 %v621
  %780 = vmatpush.bf16.msra.mxu0 %v618
  %781 = vmatmul.bf16.gmra.mxu0 %v437
  %v782 = vpop.f32.mrf.mxu0
  %v783 = vadd.f32 %v420, %v782
  %v784 = vpop.f32.mrf.mxu0
  %v785 = vadd.f32 %v420, %v784
  %786 = vmatmul.bf16.gmra.mxu0 %v457
  %v787 = vpop.f32.mrf.mxu0
  %v788 = vadd.f32 %v420, %v787
  %v789 = vpop.f32.mrf.mxu0
  %v790 = vadd.f32 %v420, %v789
  %791 = vmatmul.bf16.gmra.mxu0 %v473
  %v792 = vpop.f32.mrf.mxu0
  %v793 = vadd.f32 %v420, %v792
  %v794 = vpop.f32.mrf.mxu0
  %v795 = vadd.f32 %v420, %v794
  %796 = vmatmul.bf16.gmra.mxu0 %v484
  %v797 = vpop.f32.mrf.mxu0
  %v798 = vadd.f32 %v420, %v797
  %v799 = vpop.f32.mrf.mxu0
  %v800 = vadd.f32 %v420, %v799
  %801 = vdwg.mxu0
  %802 = vmatpush.bf16.msra.mxu0 0
  %803 = vmatpush.bf16.msra.mxu0 0
  %804 = vmatpush.bf16.msra.mxu0 0
  %805 = vmatpush.bf16.msra.mxu0 %v710
  %806 = vmatpush.bf16.msra.mxu0 %v651
  %807 = vmatpush.bf16.msra.mxu0 %v648
  %808 = vmatpush.bf16.msra.mxu0 %v645
  %809 = vmatpush.bf16.msra.mxu0 %v642
  %810 = vmatmul.bf16.gmra.mxu0 %v694
  %v811 = vpop.f32.mrf.mxu0
  %v812 = vadd.f32 %v783, %v811
  %v813 = vpop.f32.mrf.mxu0
  %v814 = vadd.f32 %v785, %v813
  %815 = vmatmul.bf16.gmra.mxu0 %v697
  %v816 = vpop.f32.mrf.mxu0
  %v817 = vadd.f32 %v788, %v816
  %v818 = vpop.f32.mrf.mxu0
  %v819 = vadd.f32 %v790, %v818
  %820 = vmatmul.bf16.gmra.mxu0 %v700
  %v821 = vpop.f32.mrf.mxu0
  %v822 = vadd.f32 %v793, %v821
  %v823 = vpop.f32.mrf.mxu0
  %v824 = vadd.f32 %v795, %v823
  %825 = vmatmul.bf16.gmra.mxu0 %v703
  %v826 = vpop.f32.mrf.mxu0
  %v827 = vadd.f32 %v798, %v826
  %v828 = vpop.f32.mrf.mxu0
  %v829 = vadd.f32 %v800, %v828
  %830 = vdwg.mxu0
  %831 = vmatpush.bf16.msra.mxu0 %v640
  %832 = vmatpush.bf16.msra.mxu0 %v637
  %833 = vmatpush.bf16.msra.mxu0 %v634
  %834 = vmatpush.bf16.msra.mxu0 %v631
  %835 = vmatpush.bf16.msra.mxu0 %v628
  %836 = vmatpush.bf16.msra.mxu0 %v625
  %837 = vmatpush.bf16.msra.mxu0 %v622
  %838 = vmatpush.bf16.msra.mxu0 %v619
  %839 = vmatmul.bf16.gmra.mxu0 %v437
  %v840 = vpop.f32.mrf.mxu0
  %v841 = vadd.f32 %v421, %v840
  %v842 = vpop.f32.mrf.mxu0
  %v843 = vadd.f32 %v421, %v842
  %844 = vmatmul.bf16.gmra.mxu0 %v457
  %v845 = vpop.f32.mrf.mxu0
  %v846 = vadd.f32 %v421, %v845
  %v847 = vpop.f32.mrf.mxu0
  %v848 = vadd.f32 %v421, %v847
  %849 = vmatmul.bf16.gmra.mxu0 %v473
  %v850 = vpop.f32.mrf.mxu0
  %v851 = vadd.f32 %v421, %v850
  %v852 = vpop.f32.mrf.mxu0
  %v853 = vadd.f32 %v421, %v852
  %854 = vmatmul.bf16.gmra.mxu0 %v484
  %v855 = vpop.f32.mrf.mxu0
  %v856 = vadd.f32 %v421, %v855
  %v857 = vpop.f32.mrf.mxu0
  %v858 = vadd.f32 %v421, %v857
  %859 = vdwg.mxu0
  %860 = vmatpush.bf16.msra.mxu0 0
  %861 = vmatpush.bf16.msra.mxu0 0
  %862 = vmatpush.bf16.msra.mxu0 0
  %863 = vmatpush.bf16.msra.mxu0 %v713
  %864 = vmatpush.bf16.msra.mxu0 %v652
  %865 = vmatpush.bf16.msra.mxu0 %v649
  %866 = vmatpush.bf16.msra.mxu0 %v646
  %867 = vmatpush.bf16.msra.mxu0 %v643
  %868 = vmatmul.bf16.gmra.mxu0 %v694
  %v869 = vpop.f32.mrf.mxu0
  %v870 = vadd.f32 %v841, %v869
  %v871 = vpop.f32.mrf.mxu0
  %v872 = vadd.f32 %v843, %v871
  %873 = vmatmul.bf16.gmra.mxu0 %v697
  %v874 = vpop.f32.mrf.mxu0
  %v875 = vadd.f32 %v846, %v874
  %v876 = vpop.f32.mrf.mxu0
  %v877 = vadd.f32 %v848, %v876
  %878 = vmatmul.bf16.gmra.mxu0 %v700
  %v879 = vpop.f32.mrf.mxu0
  %v880 = vadd.f32 %v851, %v879
  %v881 = vpop.f32.mrf.mxu0
  %v882 = vadd.f32 %v853, %v881
  %883 = vmatmul.bf16.gmra.mxu0 %v703
  %v884 = vpop.f32.mrf.mxu0
  %v885 = vadd.f32 %v856, %v884
  %v886 = vpop.f32.mrf.mxu0
  %v887 = vadd.f32 %v858, %v886
  %888 = vdwg.mxu0
  %889 = vst [vmem:[%s9] sm:$0xff] %v754
  %890 = vst [vmem:[%s9 + $0x8] sm:$0xff] %v812
  %vm891 = vcmask 64512
  %892 = vst.msk [vmem:[%s9 + $0x10] sm:$0xff] %vm891, %v870
  %893 = vst [vmem:[%s9 + $0x18] sm:$0xff] %v756
  %894 = vst [vmem:[%s9 + $0x20] sm:$0xff] %v814
  %895 = vst.msk [vmem:[%s9 + $0x28] sm:$0xff] %vm891, %v872
  %896 = vst [vmem:[%s9 + $0x30] sm:$0xff] %v759
  %897 = vst [vmem:[%s9 + $0x38] sm:$0xff] %v817
  %898 = vst.msk [vmem:[%s9 + $0x40] sm:$0xff] %vm891, %v875
  %899 = vst [vmem:[%s9 + $0x48] sm:$0xff] %v761
  %900 = vst [vmem:[%s9 + $0x50] sm:$0xff] %v819
  %901 = vst.msk [vmem:[%s9 + $0x58] sm:$0xff] %vm891, %v877
  %902 = vst [vmem:[%s9 + $0x60] sm:$0xff] %v764
  %903 = vst [vmem:[%s9 + $0x68] sm:$0xff] %v822
  %904 = vst.msk [vmem:[%s9 + $0x70] sm:$0xff] %vm891, %v880
  %905 = vst [vmem:[%s9 + $0x78] sm:$0xff] %v766
  %906 = vst [vmem:[%s9 + $0x80] sm:$0xff] %v824
  %907 = vst.msk [vmem:[%s9 + $0x88] sm:$0xff] %vm891, %v882
  %908 = vst [vmem:[%s9 + $0x90] sm:$0xff] %v769
  %909 = vst [vmem:[%s9 + $0x98] sm:$0xff] %v827
  %910 = vst.msk [vmem:[%s9 + $0xa0] sm:$0xff] %vm891, %v885
  %911 = vst [vmem:[%s9 + $0xa8] sm:$0x3] %v771
  %912 = vst [vmem:[%s9 + $0xb0] sm:$0x3] %v829
  %vm913 = vcmask 58368
  %914 = vst.msk [vmem:[%s9 + $0xb8] sm:$0x3] %vm913, %v887
  %vm915 = vcmp.ge.f32.partialorder %v754, 0.0
  %vm916 = vcmp.ge.f32.partialorder %v812, 0.0
  %vm917 = vcmp.ge.f32.partialorder %v870, 0.0
  %vm918 = vcmp.ge.f32.partialorder %v756, 0.0
  %vm919 = vcmp.ge.f32.partialorder %v814, 0.0
  %vm920 = vcmp.ge.f32.partialorder %v872, 0.0
  %vm921 = vcmp.ge.f32.partialorder %v759, 0.0
  %vm922 = vcmp.ge.f32.partialorder %v817, 0.0
  %vm923 = vcmp.ge.f32.partialorder %v875, 0.0
  %vm924 = vcmp.ge.f32.partialorder %v761, 0.0
  %vm925 = vcmp.ge.f32.partialorder %v819, 0.0
  %vm926 = vcmp.ge.f32.partialorder %v877, 0.0
  %vm927 = vcmp.ge.f32.partialorder %v764, 0.0
  %vm928 = vcmp.ge.f32.partialorder %v822, 0.0
  %vm929 = vcmp.ge.f32.partialorder %v880, 0.0
  %vm930 = vcmp.ge.f32.partialorder %v766, 0.0
  %vm931 = vcmp.ge.f32.partialorder %v824, 0.0
  %vm932 = vcmp.ge.f32.partialorder %v882, 0.0
  %vm933 = vcmp.ge.f32.partialorder %v769, 0.0
  %vm934 = vcmp.ge.f32.partialorder %v827, 0.0
  %vm935 = vcmp.ge.f32.partialorder %v885, 0.0
  %vm936 = vcmp.ge.f32.partialorder %v771, 0.0
  %vm937 = vcmp.ge.f32.partialorder %v829, 0.0
  %vm938 = vcmp.ge.f32.partialorder %v887, 0.0
  %v939 = vmul.f32 %v754, 0.2
  %v940 = vmul.f32 %v812, 0.2
  %v941 = vmul.f32 %v870, 0.2
  %v942 = vmul.f32 %v756, 0.2
  %v943 = vmul.f32 %v814, 0.2
  %v944 = vmul.f32 %v872, 0.2
  %v945 = vmul.f32 %v759, 0.2
  %v946 = vmul.f32 %v817, 0.2
  %v947 = vmul.f32 %v875, 0.2
  %v948 = vmul.f32 %v761, 0.2
  %v949 = vmul.f32 %v819, 0.2
  %v950 = vmul.f32 %v877, 0.2
  %v951 = vmul.f32 %v764, 0.2
  %v952 = vmul.f32 %v822, 0.2
  %v953 = vmul.f32 %v880, 0.2
  %v954 = vmul.f32 %v766, 0.2
  %v955 = vmul.f32 %v824, 0.2
  %v956 = vmul.f32 %v882, 0.2
  %v957 = vmul.f32 %v769, 0.2
  %v958 = vmul.f32 %v827, 0.2
  %v959 = vmul.f32 %v885, 0.2
  %v960 = vmul.f32 %v771, 0.2
  %v961 = vmul.f32 %v829, 0.2
  %v962 = vmul.f32 %v887, 0.2
  %v963 = vsel %vm915, %v754, %v939
  %v964 = vsel %vm916, %v812, %v940
  %v965 = vsel %vm917, %v870, %v941
  %v966 = vsel %vm918, %v756, %v942
  %v967 = vsel %vm919, %v814, %v943
  %v968 = vsel %vm920, %v872, %v944
  %v969 = vsel %vm921, %v759, %v945
  %v970 = vsel %vm922, %v817, %v946
  %v971 = vsel %vm923, %v875, %v947
  %v972 = vsel %vm924, %v761, %v948
  %v973 = vsel %vm925, %v819, %v949
  %v974 = vsel %vm926, %v877, %v950
  %v975 = vsel %vm927, %v764, %v951
  %v976 = vsel %vm928, %v822, %v952
  %v977 = vsel %vm929, %v880, %v953
  %v978 = vsel %vm930, %v766, %v954
  %v979 = vsel %vm931, %v824, %v955
  %v980 = vsel %vm932, %v882, %v956
  %v981 = vsel %vm933, %v769, %v957
  %v982 = vsel %vm934, %v827, %v958
  %v983 = vsel %vm935, %v885, %v959
  %v984 = vsel %vm936, %v771, %v960
  %v985 = vsel %vm937, %v829, %v961
  %v986 = vsel %vm938, %v887, %v962
  %v987 = vrot.slane %v963, 6
  %v988 = vsel %vm126, %v987, %v984
  %v989 = vrot.slane %v964, 6
  %v990 = vsel %vm126, %v989, %v985
  %v991 = vrot.slane %v965, 6
  %v992 = vsel %vm126, %v991, %v986
  %v993 = vrot.slane %v966, 6
  %v994 = vrot.slane %v967, 6
  %v995 = vrot.slane %v968, 6
  %v996 = vrot.slane %v969, 6
  %v997 = vrot.slane %v970, 6
  %v998 = vrot.slane %v971, 6
  %v999 = vrot.slane %v972, 6
  %v1000 = vrot.slane %v973, 6
  %v1001 = vrot.slane %v974, 6
  %v1002 = vrot.slane %v975, 6
  %v1003 = vrot.slane %v976, 6
  %v1004 = vrot.slane %v977, 6
  %v1005 = vrot.slane %v978, 6
  %v1006 = vrot.slane %v979, 6
  %v1007 = vrot.slane %v980, 6
  %v1008 = vrot.slane %v981, 6
  %v1009 = vrot.slane %v982, 6
  %v1010 = vrot.slane %v983, 6
  %v1011 = vrot.slane %v988, 6
  %v1012 = vrot.slane %v990, 6
  %v1013 = vrot.slane %v992, 6
  %v1014 = vsel %vm126, %v993, %v987
  %v1015 = vsel %vm126, %v994, %v989
  %v1016 = vsel %vm126, %v995, %v991
  %v1017 = vsel %vm126, %v996, %v993
  %v1018 = vsel %vm126, %v997, %v994
  %v1019 = vsel %vm126, %v998, %v995
  %v1020 = vsel %vm126, %v999, %v996
  %v1021 = vsel %vm126, %v1000, %v997
  %v1022 = vsel %vm126, %v1001, %v998
  %v1023 = vsel %vm126, %v1002, %v999
  %v1024 = vsel %vm126, %v1003, %v1000
  %v1025 = vsel %vm126, %v1004, %v1001
  %v1026 = vsel %vm126, %v1005, %v1002
  %v1027 = vsel %vm126, %v1006, %v1003
  %v1028 = vsel %vm126, %v1007, %v1004
  %v1029 = vsel %vm126, %v1008, %v1005
  %v1030 = vsel %vm126, %v1009, %v1006
  %v1031 = vsel %vm126, %v1010, %v1007
  %v1032 = vsel %vm126, %v1011, %v1008
  %v1033 = vsel %vm126, %v1012, %v1009
  %v1034 = vsel %vm126, %v1013, %v1010
  %v1035 = vmul.f32 %v988, %v176
  %v1036 = vmul.f32 %v990, %v176
  %v1037 = vmul.f32 %v992, %v176
  %v1038 = vmul.f32 %v1014, %v178
  %v1039 = vmul.f32 %v1015, %v178
  %v1040 = vmul.f32 %v1016, %v178
  %v1041 = vmul.f32 %v1017, %v180
  %v1042 = vmul.f32 %v1018, %v180
  %v1043 = vmul.f32 %v1019, %v180
  %v1044 = vmul.f32 %v1020, %v182
  %v1045 = vmul.f32 %v1021, %v182
  %v1046 = vmul.f32 %v1022, %v182
  %v1047 = vmul.f32 %v1023, %v184
  %v1048 = vmul.f32 %v1024, %v184
  %v1049 = vmul.f32 %v1025, %v184
  %v1050 = vmul.f32 %v1026, %v186
  %v1051 = vmul.f32 %v1027, %v186
  %v1052 = vmul.f32 %v1028, %v186
  %v1053 = vmul.f32 %v1029, %v188
  %v1054 = vmul.f32 %v1030, %v188
  %v1055 = vmul.f32 %v1031, %v188
  %v1056 = vmul.f32 %v1032, %v190
  %v1057 = vmul.f32 %v1033, %v190
  %v1058 = vmul.f32 %v1034, %v190
  %v1059 = vmul.f32 %v963, %v231
  %v1060 = vmul.f32 %v964, %v231
  %v1061 = vmul.f32 %v965, %v231
  %v1062 = vmul.f32 %v966, %v233
  %v1063 = vmul.f32 %v967, %v233
  %v1064 = vmul.f32 %v968, %v233
  %v1065 = vmul.f32 %v969, %v235
  %v1066 = vmul.f32 %v970, %v235
  %v1067 = vmul.f32 %v971, %v235
  %v1068 = vmul.f32 %v972, %v237
  %v1069 = vmul.f32 %v973, %v237
  %v1070 = vmul.f32 %v974, %v237
  %v1071 = vmul.f32 %v975, %v239
  %v1072 = vmul.f32 %v976, %v239
  %v1073 = vmul.f32 %v977, %v239
  %v1074 = vmul.f32 %v978, %v241
  %v1075 = vmul.f32 %v979, %v241
  %v1076 = vmul.f32 %v980, %v241
  %v1077 = vmul.f32 %v981, %v243
  %v1078 = vmul.f32 %v982, %v243
  %v1079 = vmul.f32 %v983, %v243
  %v1080 = vmul.f32 %v988, %v245
  %v1081 = vmul.f32 %v990, %v245
  %v1082 = vmul.f32 %v992, %v245
  %v1107 = vrot.slane %v963, 7
  %v1108 = vrot.slane %v964, 7
  %v1109 = vrot.slane %v965, 7
  %v1110 = vrot.slane %v966, 7
  %v1111 = vsel %vm175, %v1107, %v1110
  %v1112 = vrot.slane %v967, 7
  %v1113 = vsel %vm175, %v1108, %v1112
  %v1114 = vrot.slane %v968, 7
  %v1115 = vsel %vm175, %v1109, %v1114
  %v1116 = vrot.slane %v969, 7
  %v1117 = vsel %vm175, %v1110, %v1116
  %v1118 = vrot.slane %v970, 7
  %v1119 = vsel %vm175, %v1112, %v1118
  %v1120 = vrot.slane %v971, 7
  %v1121 = vsel %vm175, %v1114, %v1120
  %v1122 = vrot.slane %v972, 7
  %v1123 = vsel %vm175, %v1116, %v1122
  %v1124 = vrot.slane %v973, 7
  %v1125 = vsel %vm175, %v1118, %v1124
  %v1126 = vrot.slane %v974, 7
  %v1127 = vsel %vm175, %v1120, %v1126
  %v1128 = vrot.slane %v975, 7
  %v1129 = vsel %vm175, %v1122, %v1128
  %v1130 = vrot.slane %v976, 7
  %v1131 = vsel %vm175, %v1124, %v1130
  %v1132 = vrot.slane %v977, 7
  %v1133 = vsel %vm175, %v1126, %v1132
  %v1134 = vrot.slane %v978, 7
  %v1135 = vsel %vm175, %v1128, %v1134
  %v1136 = vrot.slane %v979, 7
  %v1137 = vsel %vm175, %v1130, %v1136
  %v1138 = vrot.slane %v980, 7
  %v1139 = vsel %vm175, %v1132, %v1138
  %v1140 = vrot.slane %v981, 7
  %v1141 = vsel %vm175, %v1134, %v1140
  %v1142 = vrot.slane %v982, 7
  %v1143 = vsel %vm175, %v1136, %v1142
  %v1144 = vrot.slane %v983, 7
  %v1145 = vsel %vm175, %v1138, %v1144
  %v1146 = vrot.slane %v984, 7
  %v1147 = vsel %vm175, %v1140, %v1146
  %v1148 = vrot.slane %v985, 7
  %v1149 = vsel %vm175, %v1142, %v1148
  %v1150 = vrot.slane %v986, 7
  %v1151 = vsel %vm175, %v1144, %v1150
  %1152 = vrot.lane.b32.xlu0 %v1107, 8
  %v1153 = vpop.permute.xlu0 %1152
  %1154 = vrot.lane.b32.xlu0 %v1108, 8
  %v1155 = vpop.permute.xlu0 %1154
  %1156 = vrot.lane.b32.xlu0 %v1109, 8
  %v1157 = vpop.permute.xlu0 %1156
  %1158 = vrot.lane.b32.xlu0 %v1111, 8
  %v1159 = vpop.permute.xlu0 %1158
  %1160 = vrot.lane.b32.xlu0 %v1113, 8
  %v1161 = vpop.permute.xlu0 %1160
  %1162 = vrot.lane.b32.xlu0 %v1115, 8
  %v1163 = vpop.permute.xlu0 %1162
  %1164 = vrot.lane.b32.xlu0 %v1117, 8
  %v1165 = vpop.permute.xlu0 %1164
  %1166 = vrot.lane.b32.xlu0 %v1119, 8
  %v1167 = vpop.permute.xlu0 %1166
  %1168 = vrot.lane.b32.xlu0 %v1121, 8
  %v1169 = vpop.permute.xlu0 %1168
  %1170 = vrot.lane.b32.xlu0 %v1123, 8
  %v1171 = vpop.permute.xlu0 %1170
  %1172 = vrot.lane.b32.xlu0 %v1125, 8
  %v1173 = vpop.permute.xlu0 %1172
  %1174 = vrot.lane.b32.xlu0 %v1127, 8
  %v1175 = vpop.permute.xlu0 %1174
  %1176 = vrot.lane.b32.xlu0 %v1129, 8
  %v1177 = vpop.permute.xlu0 %1176
  %1178 = vrot.lane.b32.xlu0 %v1131, 8
  %v1179 = vpop.permute.xlu0 %1178
  %1180 = vrot.lane.b32.xlu0 %v1133, 8
  %v1181 = vpop.permute.xlu0 %1180
  %1182 = vrot.lane.b32.xlu0 %v1135, 8
  %v1183 = vpop.permute.xlu0 %1182
  %1184 = vrot.lane.b32.xlu0 %v1137, 8
  %v1185 = vpop.permute.xlu0 %1184
  %1186 = vrot.lane.b32.xlu0 %v1139, 8
  %v1187 = vpop.permute.xlu0 %1186
  %1188 = vrot.lane.b32.xlu0 %v1141, 8
  %v1189 = vpop.permute.xlu0 %1188
  %1190 = vrot.lane.b32.xlu0 %v1143, 8
  %v1191 = vpop.permute.xlu0 %1190
  %1192 = vrot.lane.b32.xlu0 %v1145, 8
  %v1193 = vpop.permute.xlu0 %1192
  %1194 = vrot.lane.b32.xlu0 %v1147, 8
  %v1195 = vpop.permute.xlu0 %1194
  %1196 = vrot.lane.b32.xlu0 %v1149, 8
  %v1197 = vpop.permute.xlu0 %1196
  %1198 = vrot.lane.b32.xlu0 %v1151, 8
  %v1199 = vpop.permute.xlu0 %1198
  %v1200 = vsel %vm891, %v1153, %v1155
  %v1201 = vsel %vm891, %v1155, %v1157
  %v1202 = vsel %vm891, %v1159, %v1161
  %v1203 = vsel %vm891, %v1161, %v1163
  %v1204 = vsel %vm891, %v1165, %v1167
  %v1205 = vsel %vm891, %v1167, %v1169
  %v1206 = vsel %vm891, %v1171, %v1173
  %v1207 = vsel %vm891, %v1173, %v1175
  %v1208 = vsel %vm891, %v1177, %v1179
  %v1209 = vsel %vm891, %v1179, %v1181
  %v1210 = vsel %vm891, %v1183, %v1185
  %v1211 = vsel %vm891, %v1185, %v1187
  %v1212 = vsel %vm891, %v1189, %v1191
  %v1213 = vsel %vm891, %v1191, %v1193
  %v1214 = vsel %vm891, %v1195, %v1197
  %v1215 = vsel %vm891, %v1197, %v1199
  %1264 = vrot.lane.b32.xlu0 %v1059, 16
  %v1265 = vpop.permute.xlu0 %1264
  %1266 = vrot.lane.b32.xlu0 %v1060, 16
  %v1267 = vpop.permute.xlu0 %1266
  %1268 = vrot.lane.b32.xlu0 %v1061, 16
  %v1269 = vpop.permute.xlu0 %1268
  %1270 = vrot.lane.b32.xlu0 %v1062, 16
  %v1271 = vpop.permute.xlu0 %1270
  %1272 = vrot.lane.b32.xlu0 %v1063, 16
  %v1273 = vpop.permute.xlu0 %1272
  %1274 = vrot.lane.b32.xlu0 %v1064, 16
  %v1275 = vpop.permute.xlu0 %1274
  %1276 = vrot.lane.b32.xlu0 %v1065, 16
  %v1277 = vpop.permute.xlu0 %1276
  %1278 = vrot.lane.b32.xlu0 %v1066, 16
  %v1279 = vpop.permute.xlu0 %1278
  %1280 = vrot.lane.b32.xlu0 %v1067, 16
  %v1281 = vpop.permute.xlu0 %1280
  %1282 = vrot.lane.b32.xlu0 %v1068, 16
  %v1283 = vpop.permute.xlu0 %1282
  %1284 = vrot.lane.b32.xlu0 %v1069, 16
  %v1285 = vpop.permute.xlu0 %1284
  %1286 = vrot.lane.b32.xlu0 %v1070, 16
  %v1287 = vpop.permute.xlu0 %1286
  %1288 = vrot.lane.b32.xlu0 %v1071, 16
  %v1289 = vpop.permute.xlu0 %1288
  %1290 = vrot.lane.b32.xlu0 %v1072, 16
  %v1291 = vpop.permute.xlu0 %1290
  %1292 = vrot.lane.b32.xlu0 %v1073, 16
  %v1293 = vpop.permute.xlu0 %1292
  %1294 = vrot.lane.b32.xlu0 %v1074, 16
  %v1295 = vpop.permute.xlu0 %1294
  %1296 = vrot.lane.b32.xlu0 %v1075, 16
  %v1297 = vpop.permute.xlu0 %1296
  %1298 = vrot.lane.b32.xlu0 %v1076, 16
  %v1299 = vpop.permute.xlu0 %1298
  %1300 = vrot.lane.b32.xlu0 %v1077, 16
  %v1301 = vpop.permute.xlu0 %1300
  %1302 = vrot.lane.b32.xlu0 %v1078, 16
  %v1303 = vpop.permute.xlu0 %1302
  %1304 = vrot.lane.b32.xlu0 %v1079, 16
  %v1305 = vpop.permute.xlu0 %1304
  %1306 = vrot.lane.b32.xlu0 %v1080, 16
  %v1307 = vpop.permute.xlu0 %1306
  %1308 = vrot.lane.b32.xlu0 %v1081, 16
  %v1309 = vpop.permute.xlu0 %1308
  %1310 = vrot.lane.b32.xlu0 %v1082, 16
  %v1311 = vpop.permute.xlu0 %1310
  %vm1312 = vcmask 130048
  %v1313 = vsel %vm1312, %v1265, %v1267
  %v1314 = vsel %vm1312, %v1267, %v1269
  %v1315 = vsel %vm1312, %v1271, %v1273
  %v1316 = vsel %vm1312, %v1273, %v1275
  %v1317 = vsel %vm1312, %v1277, %v1279
  %v1318 = vsel %vm1312, %v1279, %v1281
  %v1319 = vsel %vm1312, %v1283, %v1285
  %v1320 = vsel %vm1312, %v1285, %v1287
  %v1321 = vsel %vm1312, %v1289, %v1291
  %v1322 = vsel %vm1312, %v1291, %v1293
  %v1323 = vsel %vm1312, %v1295, %v1297
  %v1324 = vsel %vm1312, %v1297, %v1299
  %v1325 = vsel %vm1312, %v1301, %v1303
  %v1326 = vsel %vm1312, %v1303, %v1305
  %v1327 = vsel %vm1312, %v1307, %v1309
  %v1328 = vsel %vm1312, %v1309, %v1311
  %v1353 = vsel %vm891, %v1037, %v1153
  %v1354 = vsel %vm891, %v1040, %v1159
  %v1355 = vsel %vm891, %v1043, %v1165
  %v1356 = vsel %vm891, %v1046, %v1171
  %v1357 = vsel %vm891, %v1049, %v1177
  %v1358 = vsel %vm891, %v1052, %v1183
  %v1359 = vsel %vm891, %v1055, %v1189
  %v1360 = vsel %vm891, %v1058, %v1195
  %v1361 = vsel %vm1312, %v1201, %v1265
  %v1362 = vsel %vm1312, %v1203, %v1271
  %v1363 = vsel %vm1312, %v1205, %v1277
  %v1364 = vsel %vm1312, %v1207, %v1283
  %v1365 = vsel %vm1312, %v1209, %v1289
  %v1366 = vsel %vm1312, %v1211, %v1295
  %v1367 = vsel %vm1312, %v1213, %v1301
  %v1368 = vsel %vm1312, %v1215, %v1307
  %v1369 = vpack.c.bf16 %v1038, %v1035
  %v1370 = vpack.c.bf16 %v1039, %v1036
  %v1371 = vpack.c.bf16 %v1354, %v1353
  %v1372 = vpack.c.bf16 %v1202, %v1200
  %v1373 = vpack.c.bf16 %v1362, %v1361
  %v1374 = vpack.c.bf16 %v1315, %v1313
  %v1375 = vpack.c.bf16 %v1316, %v1314
  %v1376 = vpack.c.bf16 %v1044, %v1041
  %v1377 = vpack.c.bf16 %v1045, %v1042
  %v1378 = vpack.c.bf16 %v1356, %v1355
  %v1379 = vpack.c.bf16 %v1206, %v1204
  %v1380 = vpack.c.bf16 %v1364, %v1363
  %v1381 = vpack.c.bf16 %v1319, %v1317
  %v1382 = vpack.c.bf16 %v1320, %v1318
  %v1383 = vpack.c.bf16 %v1050, %v1047
  %v1384 = vpack.c.bf16 %v1051, %v1048
  %v1385 = vpack.c.bf16 %v1358, %v1357
  %v1386 = vpack.c.bf16 %v1210, %v1208
  %v1387 = vpack.c.bf16 %v1366, %v1365
  %v1388 = vpack.c.bf16 %v1323, %v1321
  %v1389 = vpack.c.bf16 %v1324, %v1322
  %v1390 = vpack.c.bf16 %v1056, %v1053
  %v1391 = vpack.c.bf16 %v1057, %v1054
  %v1392 = vpack.c.bf16 %v1360, %v1359
  %v1393 = vpack.c.bf16 %v1214, %v1212
  %v1394 = vpack.c.bf16 %v1368, %v1367
  %v1395 = vpack.c.bf16 %v1327, %v1325
  %v1396 = vpack.c.bf16 %v1328, %v1326
  %v1397 = vld [vmem:[%s5] sm:$0xff]
  %v1398 = vld [vmem:[%s5 + $0x8] sm:$0xff]
  %v1399 = vld [vmem:[%s5 + $0x10] sm:$0xf]
  %v1400 = vld [vmem:[%s5 + $0x14] sm:$0xff]
  %v1401 = vld [vmem:[%s5 + $0x1c] sm:$0xff]
  %v1402 = vld [vmem:[%s5 + $0x24] sm:$0xf]
  %v1403 = vld [vmem:[%s5 + $0x28] sm:$0xff]
  %v1404 = vld [vmem:[%s5 + $0x30] sm:$0xff]
  %v1405 = vld [vmem:[%s5 + $0x38] sm:$0xf]
  %v1406 = vld [vmem:[%s5 + $0x3c] sm:$0xff]
  %v1407 = vld [vmem:[%s5 + $0x44] sm:$0xff]
  %v1408 = vld [vmem:[%s5 + $0x4c] sm:$0xf]
  %v1409 = vld [vmem:[%s5 + $0x50] sm:$0xff]
  %v1410 = vld [vmem:[%s5 + $0x58] sm:$0xff]
  %v1411 = vld [vmem:[%s5 + $0x60] sm:$0xf]
  %v1412 = vld [vmem:[%s5 + $0x64] sm:$0xff]
  %v1413 = vld [vmem:[%s5 + $0x6c] sm:$0xff]
  %v1414 = vld [vmem:[%s5 + $0x74] sm:$0xf]
  %v1415 = vld [vmem:[%s5 + $0x78] sm:$0xff]
  %v1416 = vld [vmem:[%s5 + $0x80] sm:$0xff]
  %v1417 = vld [vmem:[%s5 + $0x88] sm:$0xf]
  %v1418 = vld [vmem:[%s5 + $0x8c] sm:$0xff]
  %v1419 = vld [vmem:[%s5 + $0x94] sm:$0xff]
  %v1420 = vld [vmem:[%s5 + $0x9c] sm:$0xf]
  %v1421 = vld [vmem:[%s5 + $0xa0] sm:$0xff]
  %v1422 = vld [vmem:[%s5 + $0xa8] sm:$0xff]
  %v1423 = vld [vmem:[%s5 + $0xb0] sm:$0xf]
  %v1424 = vld [vmem:[%s5 + $0xb4] sm:$0xff]
  %v1425 = vld [vmem:[%s5 + $0xbc] sm:$0xff]
  %v1426 = vld [vmem:[%s5 + $0xc4] sm:$0xf]
  %v1427 = vld [vmem:[%s5 + $0xc8] sm:$0xff]
  %v1428 = vld [vmem:[%s5 + $0xd0] sm:$0xff]
  %v1429 = vld [vmem:[%s5 + $0xd8] sm:$0xf]
  %v1430 = vld [vmem:[%s5 + $0xdc] sm:$0xff]
  %v1431 = vld [vmem:[%s5 + $0xe4] sm:$0xff]
  %v1432 = vld [vmem:[%s5 + $0xec] sm:$0xf]
  %v1433 = vld [vmem:[%s5 + $0xf0] sm:$0xff]
  %v1434 = vld [vmem:[%s5 + $0xf8] sm:$0xff]
  %v1435 = vld [vmem:[%s5 + $0x100] sm:$0xf]
  %v1436 = vld [vmem:[%s5 + $0x104] sm:$0xff]
  %v1437 = vld [vmem:[%s5 + $0x10c] sm:$0xff]
  %v1438 = vld [vmem:[%s5 + $0x114] sm:$0xf]
  %v1439 = vld [vmem:[%s5 + $0x118] sm:$0xff]
  %v1440 = vld [vmem:[%s5 + $0x120] sm:$0xff]
  %v1441 = vld [vmem:[%s5 + $0x128] sm:$0xf]
  %v1442 = vld [vmem:[%s5 + $0x12c] sm:$0xff]
  %v1443 = vld [vmem:[%s5 + $0x134] sm:$0xff]
  %v1444 = vld [vmem:[%s5 + $0x13c] sm:$0xf]
  %v1445 = vld [vmem:[%s5 + $0x140] sm:$0xff]
  %v1446 = vld [vmem:[%s5 + $0x148] sm:$0xff]
  %v1447 = vld [vmem:[%s5 + $0x150] sm:$0xf]
  %v1448 = vld [vmem:[%s5 + $0x154] sm:$0xff]
  %v1449 = vld [vmem:[%s5 + $0x15c] sm:$0xff]
  %v1450 = vld [vmem:[%s5 + $0x164] sm:$0xf]
  %v1451 = vld [vmem:[%s5 + $0x168] sm:$0xff]
  %v1452 = vld [vmem:[%s5 + $0x170] sm:$0xff]
  %v1453 = vld [vmem:[%s5 + $0x178] sm:$0xf]
  %v1454 = vld [vmem:[%s5 + $0x17c] sm:$0xff]
  %v1455 = vld [vmem:[%s5 + $0x184] sm:$0xff]
  %v1456 = vld [vmem:[%s5 + $0x18c] sm:$0xf]
  %v1457 = vld [vmem:[%s5 + $0x190] sm:$0xff]
  %v1458 = vld [vmem:[%s5 + $0x198] sm:$0xff]
  %v1459 = vld [vmem:[%s5 + $0x1a0] sm:$0xf]
  %v1460 = vld [vmem:[%s5 + $0x1a4] sm:$0xff]
  %v1461 = vld [vmem:[%s5 + $0x1ac] sm:$0xff]
  %v1462 = vld [vmem:[%s5 + $0x1b4] sm:$0xf]
  %v1463 = vld [vmem:[%s5 + $0x1b8] sm:$0xff]
  %v1464 = vld [vmem:[%s5 + $0x1c0] sm:$0xff]
  %v1465 = vld [vmem:[%s5 + $0x1c8] sm:$0xf]
  %v1466 = vld [vmem:[%s5 + $0x1cc] sm:$0xff]
  %v1467 = vld [vmem:[%s5 + $0x1d4] sm:$0xff]
  %v1468 = vld [vmem:[%s5 + $0x1dc] sm:$0xf]
  %v1469 = vld [vmem:[%s5 + $0x1e0] sm:$0xff]
  %v1470 = vld [vmem:[%s5 + $0x1e8] sm:$0xff]
  %v1471 = vld [vmem:[%s5 + $0x1f0] sm:$0xf]
  %v1472 = vld [vmem:[%s5 + $0x1f4] sm:$0xff]
  %v1473 = vld [vmem:[%s5 + $0x1fc] sm:$0xff]
  %v1474 = vld [vmem:[%s5 + $0x204] sm:$0xf]
  %v1475 = vld [vmem:[%s5 + $0x208] sm:$0xff]
  %v1476 = vld [vmem:[%s5 + $0x210] sm:$0xff]
  %v1477 = vld [vmem:[%s5 + $0x218] sm:$0xf]
  %v1478 = vld [vmem:[%s5 + $0x21c] sm:$0xff]
  %v1479 = vld [vmem:[%s5 + $0x224] sm:$0xff]
  %v1480 = vld [vmem:[%s5 + $0x22c] sm:$0xf]
  %v1481 = vld [vmem:[%s5 + $0x230] sm:$0xff]
  %v1482 = vld [vmem:[%s5 + $0x238] sm:$0xff]
  %v1483 = vld [vmem:[%s5 + $0x240] sm:$0xf]
  %v1484 = vld [vmem:[%s5 + $0x244] sm:$0xff]
  %v1485 = vld [vmem:[%s5 + $0x24c] sm:$0xff]
  %v1486 = vld [vmem:[%s5 + $0x254] sm:$0xf]
  %v1487 = vld [vmem:[%s5 + $0x258] sm:$0xff]
  %v1488 = vld [vmem:[%s5 + $0x260] sm:$0xff]
  %v1489 = vld [vmem:[%s5 + $0x268] sm:$0xf]
  %v1490 = vld [vmem:[%s5 + $0x26c] sm:$0xff]
  %v1491 = vld [vmem:[%s5 + $0x274] sm:$0xff]
  %v1492 = vld [vmem:[%s5 + $0x27c] sm:$0xf]
  %v1493 = vld [vmem:[%s5 + $0x280] sm:$0xff]
  %v1494 = vld [vmem:[%s5 + $0x288] sm:$0xff]
  %v1495 = vld [vmem:[%s5 + $0x290] sm:$0xf]
  %v1496 = vld [vmem:[%s5 + $0x294] sm:$0xff]
  %v1497 = vld [vmem:[%s5 + $0x29c] sm:$0xff]
  %v1498 = vld [vmem:[%s5 + $0x2a4] sm:$0xf]
  %v1499 = vld [vmem:[%s5 + $0x2a8] sm:$0xff]
  %v1500 = vld [vmem:[%s5 + $0x2b0] sm:$0xff]
  %v1501 = vld [vmem:[%s5 + $0x2b8] sm:$0xf]
  %v1502 = vld [vmem:[%s5 + $0x2bc] sm:$0xff]
  %v1503 = vld [vmem:[%s5 + $0x2c4] sm:$0xff]
  %v1504 = vld [vmem:[%s5 + $0x2cc] sm:$0xf]
  %v1505 = vld [vmem:[%s5 + $0x2d0] sm:$0xff]
  %v1506 = vld [vmem:[%s5 + $0x2d8] sm:$0xff]
  %v1507 = vld [vmem:[%s5 + $0x2e0] sm:$0xf]
  %v1508 = vld [vmem:[%s5 + $0x2e4] sm:$0xff]
  %v1509 = vld [vmem:[%s5 + $0x2ec] sm:$0xff]
  %v1510 = vld [vmem:[%s5 + $0x2f4] sm:$0xf]
  %v1511 = vld [vmem:[%s5 + $0x2f8] sm:$0xff]
  %v1512 = vld [vmem:[%s5 + $0x300] sm:$0xff]
  %v1513 = vld [vmem:[%s5 + $0x308] sm:$0xf]
  %v1514 = vld [vmem:[%s5 + $0x30c] sm:$0xff]
  %v1515 = vld [vmem:[%s5 + $0x314] sm:$0xff]
  %v1516 = vld [vmem:[%s5 + $0x31c] sm:$0xf]
  %v1517 = vld [vmem:[%s5 + $0x320] sm:$0xff]
  %v1518 = vld [vmem:[%s5 + $0x328] sm:$0xff]
  %v1519 = vld [vmem:[%s5 + $0x330] sm:$0xf]
  %v1520 = vld [vmem:[%s5 + $0x334] sm:$0xff]
  %v1521 = vld [vmem:[%s5 + $0x33c] sm:$0xff]
  %v1522 = vld [vmem:[%s5 + $0x344] sm:$0xf]
  %v1523 = vld [vmem:[%s5 + $0x348] sm:$0xff]
  %v1524 = vld [vmem:[%s5 + $0x350] sm:$0xff]
  %v1525 = vld [vmem:[%s5 + $0x358] sm:$0xf]
  %v1526 = vld [vmem:[%s5 + $0x35c] sm:$0xff]
  %v1527 = vld [vmem:[%s5 + $0x364] sm:$0xff]
  %v1528 = vld [vmem:[%s5 + $0x36c] sm:$0xf]
  %v1529 = vld [vmem:[%s5 + $0x370] sm:$0xff]
  %v1530 = vld [vmem:[%s5 + $0x378] sm:$0xff]
  %v1531 = vld [vmem:[%s5 + $0x380] sm:$0xf]
  %v1532 = vld [vmem:[%s5 + $0x384] sm:$0xff]
  %v1533 = vld [vmem:[%s5 + $0x38c] sm:$0xff]
  %v1534 = vld [vmem:[%s5 + $0x394] sm:$0xf]
  %v1535 = vld [vmem:[%s5 + $0x398] sm:$0xff]
  %v1536 = vld [vmem:[%s5 + $0x3a0] sm:$0xff]
  %v1537 = vld [vmem:[%s5 + $0x3a8] sm:$0xf]
  %v1538 = vld [vmem:[%s5 + $0x3ac] sm:$0xff]
  %v1539 = vld [vmem:[%s5 + $0x3b4] sm:$0xff]
  %v1540 = vld [vmem:[%s5 + $0x3bc] sm:$0xf]
  %v1541 = vld [vmem:[%s5 + $0x3c0] sm:$0xff]
  %v1542 = vld [vmem:[%s5 + $0x3c8] sm:$0xff]
  %v1543 = vld [vmem:[%s5 + $0x3d0] sm:$0xf]
  %v1544 = vld [vmem:[%s5 + $0x3d4] sm:$0xff]
  %v1545 = vld [vmem:[%s5 + $0x3dc] sm:$0xff]
  %v1546 = vld [vmem:[%s5 + $0x3e4] sm:$0xf]
  %v1547 = vld [vmem:[%s5 + $0x3e8] sm:$0xff]
  %v1548 = vld [vmem:[%s5 + $0x3f0] sm:$0xff]
  %v1549 = vld [vmem:[%s5 + $0x3f8] sm:$0xf]
  %v1550 = vld [vmem:[%s5 + $0x3fc] sm:$0xff]
  %v1551 = vld [vmem:[%s5 + $0x404] sm:$0xff]
  %v1552 = vld [vmem:[%s5 + $0x40c] sm:$0xf]
  %v1553 = vld [vmem:[%s5 + $0x410] sm:$0xff]
  %v1554 = vld [vmem:[%s5 + $0x418] sm:$0xff]
  %v1555 = vld [vmem:[%s5 + $0x420] sm:$0xf]
  %v1556 = vld [vmem:[%s5 + $0x424] sm:$0xff]
  %v1557 = vld [vmem:[%s5 + $0x42c] sm:$0xff]
  %v1558 = vld [vmem:[%s5 + $0x434] sm:$0xf]
  %v1559 = vld [vmem:[%s5 + $0x438] sm:$0xff]
  %v1560 = vld [vmem:[%s5 + $0x440] sm:$0xff]
  %v1561 = vld [vmem:[%s5 + $0x448] sm:$0xf]
  %v1562 = vld [vmem:[%s5 + $0x44c] sm:$0xff]
  %v1563 = vld [vmem:[%s5 + $0x454] sm:$0xff]
  %v1564 = vld [vmem:[%s5 + $0x45c] sm:$0xf]
  %v1565 = vld [vmem:[%s5 + $0x460] sm:$0xff]
  %v1566 = vld [vmem:[%s5 + $0x468] sm:$0xff]
  %v1567 = vld [vmem:[%s5 + $0x470] sm:$0xf]
  %v1568 = vld [vmem:[%s5 + $0x474] sm:$0xff]
  %v1569 = vld [vmem:[%s5 + $0x47c] sm:$0xff]
  %v1570 = vld [vmem:[%s5 + $0x484] sm:$0xf]
  %v1571 = vld [vmem:[%s5 + $0x488] sm:$0xff]
  %v1572 = vld [vmem:[%s5 + $0x490] sm:$0xff]
  %v1573 = vld [vmem:[%s5 + $0x498] sm:$0xf]
  %v1574 = vld [vmem:[%s5 + $0x49c] sm:$0xff]
  %v1575 = vld [vmem:[%s5 + $0x4a4] sm:$0xff]
  %v1576 = vld [vmem:[%s5 + $0x4ac] sm:$0xf]
  %v1577 = vld [vmem:[%s5 + $0x4b0] sm:$0xff]
  %v1578 = vld [vmem:[%s5 + $0x4b8] sm:$0xff]
  %v1579 = vld [vmem:[%s5 + $0x4c0] sm:$0xf]
  %v1580 = vld [vmem:[%s5 + $0x4c4] sm:$0xff]
  %v1581 = vld [vmem:[%s5 + $0x4cc] sm:$0xff]
  %v1582 = vld [vmem:[%s5 + $0x4d4] sm:$0xf]
  %v1583 = vld [vmem:[%s5 + $0x4d8] sm:$0xff]
  %v1584 = vld [vmem:[%s5 + $0x4e0] sm:$0xff]
  %v1585 = vld [vmem:[%s5 + $0x4e8] sm:$0xf]
  %v1586 = vld [vmem:[%s5 + $0x4ec] sm:$0xff]
  %v1587 = vld [vmem:[%s5 + $0x4f4] sm:$0xff]
  %v1588 = vld [vmem:[%s5 + $0x4fc] sm:$0xf]
  %v1589 = vld [vmem:[%s5 + $0x500] sm:$0xff]
  %v1590 = vld [vmem:[%s5 + $0x508] sm:$0xff]
  %v1591 = vld [vmem:[%s5 + $0x510] sm:$0xf]
  %v1592 = vld [vmem:[%s5 + $0x514] sm:$0xff]
  %v1593 = vld [vmem:[%s5 + $0x51c] sm:$0xff]
  %v1594 = vld [vmem:[%s5 + $0x524] sm:$0xf]
  %v1595 = vld [vmem:[%s5 + $0x528] sm:$0xff]
  %v1596 = vld [vmem:[%s5 + $0x530] sm:$0xff]
  %v1597 = vld [vmem:[%s5 + $0x538] sm:$0xf]
  %v1598 = vld [vmem:[%s5 + $0x53c] sm:$0xff]
  %v1599 = vld [vmem:[%s5 + $0x544] sm:$0xff]
  %v1600 = vld [vmem:[%s5 + $0x54c] sm:$0xf]
  %v1601 = vld [vmem:[%s5 + $0x550] sm:$0xff]
  %v1602 = vld [vmem:[%s5 + $0x558] sm:$0xff]
  %v1603 = vld [vmem:[%s5 + $0x560] sm:$0xf]
  %v1604 = vld [vmem:[%s5 + $0x564] sm:$0xff]
  %v1605 = vld [vmem:[%s5 + $0x56c] sm:$0xff]
  %v1606 = vld [vmem:[%s5 + $0x574] sm:$0xf]
  %v1607 = vld [vmem:[%s5 + $0x578] sm:$0xff]
  %v1608 = vld [vmem:[%s5 + $0x580] sm:$0xff]
  %v1609 = vld [vmem:[%s5 + $0x588] sm:$0xf]
  %v1610 = vld [vmem:[%s5 + $0x58c] sm:$0xff]
  %v1611 = vld [vmem:[%s5 + $0x594] sm:$0xff]
  %v1612 = vld [vmem:[%s5 + $0x59c] sm:$0xf]
  %v1613 = vld [vmem:[%s5 + $0x5a0] sm:$0xff]
  %v1614 = vld [vmem:[%s5 + $0x5a8] sm:$0xff]
  %v1615 = vld [vmem:[%s5 + $0x5b0] sm:$0xf]
  %v1616 = vld [vmem:[%s5 + $0x5b4] sm:$0xff]
  %v1617 = vld [vmem:[%s5 + $0x5bc] sm:$0xff]
  %v1618 = vld [vmem:[%s5 + $0x5c4] sm:$0xf]
  %v1619 = vld [vmem:[%s5 + $0x5c8] sm:$0xff]
  %v1620 = vld [vmem:[%s5 + $0x5d0] sm:$0xff]
  %v1621 = vld [vmem:[%s5 + $0x5d8] sm:$0xf]
  %v1622 = vld [vmem:[%s5 + $0x5dc] sm:$0xff]
  %v1623 = vld [vmem:[%s5 + $0x5e4] sm:$0xff]
  %v1624 = vld [vmem:[%s5 + $0x5ec] sm:$0xf]
  %v1625 = vld [vmem:[%s5 + $0x5f0] sm:$0xff]
  %v1626 = vld [vmem:[%s5 + $0x5f8] sm:$0xff]
  %v1627 = vld [vmem:[%s5 + $0x600] sm:$0xf]
  %v1628 = vld [vmem:[%s5 + $0x604] sm:$0xff]
  %v1629 = vld [vmem:[%s5 + $0x60c] sm:$0xff]
  %v1630 = vld [vmem:[%s5 + $0x614] sm:$0xf]
  %v1631 = vld [vmem:[%s5 + $0x618] sm:$0xff]
  %v1632 = vld [vmem:[%s5 + $0x620] sm:$0xff]
  %v1633 = vld [vmem:[%s5 + $0x628] sm:$0xf]
  %v1634 = vld [vmem:[%s5 + $0x62c] sm:$0xff]
  %v1635 = vld [vmem:[%s5 + $0x634] sm:$0xff]
  %v1636 = vld [vmem:[%s5 + $0x63c] sm:$0xf]
  %v1637 = vld [vmem:[%s5 + $0x640] sm:$0xff]
  %v1638 = vld [vmem:[%s5 + $0x648] sm:$0xff]
  %v1639 = vld [vmem:[%s5 + $0x650] sm:$0xf]
  %v1640 = vld [vmem:[%s5 + $0x654] sm:$0xff]
  %v1641 = vld [vmem:[%s5 + $0x65c] sm:$0xff]
  %v1642 = vld [vmem:[%s5 + $0x664] sm:$0xf]
  %v1643 = vld [vmem:[%s5 + $0x668] sm:$0xff]
  %v1644 = vld [vmem:[%s5 + $0x670] sm:$0xff]
  %v1645 = vld [vmem:[%s5 + $0x678] sm:$0xf]
  %v1646 = vld [vmem:[%s5 + $0x67c] sm:$0xff]
  %v1647 = vld [vmem:[%s5 + $0x684] sm:$0xff]
  %v1648 = vld [vmem:[%s5 + $0x68c] sm:$0xf]
  %v1649 = vld [vmem:[%s5 + $0x690] sm:$0xff]
  %v1650 = vld [vmem:[%s5 + $0x698] sm:$0xff]
  %v1651 = vld [vmem:[%s5 + $0x6a0] sm:$0xf]
  %v1652 = vld [vmem:[%s5 + $0x6a4] sm:$0xff]
  %v1653 = vld [vmem:[%s5 + $0x6ac] sm:$0xff]
  %v1654 = vld [vmem:[%s5 + $0x6b4] sm:$0xf]
  %v1655 = vld [vmem:[%s5 + $0x6b8] sm:$0xff]
  %v1656 = vld [vmem:[%s5 + $0x6c0] sm:$0xff]
  %v1657 = vld [vmem:[%s5 + $0x6c8] sm:$0xf]
  %v1658 = vld [vmem:[%s5 + $0x6cc] sm:$0xff]
  %v1659 = vld [vmem:[%s5 + $0x6d4] sm:$0xff]
  %v1660 = vld [vmem:[%s5 + $0x6dc] sm:$0xf]
  %v1661 = vld [vmem:[%s5 + $0x6e0] sm:$0xff]
  %v1662 = vld [vmem:[%s5 + $0x6e8] sm:$0xff]
  %v1663 = vld [vmem:[%s5 + $0x6f0] sm:$0xf]
  %v1664 = vld [vmem:[%s5 + $0x6f4] sm:$0xff]
  %v1665 = vld [vmem:[%s5 + $0x6fc] sm:$0xff]
  %v1666 = vld [vmem:[%s5 + $0x704] sm:$0xf]
  %v1667 = vld [vmem:[%s5 + $0x708] sm:$0xff]
  %v1668 = vld [vmem:[%s5 + $0x710] sm:$0xff]
  %v1669 = vld [vmem:[%s5 + $0x718] sm:$0xf]
  %v1670 = vld [vmem:[%s5 + $0x71c] sm:$0xff]
  %v1671 = vld [vmem:[%s5 + $0x724] sm:$0xff]
  %v1672 = vld [vmem:[%s5 + $0x72c] sm:$0xf]
  %v1673 = vld [vmem:[%s5 + $0x730] sm:$0xff]
  %v1674 = vld [vmem:[%s5 + $0x738] sm:$0xff]
  %v1675 = vld [vmem:[%s5 + $0x740] sm:$0xf]
  %v1676 = vld [vmem:[%s5 + $0x744] sm:$0xff]
  %v1677 = vld [vmem:[%s5 + $0x74c] sm:$0xff]
  %v1678 = vld [vmem:[%s5 + $0x754] sm:$0xf]
  %v1679 = vld [vmem:[%s5 + $0x758] sm:$0xff]
  %v1680 = vld [vmem:[%s5 + $0x760] sm:$0xff]
  %v1681 = vld [vmem:[%s5 + $0x768] sm:$0xf]
  %v1682 = vld [vmem:[%s5 + $0x76c] sm:$0xff]
  %v1683 = vld [vmem:[%s5 + $0x774] sm:$0xff]
  %v1684 = vld [vmem:[%s5 + $0x77c] sm:$0xf]
  %v1685 = vld [vmem:[%s5 + $0x780] sm:$0xff]
  %v1686 = vld [vmem:[%s5 + $0x788] sm:$0xff]
  %v1687 = vld [vmem:[%s5 + $0x790] sm:$0xf]
  %v1688 = vld [vmem:[%s5 + $0x794] sm:$0xff]
  %v1689 = vld [vmem:[%s5 + $0x79c] sm:$0xff]
  %v1690 = vld [vmem:[%s5 + $0x7a4] sm:$0xf]
  %v1691 = vld [vmem:[%s5 + $0x7a8] sm:$0xff]
  %v1692 = vld [vmem:[%s5 + $0x7b0] sm:$0xff]
  %v1693 = vld [vmem:[%s5 + $0x7b8] sm:$0xf]
  %v1694 = vld [vmem:[%s6] sm:$0x1f]
  %v1696 = vperm.slane %v1694, 0
  %v1697 = vperm.slane %v1694, 1
  %v1698 = vperm.slane %v1694, 2
  %v1699 = vperm.slane %v1694, 3
  %v1700 = vperm.slane %v1694, 4
  %v1707 = vshrl.u32 %v1369, 16
  %v1709 = vshll.u32 %v1369, 16
  %v1711 = vrot.slane %v1709, 1
  %v1712 = vor.u32 %v1707, %v1711
  %v1714 = vshll.u32 %v1376, 16
  %v1716 = vrot.slane %v1714, 1
  %v1717 = vsel %vm425, %v1712, %v1716
  %v1719 = vshrl.u32 %v1370, 16
  %v1721 = vshll.u32 %v1370, 16
  %v1723 = vrot.slane %v1721, 1
  %v1724 = vor.u32 %v1719, %v1723
  %v1726 = vshll.u32 %v1377, 16
  %v1728 = vrot.slane %v1726, 1
  %v1729 = vsel %vm425, %v1724, %v1728
  %v1731 = vshrl.u32 %v1371, 16
  %v1733 = vshll.u32 %v1371, 16
  %v1735 = vrot.slane %v1733, 1
  %v1736 = vor.u32 %v1731, %v1735
  %v1738 = vshll.u32 %v1378, 16
  %v1740 = vrot.slane %v1738, 1
  %v1741 = vsel %vm425, %v1736, %v1740
  %v1743 = vshrl.u32 %v1372, 16
  %v1745 = vshll.u32 %v1372, 16
  %v1747 = vrot.slane %v1745, 1
  %v1748 = vor.u32 %v1743, %v1747
  %v1750 = vshll.u32 %v1379, 16
  %v1752 = vrot.slane %v1750, 1
  %v1753 = vsel %vm425, %v1748, %v1752
  %v1755 = vshrl.u32 %v1373, 16
  %v1757 = vshll.u32 %v1373, 16
  %v1759 = vrot.slane %v1757, 1
  %v1760 = vor.u32 %v1755, %v1759
  %v1762 = vshll.u32 %v1380, 16
  %v1764 = vrot.slane %v1762, 1
  %v1765 = vsel %vm425, %v1760, %v1764
  %v1767 = vshrl.u32 %v1374, 16
  %v1769 = vshll.u32 %v1374, 16
  %v1771 = vrot.slane %v1769, 1
  %v1772 = vor.u32 %v1767, %v1771
  %v1774 = vshll.u32 %v1381, 16
  %v1776 = vrot.slane %v1774, 1
  %v1777 = vsel %vm425, %v1772, %v1776
  %v1779 = vshrl.u32 %v1375, 16
  %v1781 = vshll.u32 %v1375, 16
  %v1783 = vrot.slane %v1781, 1
  %v1784 = vor.u32 %v1779, %v1783
  %v1786 = vshll.u32 %v1382, 16
  %v1788 = vrot.slane %v1786, 1
  %v1789 = vsel %vm425, %v1784, %v1788
  %v1790 = vshrl.u32 %v1376, 16
  %v1792 = vor.u32 %v1790, %v1716
  %v1794 = vshll.u32 %v1383, 16
  %v1796 = vrot.slane %v1794, 1
  %v1797 = vsel %vm425, %v1792, %v1796
  %v1798 = vshrl.u32 %v1377, 16
  %v1800 = vor.u32 %v1798, %v1728
  %v1802 = vshll.u32 %v1384, 16
  %v1804 = vrot.slane %v1802, 1
  %v1805 = vsel %vm425, %v1800, %v1804
  %v1806 = vshrl.u32 %v1378, 16
  %v1808 = vor.u32 %v1806, %v1740
  %v1810 = vshll.u32 %v1385, 16
  %v1812 = vrot.slane %v1810, 1
  %v1813 = vsel %vm425, %v1808, %v1812
  %v1814 = vshrl.u32 %v1379, 16
  %v1816 = vor.u32 %v1814, %v1752
  %v1818 = vshll.u32 %v1386, 16
  %v1820 = vrot.slane %v1818, 1
  %v1821 = vsel %vm425, %v1816, %v1820
  %v1822 = vshrl.u32 %v1380, 16
  %v1824 = vor.u32 %v1822, %v1764
  %v1826 = vshll.u32 %v1387, 16
  %v1828 = vrot.slane %v1826, 1
  %v1829 = vsel %vm425, %v1824, %v1828
  %v1830 = vshrl.u32 %v1381, 16
  %v1832 = vor.u32 %v1830, %v1776
  %v1834 = vshll.u32 %v1388, 16
  %v1836 = vrot.slane %v1834, 1
  %v1837 = vsel %vm425, %v1832, %v1836
  %v1838 = vshrl.u32 %v1382, 16
  %v1840 = vor.u32 %v1838, %v1788
  %v1842 = vshll.u32 %v1389, 16
  %v1844 = vrot.slane %v1842, 1
  %v1845 = vsel %vm425, %v1840, %v1844
  %v1846 = vshrl.u32 %v1383, 16
  %v1848 = vor.u32 %v1846, %v1796
  %v1850 = vshll.u32 %v1390, 16
  %v1852 = vrot.slane %v1850, 1
  %v1853 = vsel %vm425, %v1848, %v1852
  %v1854 = vshrl.u32 %v1384, 16
  %v1856 = vor.u32 %v1854, %v1804
  %v1858 = vshll.u32 %v1391, 16
  %v1860 = vrot.slane %v1858, 1
  %v1861 = vsel %vm425, %v1856, %v1860
  %v1862 = vshrl.u32 %v1385, 16
  %v1864 = vor.u32 %v1862, %v1812
  %v1866 = vshll.u32 %v1392, 16
  %v1868 = vrot.slane %v1866, 1
  %v1869 = vsel %vm425, %v1864, %v1868
  %v1870 = vshrl.u32 %v1386, 16
  %v1872 = vor.u32 %v1870, %v1820
  %v1874 = vshll.u32 %v1393, 16
  %v1876 = vrot.slane %v1874, 1
  %v1877 = vsel %vm425, %v1872, %v1876
  %v1878 = vshrl.u32 %v1387, 16
  %v1880 = vor.u32 %v1878, %v1828
  %v1882 = vshll.u32 %v1394, 16
  %v1884 = vrot.slane %v1882, 1
  %v1885 = vsel %vm425, %v1880, %v1884
  %v1886 = vshrl.u32 %v1388, 16
  %v1888 = vor.u32 %v1886, %v1836
  %v1890 = vshll.u32 %v1395, 16
  %v1892 = vrot.slane %v1890, 1
  %v1893 = vsel %vm425, %v1888, %v1892
  %v1894 = vshrl.u32 %v1389, 16
  %v1896 = vor.u32 %v1894, %v1844
  %v1898 = vshll.u32 %v1396, 16
  %v1900 = vrot.slane %v1898, 1
  %v1901 = vsel %vm425, %v1896, %v1900
  %v1902 = vshrl.u32 %v1390, 16
  %v1904 = vor.u32 %v1902, %v1852
  %v1905 = vshrl.u32 %v1391, 16
  %v1907 = vor.u32 %v1905, %v1860
  %v1908 = vshrl.u32 %v1392, 16
  %v1910 = vor.u32 %v1908, %v1868
  %v1911 = vshrl.u32 %v1393, 16
  %v1913 = vor.u32 %v1911, %v1876
  %v1914 = vshrl.u32 %v1394, 16
  %v1916 = vor.u32 %v1914, %v1884
  %v1917 = vshrl.u32 %v1395, 16
  %v1919 = vor.u32 %v1917, %v1892
  %v1920 = vshrl.u32 %v1396, 16
  %v1922 = vor.u32 %v1920, %v1900
  %v2244 = vunpack.c.l.b16 %v1397
  %v2245 = vunpack.c.h.b16 %v1397
  %v2246 = vunpack.c.l.b16 %v1398
  %v2247 = vunpack.c.h.b16 %v1398
  %v2248 = vunpack.c.l.b16 %v1399
  %v2249 = vunpack.c.l.b16 %v1400
  %v2250 = vunpack.c.h.b16 %v1400
  %v2251 = vunpack.c.l.b16 %v1401
  %v2252 = vunpack.c.h.b16 %v1401
  %v2253 = vunpack.c.l.b16 %v1402
  %v2254 = vunpack.c.l.b16 %v1403
  %v2255 = vunpack.c.h.b16 %v1403
  %v2256 = vunpack.c.l.b16 %v1404
  %v2257 = vunpack.c.h.b16 %v1404
  %v2258 = vunpack.c.l.b16 %v1405
  %v2259 = vunpack.c.l.b16 %v1406
  %v2260 = vunpack.c.h.b16 %v1406
  %v2261 = vunpack.c.l.b16 %v1407
  %v2262 = vunpack.c.h.b16 %v1407
  %v2263 = vunpack.c.l.b16 %v1408
  %v2264 = vunpack.c.l.b16 %v1409
  %v2265 = vunpack.c.h.b16 %v1409
  %v2266 = vunpack.c.l.b16 %v1410
  %v2267 = vunpack.c.h.b16 %v1410
  %v2268 = vunpack.c.l.b16 %v1411
  %v2269 = vunpack.c.l.b16 %v1412
  %v2270 = vunpack.c.h.b16 %v1412
  %v2271 = vunpack.c.l.b16 %v1413
  %v2272 = vunpack.c.h.b16 %v1413
  %v2273 = vunpack.c.l.b16 %v1414
  %v2274 = vunpack.c.l.b16 %v1415
  %v2275 = vunpack.c.h.b16 %v1415
  %v2276 = vunpack.c.l.b16 %v1416
  %v2277 = vunpack.c.h.b16 %v1416
  %v2278 = vunpack.c.l.b16 %v1417
  %v2279 = vunpack.c.l.b16 %v1418
  %v2280 = vunpack.c.h.b16 %v1418
  %v2281 = vunpack.c.l.b16 %v1419
  %v2282 = vunpack.c.h.b16 %v1419
  %v2283 = vunpack.c.l.b16 %v1420
  %v2284 = vunpack.c.l.b16 %v1421
  %v2285 = vunpack.c.h.b16 %v1421
  %v2286 = vunpack.c.l.b16 %v1422
  %v2287 = vunpack.c.h.b16 %v1422
  %v2288 = vunpack.c.l.b16 %v1423
  %v2289 = vunpack.c.l.b16 %v1424
  %v2290 = vunpack.c.h.b16 %v1424
  %v2291 = vunpack.c.l.b16 %v1425
  %v2292 = vunpack.c.h.b16 %v1425
  %v2293 = vunpack.c.l.b16 %v1426
  %v2294 = vunpack.c.l.b16 %v1427
  %v2295 = vunpack.c.h.b16 %v1427
  %v2296 = vunpack.c.l.b16 %v1428
  %v2297 = vunpack.c.h.b16 %v1428
  %v2298 = vunpack.c.l.b16 %v1429
  %v2299 = vunpack.c.l.b16 %v1430
  %v2300 = vunpack.c.h.b16 %v1430
  %v2301 = vunpack.c.l.b16 %v1431
  %v2302 = vunpack.c.h.b16 %v1431
  %v2303 = vunpack.c.l.b16 %v1432
  %v2304 = vunpack.c.l.b16 %v1433
  %v2305 = vunpack.c.h.b16 %v1433
  %v2306 = vunpack.c.l.b16 %v1434
  %v2307 = vunpack.c.h.b16 %v1434
  %v2308 = vunpack.c.l.b16 %v1435
  %v2309 = vunpack.c.l.b16 %v1436
  %v2310 = vunpack.c.h.b16 %v1436
  %v2311 = vunpack.c.l.b16 %v1437
  %v2312 = vunpack.c.h.b16 %v1437
  %v2313 = vunpack.c.l.b16 %v1438
  %v2314 = vunpack.c.l.b16 %v1439
  %v2315 = vunpack.c.h.b16 %v1439
  %v2316 = vunpack.c.l.b16 %v1440
  %v2317 = vunpack.c.h.b16 %v1440
  %v2318 = vunpack.c.l.b16 %v1441
  %v2319 = vunpack.c.l.b16 %v1442
  %v2320 = vunpack.c.h.b16 %v1442
  %v2321 = vunpack.c.l.b16 %v1443
  %v2322 = vunpack.c.h.b16 %v1443
  %v2323 = vunpack.c.l.b16 %v1444
  %v2324 = vunpack.c.l.b16 %v1445
  %v2325 = vunpack.c.h.b16 %v1445
  %v2326 = vunpack.c.l.b16 %v1446
  %v2327 = vunpack.c.h.b16 %v1446
  %v2328 = vunpack.c.l.b16 %v1447
  %v2329 = vunpack.c.l.b16 %v1448
  %v2330 = vunpack.c.h.b16 %v1448
  %v2331 = vunpack.c.l.b16 %v1449
  %v2332 = vunpack.c.h.b16 %v1449
  %v2333 = vunpack.c.l.b16 %v1450
  %v2334 = vunpack.c.l.b16 %v1451
  %v2335 = vunpack.c.h.b16 %v1451
  %v2336 = vunpack.c.l.b16 %v1452
  %v2337 = vunpack.c.h.b16 %v1452
  %v2338 = vunpack.c.l.b16 %v1453
  %v2339 = vunpack.c.l.b16 %v1454
  %v2340 = vunpack.c.h.b16 %v1454
  %v2341 = vunpack.c.l.b16 %v1455
  %v2342 = vunpack.c.h.b16 %v1455
  %v2343 = vunpack.c.l.b16 %v1456
  %v2344 = vunpack.c.l.b16 %v1457
  %v2345 = vunpack.c.h.b16 %v1457
  %v2346 = vunpack.c.l.b16 %v1458
  %v2347 = vunpack.c.h.b16 %v1458
  %v2348 = vunpack.c.l.b16 %v1459
  %v2349 = vunpack.c.l.b16 %v1460
  %v2350 = vunpack.c.h.b16 %v1460
  %v2351 = vunpack.c.l.b16 %v1461
  %v2352 = vunpack.c.h.b16 %v1461
  %v2353 = vunpack.c.l.b16 %v1462
  %v2354 = vunpack.c.l.b16 %v1463
  %v2355 = vunpack.c.h.b16 %v1463
  %v2356 = vunpack.c.l.b16 %v1464
  %v2357 = vunpack.c.h.b16 %v1464
  %v2358 = vunpack.c.l.b16 %v1465
  %v2359 = vunpack.c.l.b16 %v1466
  %v2360 = vunpack.c.h.b16 %v1466
  %v2361 = vunpack.c.l.b16 %v1467
  %v2362 = vunpack.c.h.b16 %v1467
  %v2363 = vunpack.c.l.b16 %v1468
  %v2364 = vunpack.c.l.b16 %v1469
  %v2365 = vunpack.c.h.b16 %v1469
  %v2366 = vunpack.c.l.b16 %v1470
  %v2367 = vunpack.c.h.b16 %v1470
  %v2368 = vunpack.c.l.b16 %v1471
  %v2369 = vunpack.c.l.b16 %v1472
  %v2370 = vunpack.c.h.b16 %v1472
  %v2371 = vunpack.c.l.b16 %v1473
  %v2372 = vunpack.c.h.b16 %v1473
  %v2373 = vunpack.c.l.b16 %v1474
  %v2374 = vunpack.c.l.b16 %v1475
  %v2375 = vunpack.c.h.b16 %v1475
  %v2376 = vunpack.c.l.b16 %v1476
  %v2377 = vunpack.c.h.b16 %v1476
  %v2378 = vunpack.c.l.b16 %v1477
  %v2379 = vunpack.c.l.b16 %v1478
  %v2380 = vunpack.c.h.b16 %v1478
  %v2381 = vunpack.c.l.b16 %v1479
  %v2382 = vunpack.c.h.b16 %v1479
  %v2383 = vunpack.c.l.b16 %v1480
  %v2384 = vunpack.c.l.b16 %v1481
  %v2385 = vunpack.c.h.b16 %v1481
  %v2386 = vunpack.c.l.b16 %v1482
  %v2387 = vunpack.c.h.b16 %v1482
  %v2388 = vunpack.c.l.b16 %v1483
  %v2389 = vunpack.c.l.b16 %v1484
  %v2390 = vunpack.c.h.b16 %v1484
  %v2391 = vunpack.c.l.b16 %v1485
  %v2392 = vunpack.c.h.b16 %v1485
  %v2393 = vunpack.c.l.b16 %v1486
  %v2394 = vunpack.c.l.b16 %v1487
  %v2395 = vunpack.c.h.b16 %v1487
  %v2396 = vunpack.c.l.b16 %v1488
  %v2397 = vunpack.c.h.b16 %v1488
  %v2398 = vunpack.c.l.b16 %v1489
  %v2399 = vunpack.c.l.b16 %v1490
  %v2400 = vunpack.c.h.b16 %v1490
  %v2401 = vunpack.c.l.b16 %v1491
  %v2402 = vunpack.c.h.b16 %v1491
  %v2403 = vunpack.c.l.b16 %v1492
  %v2404 = vunpack.c.l.b16 %v1493
  %v2405 = vunpack.c.h.b16 %v1493
  %v2406 = vunpack.c.l.b16 %v1494
  %v2407 = vunpack.c.h.b16 %v1494
  %v2408 = vunpack.c.l.b16 %v1495
  %v2409 = vunpack.c.l.b16 %v1496
  %v2410 = vunpack.c.h.b16 %v1496
  %v2411 = vunpack.c.l.b16 %v1497
  %v2412 = vunpack.c.h.b16 %v1497
  %v2413 = vunpack.c.l.b16 %v1498
  %v2414 = vunpack.c.l.b16 %v1499
  %v2415 = vunpack.c.h.b16 %v1499
  %v2416 = vunpack.c.l.b16 %v1500
  %v2417 = vunpack.c.h.b16 %v1500
  %v2418 = vunpack.c.l.b16 %v1501
  %v2419 = vunpack.c.l.b16 %v1502
  %v2420 = vunpack.c.h.b16 %v1502
  %v2421 = vunpack.c.l.b16 %v1503
  %v2422 = vunpack.c.h.b16 %v1503
  %v2423 = vunpack.c.l.b16 %v1504
  %v2424 = vunpack.c.l.b16 %v1505
  %v2425 = vunpack.c.h.b16 %v1505
  %v2426 = vunpack.c.l.b16 %v1506
  %v2427 = vunpack.c.h.b16 %v1506
  %v2428 = vunpack.c.l.b16 %v1507
  %v2429 = vunpack.c.l.b16 %v1508
  %v2430 = vunpack.c.h.b16 %v1508
  %v2431 = vunpack.c.l.b16 %v1509
  %v2432 = vunpack.c.h.b16 %v1509
  %v2433 = vunpack.c.l.b16 %v1510
  %v2434 = vunpack.c.l.b16 %v1511
  %v2435 = vunpack.c.h.b16 %v1511
  %v2436 = vunpack.c.l.b16 %v1512
  %v2437 = vunpack.c.h.b16 %v1512
  %v2438 = vunpack.c.l.b16 %v1513
  %v2439 = vunpack.c.l.b16 %v1514
  %v2440 = vunpack.c.h.b16 %v1514
  %v2441 = vunpack.c.l.b16 %v1515
  %v2442 = vunpack.c.h.b16 %v1515
  %v2443 = vunpack.c.l.b16 %v1516
  %v2444 = vunpack.c.l.b16 %v1517
  %v2445 = vunpack.c.h.b16 %v1517
  %v2446 = vunpack.c.l.b16 %v1518
  %v2447 = vunpack.c.h.b16 %v1518
  %v2448 = vunpack.c.l.b16 %v1519
  %v2449 = vunpack.c.l.b16 %v1520
  %v2450 = vunpack.c.h.b16 %v1520
  %v2451 = vunpack.c.l.b16 %v1521
  %v2452 = vunpack.c.h.b16 %v1521
  %v2453 = vunpack.c.l.b16 %v1522
  %v2454 = vunpack.c.l.b16 %v1523
  %v2455 = vunpack.c.h.b16 %v1523
  %v2456 = vunpack.c.l.b16 %v1524
  %v2457 = vunpack.c.h.b16 %v1524
  %v2458 = vunpack.c.l.b16 %v1525
  %v2459 = vunpack.c.l.b16 %v1526
  %v2460 = vunpack.c.h.b16 %v1526
  %v2461 = vunpack.c.l.b16 %v1527
  %v2462 = vunpack.c.h.b16 %v1527
  %v2463 = vunpack.c.l.b16 %v1528
  %v2464 = vunpack.c.l.b16 %v1529
  %v2465 = vunpack.c.h.b16 %v1529
  %v2466 = vunpack.c.l.b16 %v1530
  %v2467 = vunpack.c.h.b16 %v1530
  %v2468 = vunpack.c.l.b16 %v1531
  %v2469 = vunpack.c.l.b16 %v1532
  %v2470 = vunpack.c.h.b16 %v1532
  %v2471 = vunpack.c.l.b16 %v1533
  %v2472 = vunpack.c.h.b16 %v1533
  %v2473 = vunpack.c.l.b16 %v1534
  %v2474 = vunpack.c.l.b16 %v1535
  %v2475 = vunpack.c.h.b16 %v1535
  %v2476 = vunpack.c.l.b16 %v1536
  %v2477 = vunpack.c.h.b16 %v1536
  %v2478 = vunpack.c.l.b16 %v1537
  %v2479 = vunpack.c.l.b16 %v1538
  %v2480 = vunpack.c.h.b16 %v1538
  %v2481 = vunpack.c.l.b16 %v1539
  %v2482 = vunpack.c.h.b16 %v1539
  %v2483 = vunpack.c.l.b16 %v1540
  %v2484 = vunpack.c.l.b16 %v1541
  %v2485 = vunpack.c.h.b16 %v1541
  %v2486 = vunpack.c.l.b16 %v1542
  %v2487 = vunpack.c.h.b16 %v1542
  %v2488 = vunpack.c.l.b16 %v1543
  %v2489 = vunpack.c.l.b16 %v1544
  %v2490 = vunpack.c.h.b16 %v1544
  %v2491 = vunpack.c.l.b16 %v1545
  %v2492 = vunpack.c.h.b16 %v1545
  %v2493 = vunpack.c.l.b16 %v1546
  %v2494 = vunpack.c.l.b16 %v1547
  %v2495 = vunpack.c.h.b16 %v1547
  %v2496 = vunpack.c.l.b16 %v1548
  %v2497 = vunpack.c.h.b16 %v1548
  %v2498 = vunpack.c.l.b16 %v1549
  %v2499 = vunpack.c.l.b16 %v1550
  %v2500 = vunpack.c.h.b16 %v1550
  %v2501 = vunpack.c.l.b16 %v1551
  %v2502 = vunpack.c.h.b16 %v1551
  %v2503 = vunpack.c.l.b16 %v1552
  %v2504 = vunpack.c.l.b16 %v1553
  %v2505 = vunpack.c.h.b16 %v1553
  %v2506 = vunpack.c.l.b16 %v1554
  %v2507 = vunpack.c.h.b16 %v1554
  %v2508 = vunpack.c.l.b16 %v1555
  %v2509 = vunpack.c.l.b16 %v1556
  %v2510 = vunpack.c.h.b16 %v1556
  %v2511 = vunpack.c.l.b16 %v1557
  %v2512 = vunpack.c.h.b16 %v1557
  %v2513 = vunpack.c.l.b16 %v1558
  %v2514 = vunpack.c.l.b16 %v1559
  %v2515 = vunpack.c.h.b16 %v1559
  %v2516 = vunpack.c.l.b16 %v1560
  %v2517 = vunpack.c.h.b16 %v1560
  %v2518 = vunpack.c.l.b16 %v1561
  %v2519 = vunpack.c.l.b16 %v1562
  %v2520 = vunpack.c.h.b16 %v1562
  %v2521 = vunpack.c.l.b16 %v1563
  %v2522 = vunpack.c.h.b16 %v1563
  %v2523 = vunpack.c.l.b16 %v1564
  %v2524 = vunpack.c.l.b16 %v1565
  %v2525 = vunpack.c.h.b16 %v1565
  %v2526 = vunpack.c.l.b16 %v1566
  %v2527 = vunpack.c.h.b16 %v1566
  %v2528 = vunpack.c.l.b16 %v1567
  %v2529 = vunpack.c.l.b16 %v1568
  %v2530 = vunpack.c.h.b16 %v1568
  %v2531 = vunpack.c.l.b16 %v1569
  %v2532 = vunpack.c.h.b16 %v1569
  %v2533 = vunpack.c.l.b16 %v1570
  %v2534 = vunpack.c.l.b16 %v1571
  %v2535 = vunpack.c.h.b16 %v1571
  %v2536 = vunpack.c.l.b16 %v1572
  %v2537 = vunpack.c.h.b16 %v1572
  %v2538 = vunpack.c.l.b16 %v1573
  %v2539 = vunpack.c.l.b16 %v1574
  %v2540 = vunpack.c.h.b16 %v1574
  %v2541 = vunpack.c.l.b16 %v1575
  %v2542 = vunpack.c.h.b16 %v1575
  %v2543 = vunpack.c.l.b16 %v1576
  %v2544 = vunpack.c.l.b16 %v1577
  %v2545 = vunpack.c.h.b16 %v1577
  %v2546 = vunpack.c.l.b16 %v1578
  %v2547 = vunpack.c.h.b16 %v1578
  %v2548 = vunpack.c.l.b16 %v1579
  %v2549 = vunpack.c.l.b16 %v1580
  %v2550 = vunpack.c.h.b16 %v1580
  %v2551 = vunpack.c.l.b16 %v1581
  %v2552 = vunpack.c.h.b16 %v1581
  %v2553 = vunpack.c.l.b16 %v1582
  %v2554 = vunpack.c.l.b16 %v1583
  %v2555 = vunpack.c.h.b16 %v1583
  %v2556 = vunpack.c.l.b16 %v1584
  %v2557 = vunpack.c.h.b16 %v1584
  %v2558 = vunpack.c.l.b16 %v1585
  %v2559 = vunpack.c.l.b16 %v1586
  %v2560 = vunpack.c.h.b16 %v1586
  %v2561 = vunpack.c.l.b16 %v1587
  %v2562 = vunpack.c.h.b16 %v1587
  %v2563 = vunpack.c.l.b16 %v1588
  %v2564 = vunpack.c.l.b16 %v1589
  %v2565 = vunpack.c.h.b16 %v1589
  %v2566 = vunpack.c.l.b16 %v1590
  %v2567 = vunpack.c.h.b16 %v1590
  %v2568 = vunpack.c.l.b16 %v1591
  %v2569 = vunpack.c.l.b16 %v1592
  %v2570 = vunpack.c.h.b16 %v1592
  %v2571 = vunpack.c.l.b16 %v1593
  %v2572 = vunpack.c.h.b16 %v1593
  %v2573 = vunpack.c.l.b16 %v1594
  %v2574 = vunpack.c.l.b16 %v1595
  %v2575 = vunpack.c.h.b16 %v1595
  %v2576 = vunpack.c.l.b16 %v1596
  %v2577 = vunpack.c.h.b16 %v1596
  %v2578 = vunpack.c.l.b16 %v1597
  %v2579 = vunpack.c.l.b16 %v1598
  %v2580 = vunpack.c.h.b16 %v1598
  %v2581 = vunpack.c.l.b16 %v1599
  %v2582 = vunpack.c.h.b16 %v1599
  %v2583 = vunpack.c.l.b16 %v1600
  %v2584 = vunpack.c.l.b16 %v1601
  %v2585 = vunpack.c.h.b16 %v1601
  %v2586 = vunpack.c.l.b16 %v1602
  %v2587 = vunpack.c.h.b16 %v1602
  %v2588 = vunpack.c.l.b16 %v1603
  %v2589 = vunpack.c.l.b16 %v1604
  %v2590 = vunpack.c.h.b16 %v1604
  %v2591 = vunpack.c.l.b16 %v1605
  %v2592 = vunpack.c.h.b16 %v1605
  %v2593 = vunpack.c.l.b16 %v1606
  %v2594 = vunpack.c.l.b16 %v1607
  %v2595 = vunpack.c.h.b16 %v1607
  %v2596 = vunpack.c.l.b16 %v1608
  %v2597 = vunpack.c.h.b16 %v1608
  %v2598 = vunpack.c.l.b16 %v1609
  %v2599 = vunpack.c.l.b16 %v1610
  %v2600 = vunpack.c.h.b16 %v1610
  %v2601 = vunpack.c.l.b16 %v1611
  %v2602 = vunpack.c.h.b16 %v1611
  %v2603 = vunpack.c.l.b16 %v1612
  %v2604 = vunpack.c.l.b16 %v1613
  %v2605 = vunpack.c.h.b16 %v1613
  %v2606 = vunpack.c.l.b16 %v1614
  %v2607 = vunpack.c.h.b16 %v1614
  %v2608 = vunpack.c.l.b16 %v1615
  %v2609 = vunpack.c.l.b16 %v1616
  %v2610 = vunpack.c.h.b16 %v1616
  %v2611 = vunpack.c.l.b16 %v1617
  %v2612 = vunpack.c.h.b16 %v1617
  %v2613 = vunpack.c.l.b16 %v1618
  %v2614 = vunpack.c.l.b16 %v1619
  %v2615 = vunpack.c.h.b16 %v1619
  %v2616 = vunpack.c.l.b16 %v1620
  %v2617 = vunpack.c.h.b16 %v1620
  %v2618 = vunpack.c.l.b16 %v1621
  %v2619 = vunpack.c.l.b16 %v1622
  %v2620 = vunpack.c.h.b16 %v1622
  %v2621 = vunpack.c.l.b16 %v1623
  %v2622 = vunpack.c.h.b16 %v1623
  %v2623 = vunpack.c.l.b16 %v1624
  %v2624 = vunpack.c.l.b16 %v1625
  %v2625 = vunpack.c.h.b16 %v1625
  %v2626 = vunpack.c.l.b16 %v1626
  %v2627 = vunpack.c.h.b16 %v1626
  %v2628 = vunpack.c.l.b16 %v1627
  %v2629 = vunpack.c.l.b16 %v1628
  %v2630 = vunpack.c.h.b16 %v1628
  %v2631 = vunpack.c.l.b16 %v1629
  %v2632 = vunpack.c.h.b16 %v1629
  %v2633 = vunpack.c.l.b16 %v1630
  %v2634 = vunpack.c.l.b16 %v1631
  %v2635 = vunpack.c.h.b16 %v1631
  %v2636 = vunpack.c.l.b16 %v1632
  %v2637 = vunpack.c.h.b16 %v1632
  %v2638 = vunpack.c.l.b16 %v1633
  %v2639 = vunpack.c.l.b16 %v1634
  %v2640 = vunpack.c.h.b16 %v1634
  %v2641 = vunpack.c.l.b16 %v1635
  %v2642 = vunpack.c.h.b16 %v1635
  %v2643 = vunpack.c.l.b16 %v1636
  %v2644 = vunpack.c.l.b16 %v1637
  %v2645 = vunpack.c.h.b16 %v1637
  %v2646 = vunpack.c.l.b16 %v1638
  %v2647 = vunpack.c.h.b16 %v1638
  %v2648 = vunpack.c.l.b16 %v1639
  %v2649 = vunpack.c.l.b16 %v1640
  %v2650 = vunpack.c.h.b16 %v1640
  %v2651 = vunpack.c.l.b16 %v1641
  %v2652 = vunpack.c.h.b16 %v1641
  %v2653 = vunpack.c.l.b16 %v1642
  %v2654 = vunpack.c.l.b16 %v1643
  %v2655 = vunpack.c.h.b16 %v1643
  %v2656 = vunpack.c.l.b16 %v1644
  %v2657 = vunpack.c.h.b16 %v1644
  %v2658 = vunpack.c.l.b16 %v1645
  %v2659 = vunpack.c.l.b16 %v1646
  %v2660 = vunpack.c.h.b16 %v1646
  %v2661 = vunpack.c.l.b16 %v1647
  %v2662 = vunpack.c.h.b16 %v1647
  %v2663 = vunpack.c.l.b16 %v1648
  %v2664 = vunpack.c.l.b16 %v1649
  %v2665 = vunpack.c.h.b16 %v1649
  %v2666 = vunpack.c.l.b16 %v1650
  %v2667 = vunpack.c.h.b16 %v1650
  %v2668 = vunpack.c.l.b16 %v1651
  %v2669 = vunpack.c.l.b16 %v1652
  %v2670 = vunpack.c.h.b16 %v1652
  %v2671 = vunpack.c.l.b16 %v1653
  %v2672 = vunpack.c.h.b16 %v1653
  %v2673 = vunpack.c.l.b16 %v1654
  %v2674 = vunpack.c.l.b16 %v1655
  %v2675 = vunpack.c.h.b16 %v1655
  %v2676 = vunpack.c.l.b16 %v1656
  %v2677 = vunpack.c.h.b16 %v1656
  %v2678 = vunpack.c.l.b16 %v1657
  %v2679 = vunpack.c.l.b16 %v1658
  %v2680 = vunpack.c.h.b16 %v1658
  %v2681 = vunpack.c.l.b16 %v1659
  %v2682 = vunpack.c.h.b16 %v1659
  %v2683 = vunpack.c.l.b16 %v1660
  %v2684 = vunpack.c.l.b16 %v1661
  %v2685 = vunpack.c.h.b16 %v1661
  %v2686 = vunpack.c.l.b16 %v1662
  %v2687 = vunpack.c.h.b16 %v1662
  %v2688 = vunpack.c.l.b16 %v1663
  %v2689 = vunpack.c.l.b16 %v1664
  %v2690 = vunpack.c.h.b16 %v1664
  %v2691 = vunpack.c.l.b16 %v1665
  %v2692 = vunpack.c.h.b16 %v1665
  %v2693 = vunpack.c.l.b16 %v1666
  %v2694 = vunpack.c.l.b16 %v1667
  %v2695 = vunpack.c.h.b16 %v1667
  %v2696 = vunpack.c.l.b16 %v1668
  %v2697 = vunpack.c.h.b16 %v1668
  %v2698 = vunpack.c.l.b16 %v1669
  %v2699 = vunpack.c.l.b16 %v1670
  %v2700 = vunpack.c.h.b16 %v1670
  %v2701 = vunpack.c.l.b16 %v1671
  %v2702 = vunpack.c.h.b16 %v1671
  %v2703 = vunpack.c.l.b16 %v1672
  %v2704 = vunpack.c.l.b16 %v1673
  %v2705 = vunpack.c.h.b16 %v1673
  %v2706 = vunpack.c.l.b16 %v1674
  %v2707 = vunpack.c.h.b16 %v1674
  %v2708 = vunpack.c.l.b16 %v1675
  %v2709 = vunpack.c.l.b16 %v1676
  %v2710 = vunpack.c.h.b16 %v1676
  %v2711 = vunpack.c.l.b16 %v1677
  %v2712 = vunpack.c.h.b16 %v1677
  %v2713 = vunpack.c.l.b16 %v1678
  %v2714 = vunpack.c.l.b16 %v1679
  %v2715 = vunpack.c.h.b16 %v1679
  %v2716 = vunpack.c.l.b16 %v1680
  %v2717 = vunpack.c.h.b16 %v1680
  %v2718 = vunpack.c.l.b16 %v1681
  %v2719 = vunpack.c.l.b16 %v1682
  %v2720 = vunpack.c.h.b16 %v1682
  %v2721 = vunpack.c.l.b16 %v1683
  %v2722 = vunpack.c.h.b16 %v1683
  %v2723 = vunpack.c.l.b16 %v1684
  %v2724 = vunpack.c.l.b16 %v1685
  %v2725 = vunpack.c.h.b16 %v1685
  %v2726 = vunpack.c.l.b16 %v1686
  %v2727 = vunpack.c.h.b16 %v1686
  %v2728 = vunpack.c.l.b16 %v1687
  %v2729 = vunpack.c.l.b16 %v1688
  %v2730 = vunpack.c.h.b16 %v1688
  %v2731 = vunpack.c.l.b16 %v1689
  %v2732 = vunpack.c.h.b16 %v1689
  %v2733 = vunpack.c.l.b16 %v1690
  %v2734 = vunpack.c.l.b16 %v1691
  %v2735 = vunpack.c.h.b16 %v1691
  %v2736 = vunpack.c.l.b16 %v1692
  %v2737 = vunpack.c.h.b16 %v1692
  %v2738 = vunpack.c.l.b16 %v1693
  %v2739 = vpack.c.b16 %v2249, %v2244
  %v2740 = vpack.c.b16 %v2250, %v2245
  %v2741 = vpack.c.b16 %v2251, %v2246
  %v2742 = vpack.c.b16 %v2252, %v2247
  %v2743 = vpack.c.b16 %v2253, %v2248
  %v2744 = vpack.c.b16 %v2259, %v2254
  %v2745 = vpack.c.b16 %v2260, %v2255
  %v2746 = vpack.c.b16 %v2261, %v2256
  %v2747 = vpack.c.b16 %v2262, %v2257
  %v2748 = vpack.c.b16 %v2263, %v2258
  %v2749 = vpack.c.b16 %v2269, %v2264
  %v2750 = vpack.c.b16 %v2270, %v2265
  %v2751 = vpack.c.b16 %v2271, %v2266
  %v2752 = vpack.c.b16 %v2272, %v2267
  %v2753 = vpack.c.b16 %v2273, %v2268
  %v2754 = vpack.c.b16 %v2279, %v2274
  %v2755 = vpack.c.b16 %v2280, %v2275
  %v2756 = vpack.c.b16 %v2281, %v2276
  %v2757 = vpack.c.b16 %v2282, %v2277
  %v2758 = vpack.c.b16 %v2283, %v2278
  %v2759 = vpack.c.b16 %v2289, %v2284
  %v2760 = vpack.c.b16 %v2290, %v2285
  %v2761 = vpack.c.b16 %v2291, %v2286
  %v2762 = vpack.c.b16 %v2292, %v2287
  %v2763 = vpack.c.b16 %v2293, %v2288
  %v2764 = vpack.c.b16 %v2299, %v2294
  %v2765 = vpack.c.b16 %v2300, %v2295
  %v2766 = vpack.c.b16 %v2301, %v2296
  %v2767 = vpack.c.b16 %v2302, %v2297
  %v2768 = vpack.c.b16 %v2303, %v2298
  %v2769 = vpack.c.b16 %v2309, %v2304
  %v2770 = vpack.c.b16 %v2310, %v2305
  %v2771 = vpack.c.b16 %v2311, %v2306
  %v2772 = vpack.c.b16 %v2312, %v2307
  %v2773 = vpack.c.b16 %v2313, %v2308
  %v2774 = vpack.c.b16 %v2319, %v2314
  %v2775 = vpack.c.b16 %v2320, %v2315
  %v2776 = vpack.c.b16 %v2321, %v2316
  %v2777 = vpack.c.b16 %v2322, %v2317
  %v2778 = vpack.c.b16 %v2323, %v2318
  %v2779 = vpack.c.b16 %v2329, %v2324
  %v2780 = vpack.c.b16 %v2330, %v2325
  %v2781 = vpack.c.b16 %v2331, %v2326
  %v2782 = vpack.c.b16 %v2332, %v2327
  %v2783 = vpack.c.b16 %v2333, %v2328
  %v2784 = vpack.c.b16 %v2339, %v2334
  %v2785 = vpack.c.b16 %v2340, %v2335
  %v2786 = vpack.c.b16 %v2341, %v2336
  %v2787 = vpack.c.b16 %v2342, %v2337
  %v2788 = vpack.c.b16 %v2343, %v2338
  %v2789 = vpack.c.b16 %v2349, %v2344
  %v2790 = vpack.c.b16 %v2350, %v2345
  %v2791 = vpack.c.b16 %v2351, %v2346
  %v2792 = vpack.c.b16 %v2352, %v2347
  %v2793 = vpack.c.b16 %v2353, %v2348
  %v2794 = vpack.c.b16 %v2359, %v2354
  %v2795 = vpack.c.b16 %v2360, %v2355
  %v2796 = vpack.c.b16 %v2361, %v2356
  %v2797 = vpack.c.b16 %v2362, %v2357
  %v2798 = vpack.c.b16 %v2363, %v2358
  %v2799 = vpack.c.b16 %v2369, %v2364
  %v2800 = vpack.c.b16 %v2370, %v2365
  %v2801 = vpack.c.b16 %v2371, %v2366
  %v2802 = vpack.c.b16 %v2372, %v2367
  %v2803 = vpack.c.b16 %v2373, %v2368
  %v2804 = vpack.c.b16 %v2379, %v2374
  %v2805 = vpack.c.b16 %v2380, %v2375
  %v2806 = vpack.c.b16 %v2381, %v2376
  %v2807 = vpack.c.b16 %v2382, %v2377
  %v2808 = vpack.c.b16 %v2383, %v2378
  %v2809 = vpack.c.b16 %v2389, %v2384
  %v2810 = vpack.c.b16 %v2390, %v2385
  %v2811 = vpack.c.b16 %v2391, %v2386
  %v2812 = vpack.c.b16 %v2392, %v2387
  %v2813 = vpack.c.b16 %v2393, %v2388
  %v2814 = vpack.c.b16 %v2399, %v2394
  %v2815 = vpack.c.b16 %v2400, %v2395
  %v2816 = vpack.c.b16 %v2401, %v2396
  %v2817 = vpack.c.b16 %v2402, %v2397
  %v2818 = vpack.c.b16 %v2403, %v2398
  %v2819 = vpack.c.b16 %v2409, %v2404
  %v2820 = vpack.c.b16 %v2410, %v2405
  %v2821 = vpack.c.b16 %v2411, %v2406
  %v2822 = vpack.c.b16 %v2412, %v2407
  %v2823 = vpack.c.b16 %v2413, %v2408
  %v2824 = vpack.c.b16 %v2419, %v2414
  %v2825 = vpack.c.b16 %v2420, %v2415
  %v2826 = vpack.c.b16 %v2421, %v2416
  %v2827 = vpack.c.b16 %v2422, %v2417
  %v2828 = vpack.c.b16 %v2423, %v2418
  %v2829 = vpack.c.b16 %v2429, %v2424
  %v2830 = vpack.c.b16 %v2430, %v2425
  %v2831 = vpack.c.b16 %v2431, %v2426
  %v2832 = vpack.c.b16 %v2432, %v2427
  %v2833 = vpack.c.b16 %v2433, %v2428
  %v2834 = vpack.c.b16 %v2439, %v2434
  %v2835 = vpack.c.b16 %v2440, %v2435
  %v2836 = vpack.c.b16 %v2441, %v2436
  %v2837 = vpack.c.b16 %v2442, %v2437
  %v2838 = vpack.c.b16 %v2443, %v2438
  %v2839 = vpack.c.b16 %v2449, %v2444
  %v2840 = vpack.c.b16 %v2450, %v2445
  %v2841 = vpack.c.b16 %v2451, %v2446
  %v2842 = vpack.c.b16 %v2452, %v2447
  %v2843 = vpack.c.b16 %v2453, %v2448
  %v2844 = vpack.c.b16 %v2459, %v2454
  %v2845 = vpack.c.b16 %v2460, %v2455
  %v2846 = vpack.c.b16 %v2461, %v2456
  %v2847 = vpack.c.b16 %v2462, %v2457
  %v2848 = vpack.c.b16 %v2463, %v2458
  %v2849 = vpack.c.b16 %v2469, %v2464
  %v2850 = vpack.c.b16 %v2470, %v2465
  %v2851 = vpack.c.b16 %v2471, %v2466
  %v2852 = vpack.c.b16 %v2472, %v2467
  %v2853 = vpack.c.b16 %v2473, %v2468
  %v2854 = vpack.c.b16 %v2479, %v2474
  %v2855 = vpack.c.b16 %v2480, %v2475
  %v2856 = vpack.c.b16 %v2481, %v2476
  %v2857 = vpack.c.b16 %v2482, %v2477
  %v2858 = vpack.c.b16 %v2483, %v2478
  %v2859 = vpack.c.b16 %v2489, %v2484
  %v2860 = vpack.c.b16 %v2490, %v2485
  %v2861 = vpack.c.b16 %v2491, %v2486
  %v2862 = vpack.c.b16 %v2492, %v2487
  %v2863 = vpack.c.b16 %v2493, %v2488
  %v2864 = vpack.c.b16 %v2499, %v2494
  %v2865 = vpack.c.b16 %v2500, %v2495
  %v2866 = vpack.c.b16 %v2501, %v2496
  %v2867 = vpack.c.b16 %v2502, %v2497
  %v2868 = vpack.c.b16 %v2503, %v2498
  %v2869 = vpack.c.b16 %v2509, %v2504
  %v2870 = vpack.c.b16 %v2510, %v2505
  %v2871 = vpack.c.b16 %v2511, %v2506
  %v2872 = vpack.c.b16 %v2512, %v2507
  %v2873 = vpack.c.b16 %v2513, %v2508
  %v2874 = vpack.c.b16 %v2519, %v2514
  %v2875 = vpack.c.b16 %v2520, %v2515
  %v2876 = vpack.c.b16 %v2521, %v2516
  %v2877 = vpack.c.b16 %v2522, %v2517
  %v2878 = vpack.c.b16 %v2523, %v2518
  %v2879 = vpack.c.b16 %v2529, %v2524
  %v2880 = vpack.c.b16 %v2530, %v2525
  %v2881 = vpack.c.b16 %v2531, %v2526
  %v2882 = vpack.c.b16 %v2532, %v2527
  %v2883 = vpack.c.b16 %v2533, %v2528
  %v2884 = vpack.c.b16 %v2539, %v2534
  %v2885 = vpack.c.b16 %v2540, %v2535
  %v2886 = vpack.c.b16 %v2541, %v2536
  %v2887 = vpack.c.b16 %v2542, %v2537
  %v2888 = vpack.c.b16 %v2543, %v2538
  %v2889 = vpack.c.b16 %v2549, %v2544
  %v2890 = vpack.c.b16 %v2550, %v2545
  %v2891 = vpack.c.b16 %v2551, %v2546
  %v2892 = vpack.c.b16 %v2552, %v2547
  %v2893 = vpack.c.b16 %v2553, %v2548
  %v2894 = vpack.c.b16 %v2559, %v2554
  %v2895 = vpack.c.b16 %v2560, %v2555
  %v2896 = vpack.c.b16 %v2561, %v2556
  %v2897 = vpack.c.b16 %v2562, %v2557
  %v2898 = vpack.c.b16 %v2563, %v2558
  %v2899 = vpack.c.b16 %v2569, %v2564
  %v2900 = vpack.c.b16 %v2570, %v2565
  %v2901 = vpack.c.b16 %v2571, %v2566
  %v2902 = vpack.c.b16 %v2572, %v2567
  %v2903 = vpack.c.b16 %v2573, %v2568
  %v2904 = vpack.c.b16 %v2579, %v2574
  %v2905 = vpack.c.b16 %v2580, %v2575
  %v2906 = vpack.c.b16 %v2581, %v2576
  %v2907 = vpack.c.b16 %v2582, %v2577
  %v2908 = vpack.c.b16 %v2583, %v2578
  %v2909 = vpack.c.b16 %v2589, %v2584
  %v2910 = vpack.c.b16 %v2590, %v2585
  %v2911 = vpack.c.b16 %v2591, %v2586
  %v2912 = vpack.c.b16 %v2592, %v2587
  %v2913 = vpack.c.b16 %v2593, %v2588
  %v2914 = vpack.c.b16 %v2599, %v2594
  %v2915 = vpack.c.b16 %v2600, %v2595
  %v2916 = vpack.c.b16 %v2601, %v2596
  %v2917 = vpack.c.b16 %v2602, %v2597
  %v2918 = vpack.c.b16 %v2603, %v2598
  %v2919 = vpack.c.b16 %v2609, %v2604
  %v2920 = vpack.c.b16 %v2610, %v2605
  %v2921 = vpack.c.b16 %v2611, %v2606
  %v2922 = vpack.c.b16 %v2612, %v2607
  %v2923 = vpack.c.b16 %v2613, %v2608
  %v2924 = vpack.c.b16 %v2619, %v2614
  %v2925 = vpack.c.b16 %v2620, %v2615
  %v2926 = vpack.c.b16 %v2621, %v2616
  %v2927 = vpack.c.b16 %v2622, %v2617
  %v2928 = vpack.c.b16 %v2623, %v2618
  %v2929 = vpack.c.b16 %v2629, %v2624
  %v2930 = vpack.c.b16 %v2630, %v2625
  %v2931 = vpack.c.b16 %v2631, %v2626
  %v2932 = vpack.c.b16 %v2632, %v2627
  %v2933 = vpack.c.b16 %v2633, %v2628
  %v2934 = vpack.c.b16 %v2639, %v2634
  %v2935 = vpack.c.b16 %v2640, %v2635
  %v2936 = vpack.c.b16 %v2641, %v2636
  %v2937 = vpack.c.b16 %v2642, %v2637
  %v2938 = vpack.c.b16 %v2643, %v2638
  %v2939 = vpack.c.b16 %v2649, %v2644
  %v2940 = vpack.c.b16 %v2650, %v2645
  %v2941 = vpack.c.b16 %v2651, %v2646
  %v2942 = vpack.c.b16 %v2652, %v2647
  %v2943 = vpack.c.b16 %v2653, %v2648
  %v2944 = vpack.c.b16 %v2659, %v2654
  %v2945 = vpack.c.b16 %v2660, %v2655
  %v2946 = vpack.c.b16 %v2661, %v2656
  %v2947 = vpack.c.b16 %v2662, %v2657
  %v2948 = vpack.c.b16 %v2663, %v2658
  %v2949 = vpack.c.b16 %v2669, %v2664
  %v2950 = vpack.c.b16 %v2670, %v2665
  %v2951 = vpack.c.b16 %v2671, %v2666
  %v2952 = vpack.c.b16 %v2672, %v2667
  %v2953 = vpack.c.b16 %v2673, %v2668
  %v2954 = vpack.c.b16 %v2679, %v2674
  %v2955 = vpack.c.b16 %v2680, %v2675
  %v2956 = vpack.c.b16 %v2681, %v2676
  %v2957 = vpack.c.b16 %v2682, %v2677
  %v2958 = vpack.c.b16 %v2683, %v2678
  %v2959 = vpack.c.b16 %v2689, %v2684
  %v2960 = vpack.c.b16 %v2690, %v2685
  %v2961 = vpack.c.b16 %v2691, %v2686
  %v2962 = vpack.c.b16 %v2692, %v2687
  %v2963 = vpack.c.b16 %v2693, %v2688
  %v2964 = vpack.c.b16 %v2699, %v2694
  %v2965 = vpack.c.b16 %v2700, %v2695
  %v2966 = vpack.c.b16 %v2701, %v2696
  %v2967 = vpack.c.b16 %v2702, %v2697
  %v2968 = vpack.c.b16 %v2703, %v2698
  %v2969 = vpack.c.b16 %v2709, %v2704
  %v2970 = vpack.c.b16 %v2710, %v2705
  %v2971 = vpack.c.b16 %v2711, %v2706
  %v2972 = vpack.c.b16 %v2712, %v2707
  %v2973 = vpack.c.b16 %v2713, %v2708
  %v2974 = vpack.c.b16 %v2719, %v2714
  %v2975 = vpack.c.b16 %v2720, %v2715
  %v2976 = vpack.c.b16 %v2721, %v2716
  %v2977 = vpack.c.b16 %v2722, %v2717
  %v2978 = vpack.c.b16 %v2723, %v2718
  %v2979 = vpack.c.b16 %v2729, %v2724
  %v2980 = vpack.c.b16 %v2730, %v2725
  %v2981 = vpack.c.b16 %v2731, %v2726
  %v2982 = vpack.c.b16 %v2732, %v2727
  %v2983 = vpack.c.b16 %v2733, %v2728
  %v2984 = vpack.c.b16 %v2734, %v2734
  %v2985 = vpack.c.b16 %v2735, %v2735
  %v2986 = vpack.c.b16 %v2736, %v2736
  %v2987 = vpack.c.b16 %v2737, %v2737
  %v2988 = vpack.c.b16 %v2738, %v2738
  %vm3234 = vcmask 195584
  %v3236 = vsel %vm3234, %v1789, 0
  %v3239 = vsel %vm3234, %v1845, 0
  %v3242 = vsel %vm3234, %v1901, 0
  %v3245 = vsel %vm3234, %v1922, 0
  %vm3247 = vcmask 1043456
  %v3249 = vsel %vm3247, %v2984, 0
  %v3252 = vsel %vm3247, %v2985, 0
  %v3255 = vsel %vm3247, %v2986, 0
  %v3258 = vsel %vm3247, %v2987, 0
  %v3261 = vsel %vm3247, %v2988, 0
  %3263 = vmatpush.bf16.msra.mxu0 %v2774
  %3264 = vmatpush.bf16.msra.mxu0 %v2769
  %3265 = vmatpush.bf16.msra.mxu0 %v2764
  %3266 = vmatpush.bf16.msra.mxu0 %v2759
  %3267 = vmatpush.bf16.msra.mxu0 %v2754
  %3268 = vmatpush.bf16.msra.mxu0 %v2749
  %3269 = vmatpush.bf16.msra.mxu0 %v2744
  %3270 = vmatpush.bf16.msra.mxu0 %v2739
  %3271 = vmatmul.bf16.gmra.mxu0 %v1717
  %v3272 = vpop.f32.mrf.mxu0
  %v3273 = vadd.f32 %v1696, %v3272
  %v3274 = vpop.f32.mrf.mxu0
  %v3275 = vadd.f32 %v1696, %v3274
  %3276 = vmatmul.bf16.gmra.mxu0 %v1797
  %v3277 = vpop.f32.mrf.mxu0
  %v3278 = vadd.f32 %v1696, %v3277
  %v3279 = vpop.f32.mrf.mxu0
  %v3280 = vadd.f32 %v1696, %v3279
  %3281 = vmatmul.bf16.gmra.mxu0 %v1853
  %v3282 = vpop.f32.mrf.mxu0
  %v3283 = vadd.f32 %v1696, %v3282
  %v3284 = vpop.f32.mrf.mxu0
  %v3285 = vadd.f32 %v1696, %v3284
  %3286 = vmatmul.bf16.gmra.mxu0 %v1904
  %v3287 = vpop.f32.mrf.mxu0
  %v3288 = vadd.f32 %v1696, %v3287
  %v3289 = vpop.f32.mrf.mxu0
  %v3290 = vadd.f32 %v1696, %v3289
  %3291 = vdwg.mxu0
  %3292 = vmatpush.bf16.msra.mxu0 %v2814
  %3293 = vmatpush.bf16.msra.mxu0 %v2809
  %3294 = vmatpush.bf16.msra.mxu0 %v2804
  %3295 = vmatpush.bf16.msra.mxu0 %v2799
  %3296 = vmatpush.bf16.msra.mxu0 %v2794
  %3297 = vmatpush.bf16.msra.mxu0 %v2789
  %3298 = vmatpush.bf16.msra.mxu0 %v2784
  %3299 = vmatpush.bf16.msra.mxu0 %v2779
  %3300 = vmatmul.bf16.gmra.mxu0 %v1729
  %v3301 = vpop.f32.mrf.mxu0
  %v3302 = vadd.f32 %v3273, %v3301
  %v3303 = vpop.f32.mrf.mxu0
  %v3304 = vadd.f32 %v3275, %v3303
  %3305 = vmatmul.bf16.gmra.mxu0 %v1805
  %v3306 = vpop.f32.mrf.mxu0
  %v3307 = vadd.f32 %v3278, %v3306
  %v3308 = vpop.f32.mrf.mxu0
  %v3309 = vadd.f32 %v3280, %v3308
  %3310 = vmatmul.bf16.gmra.mxu0 %v1861
  %v3311 = vpop.f32.mrf.mxu0
  %v3312 = vadd.f32 %v3283, %v3311
  %v3313 = vpop.f32.mrf.mxu0
  %v3314 = vadd.f32 %v3285, %v3313
  %3315 = vmatmul.bf16.gmra.mxu0 %v1907
  %v3316 = vpop.f32.mrf.mxu0
  %v3317 = vadd.f32 %v3288, %v3316
  %v3318 = vpop.f32.mrf.mxu0
  %v3319 = vadd.f32 %v3290, %v3318
  %3320 = vdwg.mxu0
  %3321 = vmatpush.bf16.msra.mxu0 %v2854
  %3322 = vmatpush.bf16.msra.mxu0 %v2849
  %3323 = vmatpush.bf16.msra.mxu0 %v2844
  %3324 = vmatpush.bf16.msra.mxu0 %v2839
  %3325 = vmatpush.bf16.msra.mxu0 %v2834
  %3326 = vmatpush.bf16.msra.mxu0 %v2829
  %3327 = vmatpush.bf16.msra.mxu0 %v2824
  %3328 = vmatpush.bf16.msra.mxu0 %v2819
  %3329 = vmatmul.bf16.gmra.mxu0 %v1741
  %v3330 = vpop.f32.mrf.mxu0
  %v3331 = vadd.f32 %v3302, %v3330
  %v3332 = vpop.f32.mrf.mxu0
  %v3333 = vadd.f32 %v3304, %v3332
  %3334 = vmatmul.bf16.gmra.mxu0 %v1813
  %v3335 = vpop.f32.mrf.mxu0
  %v3336 = vadd.f32 %v3307, %v3335
  %v3337 = vpop.f32.mrf.mxu0
  %v3338 = vadd.f32 %v3309, %v3337
  %3339 = vmatmul.bf16.gmra.mxu0 %v1869
  %v3340 = vpop.f32.mrf.mxu0
  %v3341 = vadd.f32 %v3312, %v3340
  %v3342 = vpop.f32.mrf.mxu0
  %v3343 = vadd.f32 %v3314, %v3342
  %3344 = vmatmul.bf16.gmra.mxu0 %v1910
  %v3345 = vpop.f32.mrf.mxu0
  %v3346 = vadd.f32 %v3317, %v3345
  %v3347 = vpop.f32.mrf.mxu0
  %v3348 = vadd.f32 %v3319, %v3347
  %3349 = vdwg.mxu0
  %3350 = vmatpush.bf16.msra.mxu0 %v2894
  %3351 = vmatpush.bf16.msra.mxu0 %v2889
  %3352 = vmatpush.bf16.msra.mxu0 %v2884
  %3353 = vmatpush.bf16.msra.mxu0 %v2879
  %3354 = vmatpush.bf16.msra.mxu0 %v2874
  %3355 = vmatpush.bf16.msra.mxu0 %v2869
  %3356 = vmatpush.bf16.msra.mxu0 %v2864
  %3357 = vmatpush.bf16.msra.mxu0 %v2859
  %3358 = vmatmul.bf16.gmra.mxu0 %v1753
  %v3359 = vpop.f32.mrf.mxu0
  %v3360 = vadd.f32 %v3331, %v3359
  %v3361 = vpop.f32.mrf.mxu0
  %v3362 = vadd.f32 %v3333, %v3361
  %3363 = vmatmul.bf16.gmra.mxu0 %v1821
  %v3364 = vpop.f32.mrf.mxu0
  %v3365 = vadd.f32 %v3336, %v3364
  %v3366 = vpop.f32.mrf.mxu0
  %v3367 = vadd.f32 %v3338, %v3366
  %3368 = vmatmul.bf16.gmra.mxu0 %v1877
  %v3369 = vpop.f32.mrf.mxu0
  %v3370 = vadd.f32 %v3341, %v3369
  %v3371 = vpop.f32.mrf.mxu0
  %v3372 = vadd.f32 %v3343, %v3371
  %3373 = vmatmul.bf16.gmra.mxu0 %v1913
  %v3374 = vpop.f32.mrf.mxu0
  %v3375 = vadd.f32 %v3346, %v3374
  %v3376 = vpop.f32.mrf.mxu0
  %v3377 = vadd.f32 %v3348, %v3376
  %3378 = vdwg.mxu0
  %3379 = vmatpush.bf16.msra.mxu0 %v2934
  %3380 = vmatpush.bf16.msra.mxu0 %v2929
  %3381 = vmatpush.bf16.msra.mxu0 %v2924
  %3382 = vmatpush.bf16.msra.mxu0 %v2919
  %3383 = vmatpush.bf16.msra.mxu0 %v2914
  %3384 = vmatpush.bf16.msra.mxu0 %v2909
  %3385 = vmatpush.bf16.msra.mxu0 %v2904
  %3386 = vmatpush.bf16.msra.mxu0 %v2899
  %3387 = vmatmul.bf16.gmra.mxu0 %v1765
  %v3388 = vpop.f32.mrf.mxu0
  %v3389 = vadd.f32 %v3360, %v3388
  %v3390 = vpop.f32.mrf.mxu0
  %v3391 = vadd.f32 %v3362, %v3390
  %3392 = vmatmul.bf16.gmra.mxu0 %v1829
  %v3393 = vpop.f32.mrf.mxu0
  %v3394 = vadd.f32 %v3365, %v3393
  %v3395 = vpop.f32.mrf.mxu0
  %v3396 = vadd.f32 %v3367, %v3395
  %3397 = vmatmul.bf16.gmra.mxu0 %v1885
  %v3398 = vpop.f32.mrf.mxu0
  %v3399 = vadd.f32 %v3370, %v3398
  %v3400 = vpop.f32.mrf.mxu0
  %v3401 = vadd.f32 %v3372, %v3400
  %3402 = vmatmul.bf16.gmra.mxu0 %v1916
  %v3403 = vpop.f32.mrf.mxu0
  %v3404 = vadd.f32 %v3375, %v3403
  %v3405 = vpop.f32.mrf.mxu0
  %v3406 = vadd.f32 %v3377, %v3405
  %3407 = vdwg.mxu0
  %3408 = vmatpush.bf16.msra.mxu0 %v2974
  %3409 = vmatpush.bf16.msra.mxu0 %v2969
  %3410 = vmatpush.bf16.msra.mxu0 %v2964
  %3411 = vmatpush.bf16.msra.mxu0 %v2959
  %3412 = vmatpush.bf16.msra.mxu0 %v2954
  %3413 = vmatpush.bf16.msra.mxu0 %v2949
  %3414 = vmatpush.bf16.msra.mxu0 %v2944
  %3415 = vmatpush.bf16.msra.mxu0 %v2939
  %3416 = vmatmul.bf16.gmra.mxu0 %v1777
  %v3417 = vpop.f32.mrf.mxu0
  %v3418 = vadd.f32 %v3389, %v3417
  %v3419 = vpop.f32.mrf.mxu0
  %v3420 = vadd.f32 %v3391, %v3419
  %3421 = vmatmul.bf16.gmra.mxu0 %v1837
  %v3422 = vpop.f32.mrf.mxu0
  %v3423 = vadd.f32 %v3394, %v3422
  %v3424 = vpop.f32.mrf.mxu0
  %v3425 = vadd.f32 %v3396, %v3424
  %3426 = vmatmul.bf16.gmra.mxu0 %v1893
  %v3427 = vpop.f32.mrf.mxu0
  %v3428 = vadd.f32 %v3399, %v3427
  %v3429 = vpop.f32.mrf.mxu0
  %v3430 = vadd.f32 %v3401, %v3429
  %3431 = vmatmul.bf16.gmra.mxu0 %v1919
  %v3432 = vpop.f32.mrf.mxu0
  %v3433 = vadd.f32 %v3404, %v3432
  %v3434 = vpop.f32.mrf.mxu0
  %v3435 = vadd.f32 %v3406, %v3434
  %3436 = vdwg.mxu0
  %3437 = vmatpush.bf16.msra.mxu0 0
  %3438 = vmatpush.bf16.msra.mxu0 0
  %3439 = vmatpush.bf16.msra.mxu0 0
  %3440 = vmatpush.bf16.msra.mxu0 0
  %3441 = vmatpush.bf16.msra.mxu0 0
  %3442 = vmatpush.bf16.msra.mxu0 0
  %3443 = vmatpush.bf16.msra.mxu0 %v3249
  %3444 = vmatpush.bf16.msra.mxu0 %v2979
  %3445 = vmatmul.bf16.gmra.mxu0 %v3236
  %v3446 = vpop.f32.mrf.mxu0
  %v3447 = vadd.f32 %v3418, %v3446
  %v3448 = vpop.f32.mrf.mxu0
  %v3449 = vadd.f32 %v3420, %v3448
  %3450 = vmatmul.bf16.gmra.mxu0 %v3239
  %v3451 = vpop.f32.mrf.mxu0
  %v3452 = vadd.f32 %v3423, %v3451
  %v3453 = vpop.f32.mrf.mxu0
  %v3454 = vadd.f32 %v3425, %v3453
  %3455 = vmatmul.bf16.gmra.mxu0 %v3242
  %v3456 = vpop.f32.mrf.mxu0
  %v3457 = vadd.f32 %v3428, %v3456
  %v3458 = vpop.f32.mrf.mxu0
  %v3459 = vadd.f32 %v3430, %v3458
  %3460 = vmatmul.bf16.gmra.mxu0 %v3245
  %v3461 = vpop.f32.mrf.mxu0
  %v3462 = vadd.f32 %v3433, %v3461
  %v3463 = vpop.f32.mrf.mxu0
  %v3464 = vadd.f32 %v3435, %v3463
  %3465 = vdwg.mxu0
  %3466 = vmatpush.bf16.msra.mxu0 %v2775
  %3467 = vmatpush.bf16.msra.mxu0 %v2770
  %3468 = vmatpush.bf16.msra.mxu0 %v2765
  %3469 = vmatpush.bf16.msra.mxu0 %v2760
  %3470 = vmatpush.bf16.msra.mxu0 %v2755
  %3471 = vmatpush.bf16.msra.mxu0 %v2750
  %3472 = vmatpush.bf16.msra.mxu0 %v2745
  %3473 = vmatpush.bf16.msra.mxu0 %v2740
  %3474 = vmatmul.bf16.gmra.mxu0 %v1717
  %v3475 = vpop.f32.mrf.mxu0
  %v3476 = vadd.f32 %v1697, %v3475
  %v3477 = vpop.f32.mrf.mxu0
  %v3478 = vadd.f32 %v1697, %v3477
  %3479 = vmatmul.bf16.gmra.mxu0 %v1797
  %v3480 = vpop.f32.mrf.mxu0
  %v3481 = vadd.f32 %v1697, %v3480
  %v3482 = vpop.f32.mrf.mxu0
  %v3483 = vadd.f32 %v1697, %v3482
  %3484 = vmatmul.bf16.gmra.mxu0 %v1853
  %v3485 = vpop.f32.mrf.mxu0
  %v3486 = vadd.f32 %v1697, %v3485
  %v3487 = vpop.f32.mrf.mxu0
  %v3488 = vadd.f32 %v1697, %v3487
  %3489 = vmatmul.bf16.gmra.mxu0 %v1904
  %v3490 = vpop.f32.mrf.mxu0
  %v3491 = vadd.f32 %v1697, %v3490
  %v3492 = vpop.f32.mrf.mxu0
  %v3493 = vadd.f32 %v1697, %v3492
  %3494 = vdwg.mxu0
  %3495 = vmatpush.bf16.msra.mxu0 %v2815
  %3496 = vmatpush.bf16.msra.mxu0 %v2810
  %3497 = vmatpush.bf16.msra.mxu0 %v2805
  %3498 = vmatpush.bf16.msra.mxu0 %v2800
  %3499 = vmatpush.bf16.msra.mxu0 %v2795
  %3500 = vmatpush.bf16.msra.mxu0 %v2790
  %3501 = vmatpush.bf16.msra.mxu0 %v2785
  %3502 = vmatpush.bf16.msra.mxu0 %v2780
  %3503 = vmatmul.bf16.gmra.mxu0 %v1729
  %v3504 = vpop.f32.mrf.mxu0
  %v3505 = vadd.f32 %v3476, %v3504
  %v3506 = vpop.f32.mrf.mxu0
  %v3507 = vadd.f32 %v3478, %v3506
  %3508 = vmatmul.bf16.gmra.mxu0 %v1805
  %v3509 = vpop.f32.mrf.mxu0
  %v3510 = vadd.f32 %v3481, %v3509
  %v3511 = vpop.f32.mrf.mxu0
  %v3512 = vadd.f32 %v3483, %v3511
  %3513 = vmatmul.bf16.gmra.mxu0 %v1861
  %v3514 = vpop.f32.mrf.mxu0
  %v3515 = vadd.f32 %v3486, %v3514
  %v3516 = vpop.f32.mrf.mxu0
  %v3517 = vadd.f32 %v3488, %v3516
  %3518 = vmatmul.bf16.gmra.mxu0 %v1907
  %v3519 = vpop.f32.mrf.mxu0
  %v3520 = vadd.f32 %v3491, %v3519
  %v3521 = vpop.f32.mrf.mxu0
  %v3522 = vadd.f32 %v3493, %v3521
  %3523 = vdwg.mxu0
  %3524 = vmatpush.bf16.msra.mxu0 %v2855
  %3525 = vmatpush.bf16.msra.mxu0 %v2850
  %3526 = vmatpush.bf16.msra.mxu0 %v2845
  %3527 = vmatpush.bf16.msra.mxu0 %v2840
  %3528 = vmatpush.bf16.msra.mxu0 %v2835
  %3529 = vmatpush.bf16.msra.mxu0 %v2830
  %3530 = vmatpush.bf16.msra.mxu0 %v2825
  %3531 = vmatpush.bf16.msra.mxu0 %v2820
  %3532 = vmatmul.bf16.gmra.mxu0 %v1741
  %v3533 = vpop.f32.mrf.mxu0
  %v3534 = vadd.f32 %v3505, %v3533
  %v3535 = vpop.f32.mrf.mxu0
  %v3536 = vadd.f32 %v3507, %v3535
  %3537 = vmatmul.bf16.gmra.mxu0 %v1813
  %v3538 = vpop.f32.mrf.mxu0
  %v3539 = vadd.f32 %v3510, %v3538
  %v3540 = vpop.f32.mrf.mxu0
  %v3541 = vadd.f32 %v3512, %v3540
  %3542 = vmatmul.bf16.gmra.mxu0 %v1869
  %v3543 = vpop.f32.mrf.mxu0
  %v3544 = vadd.f32 %v3515, %v3543
  %v3545 = vpop.f32.mrf.mxu0
  %v3546 = vadd.f32 %v3517, %v3545
  %3547 = vmatmul.bf16.gmra.mxu0 %v1910
  %v3548 = vpop.f32.mrf.mxu0
  %v3549 = vadd.f32 %v3520, %v3548
  %v3550 = vpop.f32.mrf.mxu0
  %v3551 = vadd.f32 %v3522, %v3550
  %3552 = vdwg.mxu0
  %3553 = vmatpush.bf16.msra.mxu0 %v2895
  %3554 = vmatpush.bf16.msra.mxu0 %v2890
  %3555 = vmatpush.bf16.msra.mxu0 %v2885
  %3556 = vmatpush.bf16.msra.mxu0 %v2880
  %3557 = vmatpush.bf16.msra.mxu0 %v2875
  %3558 = vmatpush.bf16.msra.mxu0 %v2870
  %3559 = vmatpush.bf16.msra.mxu0 %v2865
  %3560 = vmatpush.bf16.msra.mxu0 %v2860
  %3561 = vmatmul.bf16.gmra.mxu0 %v1753
  %v3562 = vpop.f32.mrf.mxu0
  %v3563 = vadd.f32 %v3534, %v3562
  %v3564 = vpop.f32.mrf.mxu0
  %v3565 = vadd.f32 %v3536, %v3564
  %3566 = vmatmul.bf16.gmra.mxu0 %v1821
  %v3567 = vpop.f32.mrf.mxu0
  %v3568 = vadd.f32 %v3539, %v3567
  %v3569 = vpop.f32.mrf.mxu0
  %v3570 = vadd.f32 %v3541, %v3569
  %3571 = vmatmul.bf16.gmra.mxu0 %v1877
  %v3572 = vpop.f32.mrf.mxu0
  %v3573 = vadd.f32 %v3544, %v3572
  %v3574 = vpop.f32.mrf.mxu0
  %v3575 = vadd.f32 %v3546, %v3574
  %3576 = vmatmul.bf16.gmra.mxu0 %v1913
  %v3577 = vpop.f32.mrf.mxu0
  %v3578 = vadd.f32 %v3549, %v3577
  %v3579 = vpop.f32.mrf.mxu0
  %v3580 = vadd.f32 %v3551, %v3579
  %3581 = vdwg.mxu0
  %3582 = vmatpush.bf16.msra.mxu0 %v2935
  %3583 = vmatpush.bf16.msra.mxu0 %v2930
  %3584 = vmatpush.bf16.msra.mxu0 %v2925
  %3585 = vmatpush.bf16.msra.mxu0 %v2920
  %3586 = vmatpush.bf16.msra.mxu0 %v2915
  %3587 = vmatpush.bf16.msra.mxu0 %v2910
  %3588 = vmatpush.bf16.msra.mxu0 %v2905
  %3589 = vmatpush.bf16.msra.mxu0 %v2900
  %3590 = vmatmul.bf16.gmra.mxu0 %v1765
  %v3591 = vpop.f32.mrf.mxu0
  %v3592 = vadd.f32 %v3563, %v3591
  %v3593 = vpop.f32.mrf.mxu0
  %v3594 = vadd.f32 %v3565, %v3593
  %3595 = vmatmul.bf16.gmra.mxu0 %v1829
  %v3596 = vpop.f32.mrf.mxu0
  %v3597 = vadd.f32 %v3568, %v3596
  %v3598 = vpop.f32.mrf.mxu0
  %v3599 = vadd.f32 %v3570, %v3598
  %3600 = vmatmul.bf16.gmra.mxu0 %v1885
  %v3601 = vpop.f32.mrf.mxu0
  %v3602 = vadd.f32 %v3573, %v3601
  %v3603 = vpop.f32.mrf.mxu0
  %v3604 = vadd.f32 %v3575, %v3603
  %3605 = vmatmul.bf16.gmra.mxu0 %v1916
  %v3606 = vpop.f32.mrf.mxu0
  %v3607 = vadd.f32 %v3578, %v3606
  %v3608 = vpop.f32.mrf.mxu0
  %v3609 = vadd.f32 %v3580, %v3608
  %3610 = vdwg.mxu0
  %3611 = vmatpush.bf16.msra.mxu0 %v2975
  %3612 = vmatpush.bf16.msra.mxu0 %v2970
  %3613 = vmatpush.bf16.msra.mxu0 %v2965
  %3614 = vmatpush.bf16.msra.mxu0 %v2960
  %3615 = vmatpush.bf16.msra.mxu0 %v2955
  %3616 = vmatpush.bf16.msra.mxu0 %v2950
  %3617 = vmatpush.bf16.msra.mxu0 %v2945
  %3618 = vmatpush.bf16.msra.mxu0 %v2940
  %3619 = vmatmul.bf16.gmra.mxu0 %v1777
  %v3620 = vpop.f32.mrf.mxu0
  %v3621 = vadd.f32 %v3592, %v3620
  %v3622 = vpop.f32.mrf.mxu0
  %v3623 = vadd.f32 %v3594, %v3622
  %3624 = vmatmul.bf16.gmra.mxu0 %v1837
  %v3625 = vpop.f32.mrf.mxu0
  %v3626 = vadd.f32 %v3597, %v3625
  %v3627 = vpop.f32.mrf.mxu0
  %v3628 = vadd.f32 %v3599, %v3627
  %3629 = vmatmul.bf16.gmra.mxu0 %v1893
  %v3630 = vpop.f32.mrf.mxu0
  %v3631 = vadd.f32 %v3602, %v3630
  %v3632 = vpop.f32.mrf.mxu0
  %v3633 = vadd.f32 %v3604, %v3632
  %3634 = vmatmul.bf16.gmra.mxu0 %v1919
  %v3635 = vpop.f32.mrf.mxu0
  %v3636 = vadd.f32 %v3607, %v3635
  %v3637 = vpop.f32.mrf.mxu0
  %v3638 = vadd.f32 %v3609, %v3637
  %3639 = vdwg.mxu0
  %3640 = vmatpush.bf16.msra.mxu0 0
  %3641 = vmatpush.bf16.msra.mxu0 0
  %3642 = vmatpush.bf16.msra.mxu0 0
  %3643 = vmatpush.bf16.msra.mxu0 0
  %3644 = vmatpush.bf16.msra.mxu0 0
  %3645 = vmatpush.bf16.msra.mxu0 0
  %3646 = vmatpush.bf16.msra.mxu0 %v3252
  %3647 = vmatpush.bf16.msra.mxu0 %v2980
  %3648 = vmatmul.bf16.gmra.mxu0 %v3236
  %v3649 = vpop.f32.mrf.mxu0
  %v3650 = vadd.f32 %v3621, %v3649
  %v3651 = vpop.f32.mrf.mxu0
  %v3652 = vadd.f32 %v3623, %v3651
  %3653 = vmatmul.bf16.gmra.mxu0 %v3239
  %v3654 = vpop.f32.mrf.mxu0
  %v3655 = vadd.f32 %v3626, %v3654
  %v3656 = vpop.f32.mrf.mxu0
  %v3657 = vadd.f32 %v3628, %v3656
  %3658 = vmatmul.bf16.gmra.mxu0 %v3242
  %v3659 = vpop.f32.mrf.mxu0
  %v3660 = vadd.f32 %v3631, %v3659
  %v3661 = vpop.f32.mrf.mxu0
  %v3662 = vadd.f32 %v3633, %v3661
  %3663 = vmatmul.bf16.gmra.mxu0 %v3245
  %v3664 = vpop.f32.mrf.mxu0
  %v3665 = vadd.f32 %v3636, %v3664
  %v3666 = vpop.f32.mrf.mxu0
  %v3667 = vadd.f32 %v3638, %v3666
  %3668 = vdwg.mxu0
  %3669 = vmatpush.bf16.msra.mxu0 %v2776
  %3670 = vmatpush.bf16.msra.mxu0 %v2771
  %3671 = vmatpush.bf16.msra.mxu0 %v2766
  %3672 = vmatpush.bf16.msra.mxu0 %v2761
  %3673 = vmatpush.bf16.msra.mxu0 %v2756
  %3674 = vmatpush.bf16.msra.mxu0 %v2751
  %3675 = vmatpush.bf16.msra.mxu0 %v2746
  %3676 = vmatpush.bf16.msra.mxu0 %v2741
  %3677 = vmatmul.bf16.gmra.mxu0 %v1717
  %v3678 = vpop.f32.mrf.mxu0
  %v3679 = vadd.f32 %v1698, %v3678
  %v3680 = vpop.f32.mrf.mxu0
  %v3681 = vadd.f32 %v1698, %v3680
  %3682 = vmatmul.bf16.gmra.mxu0 %v1797
  %v3683 = vpop.f32.mrf.mxu0
  %v3684 = vadd.f32 %v1698, %v3683
  %v3685 = vpop.f32.mrf.mxu0
  %v3686 = vadd.f32 %v1698, %v3685
  %3687 = vmatmul.bf16.gmra.mxu0 %v1853
  %v3688 = vpop.f32.mrf.mxu0
  %v3689 = vadd.f32 %v1698, %v3688
  %v3690 = vpop.f32.mrf.mxu0
  %v3691 = vadd.f32 %v1698, %v3690
  %3692 = vmatmul.bf16.gmra.mxu0 %v1904
  %v3693 = vpop.f32.mrf.mxu0
  %v3694 = vadd.f32 %v1698, %v3693
  %v3695 = vpop.f32.mrf.mxu0
  %v3696 = vadd.f32 %v1698, %v3695
  %3697 = vdwg.mxu0
  %3698 = vmatpush.bf16.msra.mxu0 %v2816
  %3699 = vmatpush.bf16.msra.mxu0 %v2811
  %3700 = vmatpush.bf16.msra.mxu0 %v2806
  %3701 = vmatpush.bf16.msra.mxu0 %v2801
  %3702 = vmatpush.bf16.msra.mxu0 %v2796
  %3703 = vmatpush.bf16.msra.mxu0 %v2791
  %3704 = vmatpush.bf16.msra.mxu0 %v2786
  %3705 = vmatpush.bf16.msra.mxu0 %v2781
  %3706 = vmatmul.bf16.gmra.mxu0 %v1729
  %v3707 = vpop.f32.mrf.mxu0
  %v3708 = vadd.f32 %v3679, %v3707
  %v3709 = vpop.f32.mrf.mxu0
  %v3710 = vadd.f32 %v3681, %v3709
  %3711 = vmatmul.bf16.gmra.mxu0 %v1805
  %v3712 = vpop.f32.mrf.mxu0
  %v3713 = vadd.f32 %v3684, %v3712
  %v3714 = vpop.f32.mrf.mxu0
  %v3715 = vadd.f32 %v3686, %v3714
  %3716 = vmatmul.bf16.gmra.mxu0 %v1861
  %v3717 = vpop.f32.mrf.mxu0
  %v3718 = vadd.f32 %v3689, %v3717
  %v3719 = vpop.f32.mrf.mxu0
  %v3720 = vadd.f32 %v3691, %v3719
  %3721 = vmatmul.bf16.gmra.mxu0 %v1907
  %v3722 = vpop.f32.mrf.mxu0
  %v3723 = vadd.f32 %v3694, %v3722
  %v3724 = vpop.f32.mrf.mxu0
  %v3725 = vadd.f32 %v3696, %v3724
  %3726 = vdwg.mxu0
  %3727 = vmatpush.bf16.msra.mxu0 %v2856
  %3728 = vmatpush.bf16.msra.mxu0 %v2851
  %3729 = vmatpush.bf16.msra.mxu0 %v2846
  %3730 = vmatpush.bf16.msra.mxu0 %v2841
  %3731 = vmatpush.bf16.msra.mxu0 %v2836
  %3732 = vmatpush.bf16.msra.mxu0 %v2831
  %3733 = vmatpush.bf16.msra.mxu0 %v2826
  %3734 = vmatpush.bf16.msra.mxu0 %v2821
  %3735 = vmatmul.bf16.gmra.mxu0 %v1741
  %v3736 = vpop.f32.mrf.mxu0
  %v3737 = vadd.f32 %v3708, %v3736
  %v3738 = vpop.f32.mrf.mxu0
  %v3739 = vadd.f32 %v3710, %v3738
  %3740 = vmatmul.bf16.gmra.mxu0 %v1813
  %v3741 = vpop.f32.mrf.mxu0
  %v3742 = vadd.f32 %v3713, %v3741
  %v3743 = vpop.f32.mrf.mxu0
  %v3744 = vadd.f32 %v3715, %v3743
  %3745 = vmatmul.bf16.gmra.mxu0 %v1869
  %v3746 = vpop.f32.mrf.mxu0
  %v3747 = vadd.f32 %v3718, %v3746
  %v3748 = vpop.f32.mrf.mxu0
  %v3749 = vadd.f32 %v3720, %v3748
  %3750 = vmatmul.bf16.gmra.mxu0 %v1910
  %v3751 = vpop.f32.mrf.mxu0
  %v3752 = vadd.f32 %v3723, %v3751
  %v3753 = vpop.f32.mrf.mxu0
  %v3754 = vadd.f32 %v3725, %v3753
  %3755 = vdwg.mxu0
  %3756 = vmatpush.bf16.msra.mxu0 %v2896
  %3757 = vmatpush.bf16.msra.mxu0 %v2891
  %3758 = vmatpush.bf16.msra.mxu0 %v2886
  %3759 = vmatpush.bf16.msra.mxu0 %v2881
  %3760 = vmatpush.bf16.msra.mxu0 %v2876
  %3761 = vmatpush.bf16.msra.mxu0 %v2871
  %3762 = vmatpush.bf16.msra.mxu0 %v2866
  %3763 = vmatpush.bf16.msra.mxu0 %v2861
  %3764 = vmatmul.bf16.gmra.mxu0 %v1753
  %v3765 = vpop.f32.mrf.mxu0
  %v3766 = vadd.f32 %v3737, %v3765
  %v3767 = vpop.f32.mrf.mxu0
  %v3768 = vadd.f32 %v3739, %v3767
  %3769 = vmatmul.bf16.gmra.mxu0 %v1821
  %v3770 = vpop.f32.mrf.mxu0
  %v3771 = vadd.f32 %v3742, %v3770
  %v3772 = vpop.f32.mrf.mxu0
  %v3773 = vadd.f32 %v3744, %v3772
  %3774 = vmatmul.bf16.gmra.mxu0 %v1877
  %v3775 = vpop.f32.mrf.mxu0
  %v3776 = vadd.f32 %v3747, %v3775
  %v3777 = vpop.f32.mrf.mxu0
  %v3778 = vadd.f32 %v3749, %v3777
  %3779 = vmatmul.bf16.gmra.mxu0 %v1913
  %v3780 = vpop.f32.mrf.mxu0
  %v3781 = vadd.f32 %v3752, %v3780
  %v3782 = vpop.f32.mrf.mxu0
  %v3783 = vadd.f32 %v3754, %v3782
  %3784 = vdwg.mxu0
  %3785 = vmatpush.bf16.msra.mxu0 %v2936
  %3786 = vmatpush.bf16.msra.mxu0 %v2931
  %3787 = vmatpush.bf16.msra.mxu0 %v2926
  %3788 = vmatpush.bf16.msra.mxu0 %v2921
  %3789 = vmatpush.bf16.msra.mxu0 %v2916
  %3790 = vmatpush.bf16.msra.mxu0 %v2911
  %3791 = vmatpush.bf16.msra.mxu0 %v2906
  %3792 = vmatpush.bf16.msra.mxu0 %v2901
  %3793 = vmatmul.bf16.gmra.mxu0 %v1765
  %v3794 = vpop.f32.mrf.mxu0
  %v3795 = vadd.f32 %v3766, %v3794
  %v3796 = vpop.f32.mrf.mxu0
  %v3797 = vadd.f32 %v3768, %v3796
  %3798 = vmatmul.bf16.gmra.mxu0 %v1829
  %v3799 = vpop.f32.mrf.mxu0
  %v3800 = vadd.f32 %v3771, %v3799
  %v3801 = vpop.f32.mrf.mxu0
  %v3802 = vadd.f32 %v3773, %v3801
  %3803 = vmatmul.bf16.gmra.mxu0 %v1885
  %v3804 = vpop.f32.mrf.mxu0
  %v3805 = vadd.f32 %v3776, %v3804
  %v3806 = vpop.f32.mrf.mxu0
  %v3807 = vadd.f32 %v3778, %v3806
  %3808 = vmatmul.bf16.gmra.mxu0 %v1916
  %v3809 = vpop.f32.mrf.mxu0
  %v3810 = vadd.f32 %v3781, %v3809
  %v3811 = vpop.f32.mrf.mxu0
  %v3812 = vadd.f32 %v3783, %v3811
  %3813 = vdwg.mxu0
  %3814 = vmatpush.bf16.msra.mxu0 %v2976
  %3815 = vmatpush.bf16.msra.mxu0 %v2971
  %3816 = vmatpush.bf16.msra.mxu0 %v2966
  %3817 = vmatpush.bf16.msra.mxu0 %v2961
  %3818 = vmatpush.bf16.msra.mxu0 %v2956
  %3819 = vmatpush.bf16.msra.mxu0 %v2951
  %3820 = vmatpush.bf16.msra.mxu0 %v2946
  %3821 = vmatpush.bf16.msra.mxu0 %v2941
  %3822 = vmatmul.bf16.gmra.mxu0 %v1777
  %v3823 = vpop.f32.mrf.mxu0
  %v3824 = vadd.f32 %v3795, %v3823
  %v3825 = vpop.f32.mrf.mxu0
  %v3826 = vadd.f32 %v3797, %v3825
  %3827 = vmatmul.bf16.gmra.mxu0 %v1837
  %v3828 = vpop.f32.mrf.mxu0
  %v3829 = vadd.f32 %v3800, %v3828
  %v3830 = vpop.f32.mrf.mxu0
  %v3831 = vadd.f32 %v3802, %v3830
  %3832 = vmatmul.bf16.gmra.mxu0 %v1893
  %v3833 = vpop.f32.mrf.mxu0
  %v3834 = vadd.f32 %v3805, %v3833
  %v3835 = vpop.f32.mrf.mxu0
  %v3836 = vadd.f32 %v3807, %v3835
  %3837 = vmatmul.bf16.gmra.mxu0 %v1919
  %v3838 = vpop.f32.mrf.mxu0
  %v3839 = vadd.f32 %v3810, %v3838
  %v3840 = vpop.f32.mrf.mxu0
  %v3841 = vadd.f32 %v3812, %v3840
  %3842 = vdwg.mxu0
  %3843 = vmatpush.bf16.msra.mxu0 0
  %3844 = vmatpush.bf16.msra.mxu0 0
  %3845 = vmatpush.bf16.msra.mxu0 0
  %3846 = vmatpush.bf16.msra.mxu0 0
  %3847 = vmatpush.bf16.msra.mxu0 0
  %3848 = vmatpush.bf16.msra.mxu0 0
  %3849 = vmatpush.bf16.msra.mxu0 %v3255
  %3850 = vmatpush.bf16.msra.mxu0 %v2981
  %3851 = vmatmul.bf16.gmra.mxu0 %v3236
  %v3852 = vpop.f32.mrf.mxu0
  %v3853 = vadd.f32 %v3824, %v3852
  %v3854 = vpop.f32.mrf.mxu0
  %v3855 = vadd.f32 %v3826, %v3854
  %3856 = vmatmul.bf16.gmra.mxu0 %v3239
  %v3857 = vpop.f32.mrf.mxu0
  %v3858 = vadd.f32 %v3829, %v3857
  %v3859 = vpop.f32.mrf.mxu0
  %v3860 = vadd.f32 %v3831, %v3859
  %3861 = vmatmul.bf16.gmra.mxu0 %v3242
  %v3862 = vpop.f32.mrf.mxu0
  %v3863 = vadd.f32 %v3834, %v3862
  %v3864 = vpop.f32.mrf.mxu0
  %v3865 = vadd.f32 %v3836, %v3864
  %3866 = vmatmul.bf16.gmra.mxu0 %v3245
  %v3867 = vpop.f32.mrf.mxu0
  %v3868 = vadd.f32 %v3839, %v3867
  %v3869 = vpop.f32.mrf.mxu0
  %v3870 = vadd.f32 %v3841, %v3869
  %3871 = vdwg.mxu0
  %3872 = vmatpush.bf16.msra.mxu0 %v2777
  %3873 = vmatpush.bf16.msra.mxu0 %v2772
  %3874 = vmatpush.bf16.msra.mxu0 %v2767
  %3875 = vmatpush.bf16.msra.mxu0 %v2762
  %3876 = vmatpush.bf16.msra.mxu0 %v2757
  %3877 = vmatpush.bf16.msra.mxu0 %v2752
  %3878 = vmatpush.bf16.msra.mxu0 %v2747
  %3879 = vmatpush.bf16.msra.mxu0 %v2742
  %3880 = vmatmul.bf16.gmra.mxu0 %v1717
  %v3881 = vpop.f32.mrf.mxu0
  %v3882 = vadd.f32 %v1699, %v3881
  %v3883 = vpop.f32.mrf.mxu0
  %v3884 = vadd.f32 %v1699, %v3883
  %3885 = vmatmul.bf16.gmra.mxu0 %v1797
  %v3886 = vpop.f32.mrf.mxu0
  %v3887 = vadd.f32 %v1699, %v3886
  %v3888 = vpop.f32.mrf.mxu0
  %v3889 = vadd.f32 %v1699, %v3888
  %3890 = vmatmul.bf16.gmra.mxu0 %v1853
  %v3891 = vpop.f32.mrf.mxu0
  %v3892 = vadd.f32 %v1699, %v3891
  %v3893 = vpop.f32.mrf.mxu0
  %v3894 = vadd.f32 %v1699, %v3893
  %3895 = vmatmul.bf16.gmra.mxu0 %v1904
  %v3896 = vpop.f32.mrf.mxu0
  %v3897 = vadd.f32 %v1699, %v3896
  %v3898 = vpop.f32.mrf.mxu0
  %v3899 = vadd.f32 %v1699, %v3898
  %3900 = vdwg.mxu0
  %3901 = vmatpush.bf16.msra.mxu0 %v2817
  %3902 = vmatpush.bf16.msra.mxu0 %v2812
  %3903 = vmatpush.bf16.msra.mxu0 %v2807
  %3904 = vmatpush.bf16.msra.mxu0 %v2802
  %3905 = vmatpush.bf16.msra.mxu0 %v2797
  %3906 = vmatpush.bf16.msra.mxu0 %v2792
  %3907 = vmatpush.bf16.msra.mxu0 %v2787
  %3908 = vmatpush.bf16.msra.mxu0 %v2782
  %3909 = vmatmul.bf16.gmra.mxu0 %v1729
  %v3910 = vpop.f32.mrf.mxu0
  %v3911 = vadd.f32 %v3882, %v3910
  %v3912 = vpop.f32.mrf.mxu0
  %v3913 = vadd.f32 %v3884, %v3912
  %3914 = vmatmul.bf16.gmra.mxu0 %v1805
  %v3915 = vpop.f32.mrf.mxu0
  %v3916 = vadd.f32 %v3887, %v3915
  %v3917 = vpop.f32.mrf.mxu0
  %v3918 = vadd.f32 %v3889, %v3917
  %3919 = vmatmul.bf16.gmra.mxu0 %v1861
  %v3920 = vpop.f32.mrf.mxu0
  %v3921 = vadd.f32 %v3892, %v3920
  %v3922 = vpop.f32.mrf.mxu0
  %v3923 = vadd.f32 %v3894, %v3922
  %3924 = vmatmul.bf16.gmra.mxu0 %v1907
  %v3925 = vpop.f32.mrf.mxu0
  %v3926 = vadd.f32 %v3897, %v3925
  %v3927 = vpop.f32.mrf.mxu0
  %v3928 = vadd.f32 %v3899, %v3927
  %3929 = vdwg.mxu0
  %3930 = vmatpush.bf16.msra.mxu0 %v2857
  %3931 = vmatpush.bf16.msra.mxu0 %v2852
  %3932 = vmatpush.bf16.msra.mxu0 %v2847
  %3933 = vmatpush.bf16.msra.mxu0 %v2842
  %3934 = vmatpush.bf16.msra.mxu0 %v2837
  %3935 = vmatpush.bf16.msra.mxu0 %v2832
  %3936 = vmatpush.bf16.msra.mxu0 %v2827
  %3937 = vmatpush.bf16.msra.mxu0 %v2822
  %3938 = vmatmul.bf16.gmra.mxu0 %v1741
  %v3939 = vpop.f32.mrf.mxu0
  %v3940 = vadd.f32 %v3911, %v3939
  %v3941 = vpop.f32.mrf.mxu0
  %v3942 = vadd.f32 %v3913, %v3941
  %3943 = vmatmul.bf16.gmra.mxu0 %v1813
  %v3944 = vpop.f32.mrf.mxu0
  %v3945 = vadd.f32 %v3916, %v3944
  %v3946 = vpop.f32.mrf.mxu0
  %v3947 = vadd.f32 %v3918, %v3946
  %3948 = vmatmul.bf16.gmra.mxu0 %v1869
  %v3949 = vpop.f32.mrf.mxu0
  %v3950 = vadd.f32 %v3921, %v3949
  %v3951 = vpop.f32.mrf.mxu0
  %v3952 = vadd.f32 %v3923, %v3951
  %3953 = vmatmul.bf16.gmra.mxu0 %v1910
  %v3954 = vpop.f32.mrf.mxu0
  %v3955 = vadd.f32 %v3926, %v3954
  %v3956 = vpop.f32.mrf.mxu0
  %v3957 = vadd.f32 %v3928, %v3956
  %3958 = vdwg.mxu0
  %3959 = vmatpush.bf16.msra.mxu0 %v2897
  %3960 = vmatpush.bf16.msra.mxu0 %v2892
  %3961 = vmatpush.bf16.msra.mxu0 %v2887
  %3962 = vmatpush.bf16.msra.mxu0 %v2882
  %3963 = vmatpush.bf16.msra.mxu0 %v2877
  %3964 = vmatpush.bf16.msra.mxu0 %v2872
  %3965 = vmatpush.bf16.msra.mxu0 %v2867
  %3966 = vmatpush.bf16.msra.mxu0 %v2862
  %3967 = vmatmul.bf16.gmra.mxu0 %v1753
  %v3968 = vpop.f32.mrf.mxu0
  %v3969 = vadd.f32 %v3940, %v3968
  %v3970 = vpop.f32.mrf.mxu0
  %v3971 = vadd.f32 %v3942, %v3970
  %3972 = vmatmul.bf16.gmra.mxu0 %v1821
  %v3973 = vpop.f32.mrf.mxu0
  %v3974 = vadd.f32 %v3945, %v3973
  %v3975 = vpop.f32.mrf.mxu0
  %v3976 = vadd.f32 %v3947, %v3975
  %3977 = vmatmul.bf16.gmra.mxu0 %v1877
  %v3978 = vpop.f32.mrf.mxu0
  %v3979 = vadd.f32 %v3950, %v3978
  %v3980 = vpop.f32.mrf.mxu0
  %v3981 = vadd.f32 %v3952, %v3980
  %3982 = vmatmul.bf16.gmra.mxu0 %v1913
  %v3983 = vpop.f32.mrf.mxu0
  %v3984 = vadd.f32 %v3955, %v3983
  %v3985 = vpop.f32.mrf.mxu0
  %v3986 = vadd.f32 %v3957, %v3985
  %3987 = vdwg.mxu0
  %3988 = vmatpush.bf16.msra.mxu0 %v2937
  %3989 = vmatpush.bf16.msra.mxu0 %v2932
  %3990 = vmatpush.bf16.msra.mxu0 %v2927
  %3991 = vmatpush.bf16.msra.mxu0 %v2922
  %3992 = vmatpush.bf16.msra.mxu0 %v2917
  %3993 = vmatpush.bf16.msra.mxu0 %v2912
  %3994 = vmatpush.bf16.msra.mxu0 %v2907
  %3995 = vmatpush.bf16.msra.mxu0 %v2902
  %3996 = vmatmul.bf16.gmra.mxu0 %v1765
  %v3997 = vpop.f32.mrf.mxu0
  %v3998 = vadd.f32 %v3969, %v3997
  %v3999 = vpop.f32.mrf.mxu0
  %v4000 = vadd.f32 %v3971, %v3999
  %4001 = vmatmul.bf16.gmra.mxu0 %v1829
  %v4002 = vpop.f32.mrf.mxu0
  %v4003 = vadd.f32 %v3974, %v4002
  %v4004 = vpop.f32.mrf.mxu0
  %v4005 = vadd.f32 %v3976, %v4004
  %4006 = vmatmul.bf16.gmra.mxu0 %v1885
  %v4007 = vpop.f32.mrf.mxu0
  %v4008 = vadd.f32 %v3979, %v4007
  %v4009 = vpop.f32.mrf.mxu0
  %v4010 = vadd.f32 %v3981, %v4009
  %4011 = vmatmul.bf16.gmra.mxu0 %v1916
  %v4012 = vpop.f32.mrf.mxu0
  %v4013 = vadd.f32 %v3984, %v4012
  %v4014 = vpop.f32.mrf.mxu0
  %v4015 = vadd.f32 %v3986, %v4014
  %4016 = vdwg.mxu0
  %4017 = vmatpush.bf16.msra.mxu0 %v2977
  %4018 = vmatpush.bf16.msra.mxu0 %v2972
  %4019 = vmatpush.bf16.msra.mxu0 %v2967
  %4020 = vmatpush.bf16.msra.mxu0 %v2962
  %4021 = vmatpush.bf16.msra.mxu0 %v2957
  %4022 = vmatpush.bf16.msra.mxu0 %v2952
  %4023 = vmatpush.bf16.msra.mxu0 %v2947
  %4024 = vmatpush.bf16.msra.mxu0 %v2942
  %4025 = vmatmul.bf16.gmra.mxu0 %v1777
  %v4026 = vpop.f32.mrf.mxu0
  %v4027 = vadd.f32 %v3998, %v4026
  %v4028 = vpop.f32.mrf.mxu0
  %v4029 = vadd.f32 %v4000, %v4028
  %4030 = vmatmul.bf16.gmra.mxu0 %v1837
  %v4031 = vpop.f32.mrf.mxu0
  %v4032 = vadd.f32 %v4003, %v4031
  %v4033 = vpop.f32.mrf.mxu0
  %v4034 = vadd.f32 %v4005, %v4033
  %4035 = vmatmul.bf16.gmra.mxu0 %v1893
  %v4036 = vpop.f32.mrf.mxu0
  %v4037 = vadd.f32 %v4008, %v4036
  %v4038 = vpop.f32.mrf.mxu0
  %v4039 = vadd.f32 %v4010, %v4038
  %4040 = vmatmul.bf16.gmra.mxu0 %v1919
  %v4041 = vpop.f32.mrf.mxu0
  %v4042 = vadd.f32 %v4013, %v4041
  %v4043 = vpop.f32.mrf.mxu0
  %v4044 = vadd.f32 %v4015, %v4043
  %4045 = vdwg.mxu0
  %4046 = vmatpush.bf16.msra.mxu0 0
  %4047 = vmatpush.bf16.msra.mxu0 0
  %4048 = vmatpush.bf16.msra.mxu0 0
  %4049 = vmatpush.bf16.msra.mxu0 0
  %4050 = vmatpush.bf16.msra.mxu0 0
  %4051 = vmatpush.bf16.msra.mxu0 0
  %4052 = vmatpush.bf16.msra.mxu0 %v3258
  %4053 = vmatpush.bf16.msra.mxu0 %v2982
  %4054 = vmatmul.bf16.gmra.mxu0 %v3236
  %v4055 = vpop.f32.mrf.mxu0
  %v4056 = vadd.f32 %v4027, %v4055
  %v4057 = vpop.f32.mrf.mxu0
  %v4058 = vadd.f32 %v4029, %v4057
  %4059 = vmatmul.bf16.gmra.mxu0 %v3239
  %v4060 = vpop.f32.mrf.mxu0
  %v4061 = vadd.f32 %v4032, %v4060
  %v4062 = vpop.f32.mrf.mxu0
  %v4063 = vadd.f32 %v4034, %v4062
  %4064 = vmatmul.bf16.gmra.mxu0 %v3242
  %v4065 = vpop.f32.mrf.mxu0
  %v4066 = vadd.f32 %v4037, %v4065
  %v4067 = vpop.f32.mrf.mxu0
  %v4068 = vadd.f32 %v4039, %v4067
  %4069 = vmatmul.bf16.gmra.mxu0 %v3245
  %v4070 = vpop.f32.mrf.mxu0
  %v4071 = vadd.f32 %v4042, %v4070
  %v4072 = vpop.f32.mrf.mxu0
  %v4073 = vadd.f32 %v4044, %v4072
  %4074 = vdwg.mxu0
  %4075 = vmatpush.bf16.msra.mxu0 %v2778
  %4076 = vmatpush.bf16.msra.mxu0 %v2773
  %4077 = vmatpush.bf16.msra.mxu0 %v2768
  %4078 = vmatpush.bf16.msra.mxu0 %v2763
  %4079 = vmatpush.bf16.msra.mxu0 %v2758
  %4080 = vmatpush.bf16.msra.mxu0 %v2753
  %4081 = vmatpush.bf16.msra.mxu0 %v2748
  %4082 = vmatpush.bf16.msra.mxu0 %v2743
  %4083 = vmatmul.bf16.gmra.mxu0 %v1717
  %v4084 = vpop.f32.mrf.mxu0
  %v4085 = vadd.f32 %v1700, %v4084
  %v4086 = vpop.f32.mrf.mxu0
  %v4087 = vadd.f32 %v1700, %v4086
  %4088 = vmatmul.bf16.gmra.mxu0 %v1797
  %v4089 = vpop.f32.mrf.mxu0
  %v4090 = vadd.f32 %v1700, %v4089
  %v4091 = vpop.f32.mrf.mxu0
  %v4092 = vadd.f32 %v1700, %v4091
  %4093 = vmatmul.bf16.gmra.mxu0 %v1853
  %v4094 = vpop.f32.mrf.mxu0
  %v4095 = vadd.f32 %v1700, %v4094
  %v4096 = vpop.f32.mrf.mxu0
  %v4097 = vadd.f32 %v1700, %v4096
  %4098 = vmatmul.bf16.gmra.mxu0 %v1904
  %v4099 = vpop.f32.mrf.mxu0
  %v4100 = vadd.f32 %v1700, %v4099
  %v4101 = vpop.f32.mrf.mxu0
  %v4102 = vadd.f32 %v1700, %v4101
  %4103 = vdwg.mxu0
  %4104 = vmatpush.bf16.msra.mxu0 %v2818
  %4105 = vmatpush.bf16.msra.mxu0 %v2813
  %4106 = vmatpush.bf16.msra.mxu0 %v2808
  %4107 = vmatpush.bf16.msra.mxu0 %v2803
  %4108 = vmatpush.bf16.msra.mxu0 %v2798
  %4109 = vmatpush.bf16.msra.mxu0 %v2793
  %4110 = vmatpush.bf16.msra.mxu0 %v2788
  %4111 = vmatpush.bf16.msra.mxu0 %v2783
  %4112 = vmatmul.bf16.gmra.mxu0 %v1729
  %v4113 = vpop.f32.mrf.mxu0
  %v4114 = vadd.f32 %v4085, %v4113
  %v4115 = vpop.f32.mrf.mxu0
  %v4116 = vadd.f32 %v4087, %v4115
  %4117 = vmatmul.bf16.gmra.mxu0 %v1805
  %v4118 = vpop.f32.mrf.mxu0
  %v4119 = vadd.f32 %v4090, %v4118
  %v4120 = vpop.f32.mrf.mxu0
  %v4121 = vadd.f32 %v4092, %v4120
  %4122 = vmatmul.bf16.gmra.mxu0 %v1861
  %v4123 = vpop.f32.mrf.mxu0
  %v4124 = vadd.f32 %v4095, %v4123
  %v4125 = vpop.f32.mrf.mxu0
  %v4126 = vadd.f32 %v4097, %v4125
  %4127 = vmatmul.bf16.gmra.mxu0 %v1907
  %v4128 = vpop.f32.mrf.mxu0
  %v4129 = vadd.f32 %v4100, %v4128
  %v4130 = vpop.f32.mrf.mxu0
  %v4131 = vadd.f32 %v4102, %v4130
  %4132 = vdwg.mxu0
  %4133 = vmatpush.bf16.msra.mxu0 %v2858
  %4134 = vmatpush.bf16.msra.mxu0 %v2853
  %4135 = vmatpush.bf16.msra.mxu0 %v2848
  %4136 = vmatpush.bf16.msra.mxu0 %v2843
  %4137 = vmatpush.bf16.msra.mxu0 %v2838
  %4138 = vmatpush.bf16.msra.mxu0 %v2833
  %4139 = vmatpush.bf16.msra.mxu0 %v2828
  %4140 = vmatpush.bf16.msra.mxu0 %v2823
  %4141 = vmatmul.bf16.gmra.mxu0 %v1741
  %v4142 = vpop.f32.mrf.mxu0
  %v4143 = vadd.f32 %v4114, %v4142
  %v4144 = vpop.f32.mrf.mxu0
  %v4145 = vadd.f32 %v4116, %v4144
  %4146 = vmatmul.bf16.gmra.mxu0 %v1813
  %v4147 = vpop.f32.mrf.mxu0
  %v4148 = vadd.f32 %v4119, %v4147
  %v4149 = vpop.f32.mrf.mxu0
  %v4150 = vadd.f32 %v4121, %v4149
  %4151 = vmatmul.bf16.gmra.mxu0 %v1869
  %v4152 = vpop.f32.mrf.mxu0
  %v4153 = vadd.f32 %v4124, %v4152
  %v4154 = vpop.f32.mrf.mxu0
  %v4155 = vadd.f32 %v4126, %v4154
  %4156 = vmatmul.bf16.gmra.mxu0 %v1910
  %v4157 = vpop.f32.mrf.mxu0
  %v4158 = vadd.f32 %v4129, %v4157
  %v4159 = vpop.f32.mrf.mxu0
  %v4160 = vadd.f32 %v4131, %v4159
  %4161 = vdwg.mxu0
  %4162 = vmatpush.bf16.msra.mxu0 %v2898
  %4163 = vmatpush.bf16.msra.mxu0 %v2893
  %4164 = vmatpush.bf16.msra.mxu0 %v2888
  %4165 = vmatpush.bf16.msra.mxu0 %v2883
  %4166 = vmatpush.bf16.msra.mxu0 %v2878
  %4167 = vmatpush.bf16.msra.mxu0 %v2873
  %4168 = vmatpush.bf16.msra.mxu0 %v2868
  %4169 = vmatpush.bf16.msra.mxu0 %v2863
  %4170 = vmatmul.bf16.gmra.mxu0 %v1753
  %v4171 = vpop.f32.mrf.mxu0
  %v4172 = vadd.f32 %v4143, %v4171
  %v4173 = vpop.f32.mrf.mxu0
  %v4174 = vadd.f32 %v4145, %v4173
  %4175 = vmatmul.bf16.gmra.mxu0 %v1821
  %v4176 = vpop.f32.mrf.mxu0
  %v4177 = vadd.f32 %v4148, %v4176
  %v4178 = vpop.f32.mrf.mxu0
  %v4179 = vadd.f32 %v4150, %v4178
  %4180 = vmatmul.bf16.gmra.mxu0 %v1877
  %v4181 = vpop.f32.mrf.mxu0
  %v4182 = vadd.f32 %v4153, %v4181
  %v4183 = vpop.f32.mrf.mxu0
  %v4184 = vadd.f32 %v4155, %v4183
  %4185 = vmatmul.bf16.gmra.mxu0 %v1913
  %v4186 = vpop.f32.mrf.mxu0
  %v4187 = vadd.f32 %v4158, %v4186
  %v4188 = vpop.f32.mrf.mxu0
  %v4189 = vadd.f32 %v4160, %v4188
  %4190 = vdwg.mxu0
  %4191 = vmatpush.bf16.msra.mxu0 %v2938
  %4192 = vmatpush.bf16.msra.mxu0 %v2933
  %4193 = vmatpush.bf16.msra.mxu0 %v2928
  %4194 = vmatpush.bf16.msra.mxu0 %v2923
  %4195 = vmatpush.bf16.msra.mxu0 %v2918
  %4196 = vmatpush.bf16.msra.mxu0 %v2913
  %4197 = vmatpush.bf16.msra.mxu0 %v2908
  %4198 = vmatpush.bf16.msra.mxu0 %v2903
  %4199 = vmatmul.bf16.gmra.mxu0 %v1765
  %v4200 = vpop.f32.mrf.mxu0
  %v4201 = vadd.f32 %v4172, %v4200
  %v4202 = vpop.f32.mrf.mxu0
  %v4203 = vadd.f32 %v4174, %v4202
  %4204 = vmatmul.bf16.gmra.mxu0 %v1829
  %v4205 = vpop.f32.mrf.mxu0
  %v4206 = vadd.f32 %v4177, %v4205
  %v4207 = vpop.f32.mrf.mxu0
  %v4208 = vadd.f32 %v4179, %v4207
  %4209 = vmatmul.bf16.gmra.mxu0 %v1885
  %v4210 = vpop.f32.mrf.mxu0
  %v4211 = vadd.f32 %v4182, %v4210
  %v4212 = vpop.f32.mrf.mxu0
  %v4213 = vadd.f32 %v4184, %v4212
  %4214 = vmatmul.bf16.gmra.mxu0 %v1916
  %v4215 = vpop.f32.mrf.mxu0
  %v4216 = vadd.f32 %v4187, %v4215
  %v4217 = vpop.f32.mrf.mxu0
  %v4218 = vadd.f32 %v4189, %v4217
  %4219 = vdwg.mxu0
  %4220 = vmatpush.bf16.msra.mxu0 %v2978
  %4221 = vmatpush.bf16.msra.mxu0 %v2973
  %4222 = vmatpush.bf16.msra.mxu0 %v2968
  %4223 = vmatpush.bf16.msra.mxu0 %v2963
  %4224 = vmatpush.bf16.msra.mxu0 %v2958
  %4225 = vmatpush.bf16.msra.mxu0 %v2953
  %4226 = vmatpush.bf16.msra.mxu0 %v2948
  %4227 = vmatpush.bf16.msra.mxu0 %v2943
  %4228 = vmatmul.bf16.gmra.mxu0 %v1777
  %v4229 = vpop.f32.mrf.mxu0
  %v4230 = vadd.f32 %v4201, %v4229
  %v4231 = vpop.f32.mrf.mxu0
  %v4232 = vadd.f32 %v4203, %v4231
  %4233 = vmatmul.bf16.gmra.mxu0 %v1837
  %v4234 = vpop.f32.mrf.mxu0
  %v4235 = vadd.f32 %v4206, %v4234
  %v4236 = vpop.f32.mrf.mxu0
  %v4237 = vadd.f32 %v4208, %v4236
  %4238 = vmatmul.bf16.gmra.mxu0 %v1893
  %v4239 = vpop.f32.mrf.mxu0
  %v4240 = vadd.f32 %v4211, %v4239
  %v4241 = vpop.f32.mrf.mxu0
  %v4242 = vadd.f32 %v4213, %v4241
  %4243 = vmatmul.bf16.gmra.mxu0 %v1919
  %v4244 = vpop.f32.mrf.mxu0
  %v4245 = vadd.f32 %v4216, %v4244
  %v4246 = vpop.f32.mrf.mxu0
  %v4247 = vadd.f32 %v4218, %v4246
  %4248 = vdwg.mxu0
  %4249 = vmatpush.bf16.msra.mxu0 0
  %4250 = vmatpush.bf16.msra.mxu0 0
  %4251 = vmatpush.bf16.msra.mxu0 0
  %4252 = vmatpush.bf16.msra.mxu0 0
  %4253 = vmatpush.bf16.msra.mxu0 0
  %4254 = vmatpush.bf16.msra.mxu0 0
  %4255 = vmatpush.bf16.msra.mxu0 %v3261
  %4256 = vmatpush.bf16.msra.mxu0 %v2983
  %4257 = vmatmul.bf16.gmra.mxu0 %v3236
  %v4258 = vpop.f32.mrf.mxu0
  %v4259 = vadd.f32 %v4230, %v4258
  %v4260 = vpop.f32.mrf.mxu0
  %v4261 = vadd.f32 %v4232, %v4260
  %4262 = vmatmul.bf16.gmra.mxu0 %v3239
  %v4263 = vpop.f32.mrf.mxu0
  %v4264 = vadd.f32 %v4235, %v4263
  %v4265 = vpop.f32.mrf.mxu0
  %v4266 = vadd.f32 %v4237, %v4265
  %4267 = vmatmul.bf16.gmra.mxu0 %v3242
  %v4268 = vpop.f32.mrf.mxu0
  %v4269 = vadd.f32 %v4240, %v4268
  %v4270 = vpop.f32.mrf.mxu0
  %v4271 = vadd.f32 %v4242, %v4270
  %4272 = vmatmul.bf16.gmra.mxu0 %v3245
  %v4273 = vpop.f32.mrf.mxu0
  %v4274 = vadd.f32 %v4245, %v4273
  %v4275 = vpop.f32.mrf.mxu0
  %v4276 = vadd.f32 %v4247, %v4275
  %4277 = vdwg.mxu0
  %4278 = vst [vmem:[%s10] sm:$0xff] %v3447
  %4279 = vst [vmem:[%s10 + $0x8] sm:$0xff] %v3650
  %4280 = vst [vmem:[%s10 + $0x10] sm:$0xff] %v3853
  %4281 = vst [vmem:[%s10 + $0x18] sm:$0xff] %v4056
  %4282 = vst.msk [vmem:[%s10 + $0x20] sm:$0xff] %vm1312, %v4259
  %4283 = vst [vmem:[%s10 + $0x28] sm:$0xff] %v3449
  %4284 = vst [vmem:[%s10 + $0x30] sm:$0xff] %v3652
  %4285 = vst [vmem:[%s10 + $0x38] sm:$0xff] %v3855
  %4286 = vst [vmem:[%s10 + $0x40] sm:$0xff] %v4058
  %4287 = vst.msk [vmem:[%s10 + $0x48] sm:$0xff] %vm1312, %v4261
  %4288 = vst [vmem:[%s10 + $0x50] sm:$0xff] %v3452
  %4289 = vst [vmem:[%s10 + $0x58] sm:$0xff] %v3655
  %4290 = vst [vmem:[%s10 + $0x60] sm:$0xff] %v3858
  %4291 = vst [vmem:[%s10 + $0x68] sm:$0xff] %v4061
  %4292 = vst.msk [vmem:[%s10 + $0x70] sm:$0xff] %vm1312, %v4264
  %4293 = vst [vmem:[%s10 + $0x78] sm:$0xff] %v3454
  %4294 = vst [vmem:[%s10 + $0x80] sm:$0xff] %v3657
  %4295 = vst [vmem:[%s10 + $0x88] sm:$0xff] %v3860
  %4296 = vst [vmem:[%s10 + $0x90] sm:$0xff] %v4063
  %4297 = vst.msk [vmem:[%s10 + $0x98] sm:$0xff] %vm1312, %v4266
  %4298 = vst [vmem:[%s10 + $0xa0] sm:$0xff] %v3457
  %4299 = vst [vmem:[%s10 + $0xa8] sm:$0xff] %v3660
  %4300 = vst [vmem:[%s10 + $0xb0] sm:$0xff] %v3863
  %4301 = vst [vmem:[%s10 + $0xb8] sm:$0xff] %v4066
  %4302 = vst.msk [vmem:[%s10 + $0xc0] sm:$0xff] %vm1312, %v4269
  %4303 = vst [vmem:[%s10 + $0xc8] sm:$0xff] %v3459
  %4304 = vst [vmem:[%s10 + $0xd0] sm:$0xff] %v3662
  %4305 = vst [vmem:[%s10 + $0xd8] sm:$0xff] %v3865
  %4306 = vst [vmem:[%s10 + $0xe0] sm:$0xff] %v4068
  %4307 = vst.msk [vmem:[%s10 + $0xe8] sm:$0xff] %vm1312, %v4271
  %4308 = vst [vmem:[%s10 + $0xf0] sm:$0xff] %v3462
  %4309 = vst [vmem:[%s10 + $0xf8] sm:$0xff] %v3665
  %4310 = vst [vmem:[%s10 + $0x100] sm:$0xff] %v3868
  %4311 = vst [vmem:[%s10 + $0x108] sm:$0xff] %v4071
  %4312 = vst.msk [vmem:[%s10 + $0x110] sm:$0xff] %vm1312, %v4274
  %4313 = vst [vmem:[%s10 + $0x118] sm:$0x3] %v3464
  %4314 = vst [vmem:[%s10 + $0x120] sm:$0x3] %v3667
  %4315 = vst [vmem:[%s10 + $0x128] sm:$0x3] %v3870
  %4316 = vst [vmem:[%s10 + $0x130] sm:$0x3] %v4073
  %vm4317 = vcmask 123904
  %4318 = vst.msk [vmem:[%s10 + $0x138] sm:$0x3] %vm4317, %v4276
  %vm4319 = vcmp.ge.f32.partialorder %v3447, 0.0
  %vm4320 = vcmp.ge.f32.partialorder %v3650, 0.0
  %vm4321 = vcmp.ge.f32.partialorder %v3853, 0.0
  %vm4322 = vcmp.ge.f32.partialorder %v4056, 0.0
  %vm4323 = vcmp.ge.f32.partialorder %v4259, 0.0
  %vm4324 = vcmp.ge.f32.partialorder %v3449, 0.0
  %vm4325 = vcmp.ge.f32.partialorder %v3652, 0.0
  %vm4326 = vcmp.ge.f32.partialorder %v3855, 0.0
  %vm4327 = vcmp.ge.f32.partialorder %v4058, 0.0
  %vm4328 = vcmp.ge.f32.partialorder %v4261, 0.0
  %vm4329 = vcmp.ge.f32.partialorder %v3452, 0.0
  %vm4330 = vcmp.ge.f32.partialorder %v3655, 0.0
  %vm4331 = vcmp.ge.f32.partialorder %v3858, 0.0
  %vm4332 = vcmp.ge.f32.partialorder %v4061, 0.0
  %vm4333 = vcmp.ge.f32.partialorder %v4264, 0.0
  %vm4334 = vcmp.ge.f32.partialorder %v3454, 0.0
  %vm4335 = vcmp.ge.f32.partialorder %v3657, 0.0
  %vm4336 = vcmp.ge.f32.partialorder %v3860, 0.0
  %vm4337 = vcmp.ge.f32.partialorder %v4063, 0.0
  %vm4338 = vcmp.ge.f32.partialorder %v4266, 0.0
  %vm4339 = vcmp.ge.f32.partialorder %v3457, 0.0
  %vm4340 = vcmp.ge.f32.partialorder %v3660, 0.0
  %vm4341 = vcmp.ge.f32.partialorder %v3863, 0.0
  %vm4342 = vcmp.ge.f32.partialorder %v4066, 0.0
  %vm4343 = vcmp.ge.f32.partialorder %v4269, 0.0
  %vm4344 = vcmp.ge.f32.partialorder %v3459, 0.0
  %vm4345 = vcmp.ge.f32.partialorder %v3662, 0.0
  %vm4346 = vcmp.ge.f32.partialorder %v3865, 0.0
  %vm4347 = vcmp.ge.f32.partialorder %v4068, 0.0
  %vm4348 = vcmp.ge.f32.partialorder %v4271, 0.0
  %vm4349 = vcmp.ge.f32.partialorder %v3462, 0.0
  %vm4350 = vcmp.ge.f32.partialorder %v3665, 0.0
  %vm4351 = vcmp.ge.f32.partialorder %v3868, 0.0
  %vm4352 = vcmp.ge.f32.partialorder %v4071, 0.0
  %vm4353 = vcmp.ge.f32.partialorder %v4274, 0.0
  %vm4354 = vcmp.ge.f32.partialorder %v3464, 0.0
  %vm4355 = vcmp.ge.f32.partialorder %v3667, 0.0
  %vm4356 = vcmp.ge.f32.partialorder %v3870, 0.0
  %vm4357 = vcmp.ge.f32.partialorder %v4073, 0.0
  %vm4358 = vcmp.ge.f32.partialorder %v4276, 0.0
  %v4359 = vmul.f32 %v3447, 0.2
  %v4360 = vmul.f32 %v3650, 0.2
  %v4361 = vmul.f32 %v3853, 0.2
  %v4362 = vmul.f32 %v4056, 0.2
  %v4363 = vmul.f32 %v4259, 0.2
  %v4364 = vmul.f32 %v3449, 0.2
  %v4365 = vmul.f32 %v3652, 0.2
  %v4366 = vmul.f32 %v3855, 0.2
  %v4367 = vmul.f32 %v4058, 0.2
  %v4368 = vmul.f32 %v4261, 0.2
  %v4369 = vmul.f32 %v3452, 0.2
  %v4370 = vmul.f32 %v3655, 0.2
  %v4371 = vmul.f32 %v3858, 0.2
  %v4372 = vmul.f32 %v4061, 0.2
  %v4373 = vmul.f32 %v4264, 0.2
  %v4374 = vmul.f32 %v3454, 0.2
  %v4375 = vmul.f32 %v3657, 0.2
  %v4376 = vmul.f32 %v3860, 0.2
  %v4377 = vmul.f32 %v4063, 0.2
  %v4378 = vmul.f32 %v4266, 0.2
  %v4379 = vmul.f32 %v3457, 0.2
  %v4380 = vmul.f32 %v3660, 0.2
  %v4381 = vmul.f32 %v3863, 0.2
  %v4382 = vmul.f32 %v4066, 0.2
  %v4383 = vmul.f32 %v4269, 0.2
  %v4384 = vmul.f32 %v3459, 0.2
  %v4385 = vmul.f32 %v3662, 0.2
  %v4386 = vmul.f32 %v3865, 0.2
  %v4387 = vmul.f32 %v4068, 0.2
  %v4388 = vmul.f32 %v4271, 0.2
  %v4389 = vmul.f32 %v3462, 0.2
  %v4390 = vmul.f32 %v3665, 0.2
  %v4391 = vmul.f32 %v3868, 0.2
  %v4392 = vmul.f32 %v4071, 0.2
  %v4393 = vmul.f32 %v4274, 0.2
  %v4394 = vmul.f32 %v3464, 0.2
  %v4395 = vmul.f32 %v3667, 0.2
  %v4396 = vmul.f32 %v3870, 0.2
  %v4397 = vmul.f32 %v4073, 0.2
  %v4398 = vmul.f32 %v4276, 0.2
  %v4399 = vsel %vm4319, %v3447, %v4359
  %v4400 = vsel %vm4320, %v3650, %v4360
  %v4401 = vsel %vm4321, %v3853, %v4361
  %v4402 = vsel %vm4322, %v4056, %v4362
  %v4403 = vsel %vm4323, %v4259, %v4363
  %v4404 = vsel %vm4324, %v3449, %v4364
  %v4405 = vsel %vm4325, %v3652, %v4365
  %v4406 = vsel %vm4326, %v3855, %v4366
  %v4407 = vsel %vm4327, %v4058, %v4367
  %v4408 = vsel %vm4328, %v4261, %v4368
  %v4409 = vsel %vm4329, %v3452, %v4369
  %v4410 = vsel %vm4330, %v3655, %v4370
  %v4411 = vsel %vm4331, %v3858, %v4371
  %v4412 = vsel %vm4332, %v4061, %v4372
  %v4413 = vsel %vm4333, %v4264, %v4373
  %v4414 = vsel %vm4334, %v3454, %v4374
  %v4415 = vsel %vm4335, %v3657, %v4375
  %v4416 = vsel %vm4336, %v3860, %v4376
  %v4417 = vsel %vm4337, %v4063, %v4377
  %v4418 = vsel %vm4338, %v4266, %v4378
  %v4419 = vsel %vm4339, %v3457, %v4379
  %v4420 = vsel %vm4340, %v3660, %v4380
  %v4421 = vsel %vm4341, %v3863, %v4381
  %v4422 = vsel %vm4342, %v4066, %v4382
  %v4423 = vsel %vm4343, %v4269, %v4383
  %v4424 = vsel %vm4344, %v3459, %v4384
  %v4425 = vsel %vm4345, %v3662, %v4385
  %v4426 = vsel %vm4346, %v3865, %v4386
  %v4427 = vsel %vm4347, %v4068, %v4387
  %v4428 = vsel %vm4348, %v4271, %v4388
  %v4429 = vsel %vm4349, %v3462, %v4389
  %v4430 = vsel %vm4350, %v3665, %v4390
  %v4431 = vsel %vm4351, %v3868, %v4391
  %v4432 = vsel %vm4352, %v4071, %v4392
  %v4433 = vsel %vm4353, %v4274, %v4393
  %v4434 = vsel %vm4354, %v3464, %v4394
  %v4435 = vsel %vm4355, %v3667, %v4395
  %v4436 = vsel %vm4356, %v3870, %v4396
  %v4437 = vsel %vm4357, %v4073, %v4397
  %v4438 = vsel %vm4358, %v4276, %v4398
  %v4439 = vpack.c.bf16 %v4404, %v4399
  %v4440 = vpack.c.bf16 %v4405, %v4400
  %v4441 = vpack.c.bf16 %v4406, %v4401
  %v4442 = vpack.c.bf16 %v4407, %v4402
  %v4443 = vpack.c.bf16 %v4408, %v4403
  %v4444 = vpack.c.bf16 %v4414, %v4409
  %v4445 = vpack.c.bf16 %v4415, %v4410
  %v4446 = vpack.c.bf16 %v4416, %v4411
  %v4447 = vpack.c.bf16 %v4417, %v4412
  %v4448 = vpack.c.bf16 %v4418, %v4413
  %v4449 = vpack.c.bf16 %v4424, %v4419
  %v4450 = vpack.c.bf16 %v4425, %v4420
  %v4451 = vpack.c.bf16 %v4426, %v4421
  %v4452 = vpack.c.bf16 %v4427, %v4422
  %v4453 = vpack.c.bf16 %v4428, %v4423
  %v4454 = vpack.c.bf16 %v4434, %v4429
  %v4455 = vpack.c.bf16 %v4435, %v4430
  %v4456 = vpack.c.bf16 %v4436, %v4431
  %v4457 = vpack.c.bf16 %v4437, %v4432
  %v4458 = vpack.c.bf16 %v4438, %v4433
  %v4459 = vld [vmem:[%s7] sm:$0xf]
  %v4460 = vld [vmem:[%s7 + $0x4] sm:$0xf]
  %v4461 = vld [vmem:[%s7 + $0x8] sm:$0xf]
  %v4462 = vld [vmem:[%s7 + $0xc] sm:$0xf]
  %v4463 = vld [vmem:[%s7 + $0x10] sm:$0xf]
  %v4464 = vld [vmem:[%s7 + $0x14] sm:$0xf]
  %v4465 = vld [vmem:[%s7 + $0x18] sm:$0xf]
  %v4466 = vld [vmem:[%s7 + $0x1c] sm:$0xf]
  %v4467 = vld [vmem:[%s7 + $0x20] sm:$0xf]
  %v4468 = vld [vmem:[%s7 + $0x24] sm:$0xf]
  %v4469 = vld [vmem:[%s7 + $0x28] sm:$0xf]
  %v4470 = vld [vmem:[%s7 + $0x2c] sm:$0xf]
  %v4471 = vld [vmem:[%s7 + $0x30] sm:$0xf]
  %v4472 = vld [vmem:[%s7 + $0x34] sm:$0xf]
  %v4473 = vld [vmem:[%s7 + $0x38] sm:$0xf]
  %v4474 = vld [vmem:[%s7 + $0x3c] sm:$0xf]
  %v4475 = vld [vmem:[%s7 + $0x40] sm:$0xf]
  %v4476 = vld [vmem:[%s7 + $0x44] sm:$0xf]
  %v4477 = vld [vmem:[%s7 + $0x48] sm:$0xf]
  %v4478 = vld [vmem:[%s7 + $0x4c] sm:$0xf]
  %v4479 = vld [vmem:[%s7 + $0x50] sm:$0xf]
  %v4480 = vld [vmem:[%s7 + $0x54] sm:$0xf]
  %v4481 = vld [vmem:[%s7 + $0x58] sm:$0xf]
  %v4482 = vld [vmem:[%s7 + $0x5c] sm:$0xf]
  %v4483 = vld [vmem:[%s7 + $0x60] sm:$0xf]
  %v4484 = vld [vmem:[%s7 + $0x64] sm:$0xf]
  %v4485 = vld [vmem:[%s7 + $0x68] sm:$0xf]
  %v4486 = vld [vmem:[%s7 + $0x6c] sm:$0xf]
  %v4487 = vld [vmem:[%s7 + $0x70] sm:$0xf]
  %v4488 = vld [vmem:[%s7 + $0x74] sm:$0xf]
  %v4489 = vld [vmem:[%s7 + $0x78] sm:$0xf]
  %v4490 = vld [vmem:[%s7 + $0x7c] sm:$0xf]
  %v4491 = vld [vmem:[%s7 + $0x80] sm:$0xf]
  %v4492 = vld [vmem:[%s7 + $0x84] sm:$0xf]
  %v4493 = vld [vmem:[%s7 + $0x88] sm:$0xf]
  %v4494 = vld [vmem:[%s7 + $0x8c] sm:$0xf]
  %v4495 = vld [vmem:[%s7 + $0x90] sm:$0xf]
  %v4496 = vld [vmem:[%s7 + $0x94] sm:$0xf]
  %v4497 = vld [vmem:[%s7 + $0x98] sm:$0xf]
  %v4498 = vld [vmem:[%s7 + $0x9c] sm:$0xf]
  %v4499 = vld [vmem:[%s7 + $0xa0] sm:$0xf]
  %v4500 = vld [vmem:[%s7 + $0xa4] sm:$0xf]
  %v4501 = vld [vmem:[%s7 + $0xa8] sm:$0xf]
  %v4502 = vld [vmem:[%s7 + $0xac] sm:$0xf]
  %v4503 = vld [vmem:[%s7 + $0xb0] sm:$0xf]
  %v4504 = vld [vmem:[%s7 + $0xb4] sm:$0xf]
  %v4505 = vld [vmem:[%s7 + $0xb8] sm:$0xf]
  %v4506 = vld [vmem:[%s7 + $0xbc] sm:$0xf]
  %v4507 = vld [vmem:[%s7 + $0xc0] sm:$0xf]
  %v4508 = vld [vmem:[%s7 + $0xc4] sm:$0xf]
  %v4509 = vld [vmem:[%s7 + $0xc8] sm:$0xf]
  %v4510 = vld [vmem:[%s7 + $0xcc] sm:$0xf]
  %v4511 = vld [vmem:[%s7 + $0xd0] sm:$0xf]
  %v4512 = vld [vmem:[%s7 + $0xd4] sm:$0xf]
  %v4513 = vld [vmem:[%s7 + $0xd8] sm:$0xf]
  %v4514 = vld [vmem:[%s7 + $0xdc] sm:$0xf]
  %v4515 = vld [vmem:[%s7 + $0xe0] sm:$0xf]
  %v4516 = vld [vmem:[%s7 + $0xe4] sm:$0xf]
  %v4517 = vld [vmem:[%s7 + $0xe8] sm:$0xf]
  %v4518 = vld [vmem:[%s7 + $0xec] sm:$0xf]
  %v4519 = vld [vmem:[%s7 + $0xf0] sm:$0xf]
  %v4520 = vld [vmem:[%s7 + $0xf4] sm:$0xf]
  %v4521 = vld [vmem:[%s7 + $0xf8] sm:$0xf]
  %v4522 = vld [vmem:[%s7 + $0xfc] sm:$0xf]
  %v4523 = vld [vmem:[%s7 + $0x100] sm:$0xf]
  %v4524 = vld [vmem:[%s7 + $0x104] sm:$0xf]
  %v4525 = vld [vmem:[%s8] sm:$0x1]
  %v4527 = vperm.slane %v4525, 0
  %v4595 = vunpack.c.l.b16 %v4459
  %v4596 = vunpack.c.l.b16 %v4460
  %v4597 = vunpack.c.l.b16 %v4461
  %v4598 = vunpack.c.l.b16 %v4462
  %v4599 = vunpack.c.l.b16 %v4463
  %v4600 = vunpack.c.l.b16 %v4464
  %v4601 = vunpack.c.l.b16 %v4465
  %v4602 = vunpack.c.l.b16 %v4466
  %v4603 = vunpack.c.l.b16 %v4467
  %v4604 = vunpack.c.l.b16 %v4468
  %v4605 = vunpack.c.l.b16 %v4469
  %v4606 = vunpack.c.l.b16 %v4470
  %v4607 = vunpack.c.l.b16 %v4471
  %v4608 = vunpack.c.l.b16 %v4472
  %v4609 = vunpack.c.l.b16 %v4473
  %v4610 = vunpack.c.l.b16 %v4474
  %v4611 = vunpack.c.l.b16 %v4475
  %v4612 = vunpack.c.l.b16 %v4476
  %v4613 = vunpack.c.l.b16 %v4477
  %v4614 = vunpack.c.l.b16 %v4478
  %v4615 = vunpack.c.l.b16 %v4479
  %v4616 = vunpack.c.l.b16 %v4480
  %v4617 = vunpack.c.l.b16 %v4481
  %v4618 = vunpack.c.l.b16 %v4482
  %v4619 = vunpack.c.l.b16 %v4483
  %v4620 = vunpack.c.l.b16 %v4484
  %v4621 = vunpack.c.l.b16 %v4485
  %v4622 = vunpack.c.l.b16 %v4486
  %v4623 = vunpack.c.l.b16 %v4487
  %v4624 = vunpack.c.l.b16 %v4488
  %v4625 = vunpack.c.l.b16 %v4489
  %v4626 = vunpack.c.l.b16 %v4490
  %v4627 = vunpack.c.l.b16 %v4491
  %v4628 = vunpack.c.l.b16 %v4492
  %v4629 = vunpack.c.l.b16 %v4493
  %v4630 = vunpack.c.l.b16 %v4494
  %v4631 = vunpack.c.l.b16 %v4495
  %v4632 = vunpack.c.l.b16 %v4496
  %v4633 = vunpack.c.l.b16 %v4497
  %v4634 = vunpack.c.l.b16 %v4498
  %v4635 = vunpack.c.l.b16 %v4499
  %v4636 = vunpack.c.l.b16 %v4500
  %v4637 = vunpack.c.l.b16 %v4501
  %v4638 = vunpack.c.l.b16 %v4502
  %v4639 = vunpack.c.l.b16 %v4503
  %v4640 = vunpack.c.l.b16 %v4504
  %v4641 = vunpack.c.l.b16 %v4505
  %v4642 = vunpack.c.l.b16 %v4506
  %v4643 = vunpack.c.l.b16 %v4507
  %v4644 = vunpack.c.l.b16 %v4508
  %v4645 = vunpack.c.l.b16 %v4509
  %v4646 = vunpack.c.l.b16 %v4510
  %v4647 = vunpack.c.l.b16 %v4511
  %v4648 = vunpack.c.l.b16 %v4512
  %v4649 = vunpack.c.l.b16 %v4513
  %v4650 = vunpack.c.l.b16 %v4514
  %v4651 = vunpack.c.l.b16 %v4515
  %v4652 = vunpack.c.l.b16 %v4516
  %v4653 = vunpack.c.l.b16 %v4517
  %v4654 = vunpack.c.l.b16 %v4518
  %v4655 = vunpack.c.l.b16 %v4519
  %v4656 = vunpack.c.l.b16 %v4520
  %v4657 = vunpack.c.l.b16 %v4521
  %v4658 = vunpack.c.l.b16 %v4522
  %v4659 = vunpack.c.l.b16 %v4523
  %v4660 = vunpack.c.l.b16 %v4524
  %v4661 = vpack.c.b16 %v4596, %v4595
  %v4662 = vpack.c.b16 %v4598, %v4597
  %v4663 = vpack.c.b16 %v4600, %v4599
  %v4664 = vpack.c.b16 %v4602, %v4601
  %v4665 = vpack.c.b16 %v4604, %v4603
  %v4666 = vpack.c.b16 %v4606, %v4605
  %v4667 = vpack.c.b16 %v4608, %v4607
  %v4668 = vpack.c.b16 %v4610, %v4609
  %v4669 = vpack.c.b16 %v4612, %v4611
  %v4670 = vpack.c.b16 %v4614, %v4613
  %v4671 = vpack.c.b16 %v4616, %v4615
  %v4672 = vpack.c.b16 %v4618, %v4617
  %v4673 = vpack.c.b16 %v4620, %v4619
  %v4674 = vpack.c.b16 %v4622, %v4621
  %v4675 = vpack.c.b16 %v4624, %v4623
  %v4676 = vpack.c.b16 %v4626, %v4625
  %v4677 = vpack.c.b16 %v4628, %v4627
  %v4678 = vpack.c.b16 %v4630, %v4629
  %v4679 = vpack.c.b16 %v4632, %v4631
  %v4680 = vpack.c.b16 %v4634, %v4633
  %v4681 = vpack.c.b16 %v4636, %v4635
  %v4682 = vpack.c.b16 %v4638, %v4637
  %v4683 = vpack.c.b16 %v4640, %v4639
  %v4684 = vpack.c.b16 %v4642, %v4641
  %v4685 = vpack.c.b16 %v4644, %v4643
  %v4686 = vpack.c.b16 %v4646, %v4645
  %v4687 = vpack.c.b16 %v4648, %v4647
  %v4688 = vpack.c.b16 %v4650, %v4649
  %v4689 = vpack.c.b16 %v4652, %v4651
  %v4690 = vpack.c.b16 %v4654, %v4653
  %v4691 = vpack.c.b16 %v4656, %v4655
  %v4692 = vpack.c.b16 %v4658, %v4657
  %v4693 = vpack.c.b16 %v4660, %v4659
  %v4728 = vsel %vm1312, %v4443, 0
  %v4731 = vsel %vm1312, %v4448, 0
  %v4734 = vsel %vm1312, %v4453, 0
  %v4737 = vsel %vm1312, %v4458, 0
  %4739 = vmatpush.bf16.msra.mxu0 %v4668
  %4740 = vmatpush.bf16.msra.mxu0 %v4667
  %4741 = vmatpush.bf16.msra.mxu0 %v4666
  %4742 = vmatpush.bf16.msra.mxu0 %v4665
  %4743 = vmatpush.bf16.msra.mxu0 %v4664
  %4744 = vmatpush.bf16.msra.mxu0 %v4663
  %4745 = vmatpush.bf16.msra.mxu0 %v4662
  %4746 = vmatpush.bf16.msra.mxu0 %v4661
  %4747 = vmatmul.bf16.gmra.mxu0 %v4439
  %v4748 = vpop.f32.mrf.mxu0
  %v4749 = vadd.f32 %v4527, %v4748
  %v4750 = vpop.f32.mrf.mxu0
  %v4751 = vadd.f32 %v4527, %v4750
  %4752 = vmatmul.bf16.gmra.mxu0 %v4444
  %v4753 = vpop.f32.mrf.mxu0
  %v4754 = vadd.f32 %v4527, %v4753
  %v4755 = vpop.f32.mrf.mxu0
  %v4756 = vadd.f32 %v4527, %v4755
  %4757 = vmatmul.bf16.gmra.mxu0 %v4449
  %v4758 = vpop.f32.mrf.mxu0
  %v4759 = vadd.f32 %v4527, %v4758
  %v4760 = vpop.f32.mrf.mxu0
  %v4761 = vadd.f32 %v4527, %v4760
  %4762 = vmatmul.bf16.gmra.mxu0 %v4454
  %v4763 = vpop.f32.mrf.mxu0
  %v4764 = vadd.f32 %v4527, %v4763
  %v4765 = vpop.f32.mrf.mxu0
  %v4766 = vadd.f32 %v4527, %v4765
  %4767 = vdwg.mxu0
  %4768 = vmatpush.bf16.msra.mxu0 %v4676
  %4769 = vmatpush.bf16.msra.mxu0 %v4675
  %4770 = vmatpush.bf16.msra.mxu0 %v4674
  %4771 = vmatpush.bf16.msra.mxu0 %v4673
  %4772 = vmatpush.bf16.msra.mxu0 %v4672
  %4773 = vmatpush.bf16.msra.mxu0 %v4671
  %4774 = vmatpush.bf16.msra.mxu0 %v4670
  %4775 = vmatpush.bf16.msra.mxu0 %v4669
  %4776 = vmatmul.bf16.gmra.mxu0 %v4440
  %v4777 = vpop.f32.mrf.mxu0
  %v4778 = vadd.f32 %v4749, %v4777
  %v4779 = vpop.f32.mrf.mxu0
  %v4780 = vadd.f32 %v4751, %v4779
  %4781 = vmatmul.bf16.gmra.mxu0 %v4445
  %v4782 = vpop.f32.mrf.mxu0
  %v4783 = vadd.f32 %v4754, %v4782
  %v4784 = vpop.f32.mrf.mxu0
  %v4785 = vadd.f32 %v4756, %v4784
  %4786 = vmatmul.bf16.gmra.mxu0 %v4450
  %v4787 = vpop.f32.mrf.mxu0
  %v4788 = vadd.f32 %v4759, %v4787
  %v4789 = vpop.f32.mrf.mxu0
  %v4790 = vadd.f32 %v4761, %v4789
  %4791 = vmatmul.bf16.gmra.mxu0 %v4455
  %v4792 = vpop.f32.mrf.mxu0
  %v4793 = vadd.f32 %v4764, %v4792
  %v4794 = vpop.f32.mrf.mxu0
  %v4795 = vadd.f32 %v4766, %v4794
  %4796 = vdwg.mxu0
  %4797 = vmatpush.bf16.msra.mxu0 %v4684
  %4798 = vmatpush.bf16.msra.mxu0 %v4683
  %4799 = vmatpush.bf16.msra.mxu0 %v4682
  %4800 = vmatpush.bf16.msra.mxu0 %v4681
  %4801 = vmatpush.bf16.msra.mxu0 %v4680
  %4802 = vmatpush.bf16.msra.mxu0 %v4679
  %4803 = vmatpush.bf16.msra.mxu0 %v4678
  %4804 = vmatpush.bf16.msra.mxu0 %v4677
  %4805 = vmatmul.bf16.gmra.mxu0 %v4441
  %v4806 = vpop.f32.mrf.mxu0
  %v4807 = vadd.f32 %v4778, %v4806
  %v4808 = vpop.f32.mrf.mxu0
  %v4809 = vadd.f32 %v4780, %v4808
  %4810 = vmatmul.bf16.gmra.mxu0 %v4446
  %v4811 = vpop.f32.mrf.mxu0
  %v4812 = vadd.f32 %v4783, %v4811
  %v4813 = vpop.f32.mrf.mxu0
  %v4814 = vadd.f32 %v4785, %v4813
  %4815 = vmatmul.bf16.gmra.mxu0 %v4451
  %v4816 = vpop.f32.mrf.mxu0
  %v4817 = vadd.f32 %v4788, %v4816
  %v4818 = vpop.f32.mrf.mxu0
  %v4819 = vadd.f32 %v4790, %v4818
  %4820 = vmatmul.bf16.gmra.mxu0 %v4456
  %v4821 = vpop.f32.mrf.mxu0
  %v4822 = vadd.f32 %v4793, %v4821
  %v4823 = vpop.f32.mrf.mxu0
  %v4824 = vadd.f32 %v4795, %v4823
  %4825 = vdwg.mxu0
  %4826 = vmatpush.bf16.msra.mxu0 %v4692
  %4827 = vmatpush.bf16.msra.mxu0 %v4691
  %4828 = vmatpush.bf16.msra.mxu0 %v4690
  %4829 = vmatpush.bf16.msra.mxu0 %v4689
  %4830 = vmatpush.bf16.msra.mxu0 %v4688
  %4831 = vmatpush.bf16.msra.mxu0 %v4687
  %4832 = vmatpush.bf16.msra.mxu0 %v4686
  %4833 = vmatpush.bf16.msra.mxu0 %v4685
  %4834 = vmatmul.bf16.gmra.mxu0 %v4442
  %v4835 = vpop.f32.mrf.mxu0
  %v4836 = vadd.f32 %v4807, %v4835
  %v4837 = vpop.f32.mrf.mxu0
  %v4838 = vadd.f32 %v4809, %v4837
  %4839 = vmatmul.bf16.gmra.mxu0 %v4447
  %v4840 = vpop.f32.mrf.mxu0
  %v4841 = vadd.f32 %v4812, %v4840
  %v4842 = vpop.f32.mrf.mxu0
  %v4843 = vadd.f32 %v4814, %v4842
  %4844 = vmatmul.bf16.gmra.mxu0 %v4452
  %v4845 = vpop.f32.mrf.mxu0
  %v4846 = vadd.f32 %v4817, %v4845
  %v4847 = vpop.f32.mrf.mxu0
  %v4848 = vadd.f32 %v4819, %v4847
  %4849 = vmatmul.bf16.gmra.mxu0 %v4457
  %v4850 = vpop.f32.mrf.mxu0
  %v4851 = vadd.f32 %v4822, %v4850
  %v4852 = vpop.f32.mrf.mxu0
  %v4853 = vadd.f32 %v4824, %v4852
  %4854 = vdwg.mxu0
  %4855 = vmatpush.bf16.msra.mxu0 0
  %4856 = vmatpush.bf16.msra.mxu0 0
  %4857 = vmatpush.bf16.msra.mxu0 0
  %4858 = vmatpush.bf16.msra.mxu0 0
  %4859 = vmatpush.bf16.msra.mxu0 0
  %4860 = vmatpush.bf16.msra.mxu0 0
  %4861 = vmatpush.bf16.msra.mxu0 0
  %4862 = vmatpush.bf16.msra.mxu0 %v4693
  %4863 = vmatmul.bf16.gmra.mxu0 %v4728
  %v4864 = vpop.f32.mrf.mxu0
  %v4865 = vadd.f32 %v4836, %v4864
  %v4866 = vpop.f32.mrf.mxu0
  %v4867 = vadd.f32 %v4838, %v4866
  %4868 = vmatmul.bf16.gmra.mxu0 %v4731
  %v4869 = vpop.f32.mrf.mxu0
  %v4870 = vadd.f32 %v4841, %v4869
  %v4871 = vpop.f32.mrf.mxu0
  %v4872 = vadd.f32 %v4843, %v4871
  %4873 = vmatmul.bf16.gmra.mxu0 %v4734
  %v4874 = vpop.f32.mrf.mxu0
  %v4875 = vadd.f32 %v4846, %v4874
  %v4876 = vpop.f32.mrf.mxu0
  %v4877 = vadd.f32 %v4848, %v4876
  %4878 = vmatmul.bf16.gmra.mxu0 %v4737
  %v4879 = vpop.f32.mrf.mxu0
  %v4880 = vadd.f32 %v4851, %v4879
  %v4881 = vpop.f32.mrf.mxu0
  %v4882 = vadd.f32 %v4853, %v4881
  %4883 = vdwg.mxu0
  %vm4884 = vcmask 269312
  %4885 = vst.msk [vmem:[%s11] sm:$0xff] %vm4884, %v4865
  %4886 = vst.msk [vmem:[%s11 + $0x8] sm:$0xff] %vm4884, %v4867
  %4887 = vst.msk [vmem:[%s11 + $0x10] sm:$0xff] %vm4884, %v4870
  %4888 = vst.msk [vmem:[%s11 + $0x18] sm:$0xff] %vm4884, %v4872
  %4889 = vst.msk [vmem:[%s11 + $0x20] sm:$0xff] %vm4884, %v4875
  %4890 = vst.msk [vmem:[%s11 + $0x28] sm:$0xff] %vm4884, %v4877
  %4891 = vst.msk [vmem:[%s11 + $0x30] sm:$0xff] %vm4884, %v4880
  %vm4892 = vcmask 263168
  %4893 = vst.msk [vmem:[%s11 + $0x38] sm:$0x3] %vm4892, %v4882
  // Predicated region
  $region38: #{tpu_custom_call.1} parent=0 // pred_check
    _
  $region39: #{tpu_custom_call.1} parent=0 // pred_check_branch
    %4895 = sbr.rel (0) target = $region41
  $region40: #{tpu_custom_call.1} parent=0 // pred_region
    _
  $region41: #{tpu_custom_call.1} parent=0 // pred_fallthru
    _
  // Predicated region
  $region42: #{tpu_custom_call.1} parent=0 // pred_check
    _
  $region43: #{tpu_custom_call.1} parent=0 // pred_check_branch
    %4897 = sbr.rel (0) target = $region45
  $region44: #{tpu_custom_call.1} parent=0 // pred_region
    _
  $region45: #{tpu_custom_call.1} parent=0 // pred_fallthru
    _
  // Predicated region
  $region46: #{tpu_custom_call.1} parent=0 // pred_check
    _
  $region47: #{tpu_custom_call.1} parent=0 // pred_check_branch
    %4899 = sbr.rel (0) target = $region49
  $region48: #{tpu_custom_call.1} parent=0 // pred_region
    _
  $region49: #{tpu_custom_call.1} parent=0 // pred_fallthru
    _
  // Predicated region
  $region50: #{tpu_custom_call.1} parent=0 // pred_check
    _
  $region51: #{tpu_custom_call.1} parent=0 // pred_check_branch
    %4901 = sbr.rel (0) target = $region53
  $region52: #{tpu_custom_call.1} parent=0 // pred_region
    _
  $region53: #{tpu_custom_call.1} parent=0 // pred_fallthru
    _
  // Predicated region
  $region54: #{tpu_custom_call.1} parent=0 // pred_check
    _
  $region55: #{tpu_custom_call.1} parent=0 // pred_check_branch
    %4903 = sbr.rel (0) target = $region57
  $region56: #{tpu_custom_call.1} parent=0 // pred_region
    _
  $region57: #{tpu_custom_call.1} parent=0 // pred_fallthru
    _
  // Predicated region
  $region58: #{tpu_custom_call.1} parent=0 // pred_check
    _
  $region59: #{tpu_custom_call.1} parent=0 // pred_check_branch
    %4905 = sbr.rel (0) target = $region61
  $region60: #{tpu_custom_call.1} parent=0 // pred_region
    _
  $region61: #{tpu_custom_call.1} parent=0 // pred_fallthru
    _

</llo_original>
